<compile_context>
chip_gen: v7x
topology: tpu7x:2x2x1
jax: 0.10.0
libtpu: 0.0.40
codegen_flags: <defaults>
</compile_context>

<pallas_src>
import functools
import math

import jax
import jax.numpy as jnp
from jax.experimental import pallas as pl
from jax.experimental.pallas import tpu as pltpu


def _round_up(x, m):
    return (x + m - 1) // m * m


def _pad2(a, rows, cols):
    if rows == 0 and cols == 0:
        return a
    return jnp.pad(a, ((0, rows), (0, cols)))


# ----------------------------------------------------------------------------
# Fused / tiled matmul kernel
#   out = act(LN(x) @ w + b) [* sigmoid(LN(x) @ wg + bg)] * res_scale + residual
#   optionally followed by an epilogue LayerNorm (block-final LN fusion).
# ----------------------------------------------------------------------------

def _fused_mm_kernel(*refs, gk, k_real, n_real, activation, use_ln, use_glu,
                     use_res, use_out_ln, res_scale, eps):
    it = iter(refs)
    x_ref = next(it)
    w_ref = next(it)
    b_ref = next(it)
    if use_ln:
        g_ref = next(it)
        be_ref = next(it)
    if use_glu:
        wg_ref = next(it)
        bg_ref = next(it)
    if use_res:
        r_ref = next(it)
    if use_out_ln:
        og_ref = next(it)
        ob_ref = next(it)
    o_ref = next(it)
    acc_ref = next(it)

    k = pl.program_id(2)

    @pl.when(k == 0)
    def _init():
        acc_ref[...] = jnp.zeros_like(acc_ref)

    x = x_ref[...]
    if use_ln:
        # LayerNorm fused into the matmul prologue (stats in f32 over the real K).
        xf = x.astype(jnp.float32)
        inv_k = 1.0 / k_real
        mu = jnp.sum(xf, axis=-1, keepdims=True) * inv_k
        var = jnp.sum(xf * xf, axis=-1, keepdims=True) * inv_k - mu * mu
        var = jnp.maximum(var, 0.0)
        xf = (xf - mu) * jax.lax.rsqrt(var + eps)
        x = (xf * g_ref[...] + be_ref[...]).astype(x_ref.dtype)

    acc_ref[...] += jnp.dot(x, w_ref[...], preferred_element_type=jnp.float32)

    @pl.when(k == gk - 1)
    def _finalize():
        y = acc_ref[...] + b_ref[...]
        if use_glu:
            gate = jnp.dot(x, wg_ref[...], preferred_element_type=jnp.float32)
            gate = gate + bg_ref[...]
            y = y * jax.nn.sigmoid(gate)
        if activation == "relu":
            y = jnp.maximum(y, 0.0)
        elif activation == "swish":
            y = y * jax.nn.sigmoid(y)
        if use_res:
            y = y * res_scale + r_ref[...].astype(jnp.float32)
        if use_out_ln:
            # Block-final LayerNorm fused into the epilogue (full row in this tile;
            # padded columns are exactly zero so they contribute nothing to stats).
            inv_n = 1.0 / n_real
            mu = jnp.sum(y, axis=-1, keepdims=True) * inv_n
            var = jnp.maximum(jnp.sum(y * y, axis=-1, keepdims=True) * inv_n - mu * mu, 0.0)
            y = (y - mu) * jax.lax.rsqrt(var + eps) * og_ref[...] + ob_ref[...]
        o_ref[...] = y.astype(o_ref.dtype)


def fused_linear(x, w, b, *, activation="none", ln=None, glu=None,
                 residual=None, res_scale=1.0, out_ln=None, out_dtype=jnp.bfloat16):
    lead = x.shape[:-1]
    K = x.shape[-1]
    N = w.shape[-1]
    x2 = x.reshape(-1, K)
    M = x2.shape[0]

    use_ln = ln is not None
    use_glu = glu is not None
    use_res = residual is not None
    use_out_ln = out_ln is not None

    # Tile sizes: 128-lane aligned, 256-wide N when it pays off, big K tiles.
    tm = 128 if M > 128 else _round_up(M, 8)
    tn_full = _round_up(N, 128)
    tn = 256 if tn_full >= 256 else tn_full
    if use_ln or use_glu:
        tk = _round_up(K, 128)          # full K in one tile (LN stats / GLU gate)
    else:
        tk = min(512, _round_up(K, 128))

    M_pad = _round_up(M, tm)
    N_pad = _round_up(N, tn)
    K_pad = _round_up(K, tk)
    gm, gn, gk = M_pad // tm, N_pad // tn, K_pad // tk
    assert not (use_ln or use_glu) or gk == 1
    assert not use_out_ln or gn == 1    # epilogue LN needs the full row in one tile

    xp = _pad2(x2.astype(jnp.bfloat16), M_pad - M, K_pad - K)
    wp = _pad2(w.astype(jnp.bfloat16), K_pad - K, N_pad - N)
    bp = _pad2(b.astype(jnp.float32).reshape(1, N), 0, N_pad - N)

    in_specs = [
        pl.BlockSpec((tm, tk), lambda i, j, k: (i, k)),
        pl.BlockSpec((tk, tn), lambda i, j, k: (k, j)),
        pl.BlockSpec((1, tn), lambda i, j, k: (0, j)),
    ]
    args = [xp, wp, bp]

    if use_ln:
        g, be = ln
        gp = _pad2(g.astype(jnp.float32).reshape(1, K), 0, K_pad - K)
        bep = _pad2(be.astype(jnp.float32).reshape(1, K), 0, K_pad - K)
        in_specs += [pl.BlockSpec((1, tk), lambda i, j, k: (0, k)),
                     pl.BlockSpec((1, tk), lambda i, j, k: (0, k))]
        args += [gp, bep]
    if use_glu:
        wg, bg = glu
        wgp = _pad2(wg.astype(jnp.bfloat16), K_pad - K, N_pad - N)
        bgp = _pad2(bg.astype(jnp.float32).reshape(1, N), 0, N_pad - N)
        in_specs += [pl.BlockSpec((tk, tn), lambda i, j, k: (k, j)),
                     pl.BlockSpec((1, tn), lambda i, j, k: (0, j))]
        args += [wgp, bgp]
    if use_res:
        rp = _pad2(residual.reshape(-1, N).astype(jnp.bfloat16), M_pad - M, N_pad - N)
        in_specs.append(pl.BlockSpec((tm, tn), lambda i, j, k: (i, j)))
        args.append(rp)
    if use_out_ln:
        og, ob = out_ln
        ogp = _pad2(og.astype(jnp.float32).reshape(1, N), 0, N_pad - N)
        obp = _pad2(ob.astype(jnp.float32).reshape(1, N), 0, N_pad - N)
        in_specs += [pl.BlockSpec((1, tn), lambda i, j, k: (0, j)),
                     pl.BlockSpec((1, tn), lambda i, j, k: (0, j))]
        args += [ogp, obp]

    kernel = functools.partial(
        _fused_mm_kernel, gk=gk, k_real=float(K), n_real=float(N),
        activation=activation, use_ln=use_ln, use_glu=use_glu, use_res=use_res,
        use_out_ln=use_out_ln, res_scale=float(res_scale), eps=1e-5)

    out = pl.pallas_call(
        kernel,
        grid=(gm, gn, gk),
        in_specs=in_specs,
        out_specs=pl.BlockSpec((tm, tn), lambda i, j, k: (i, j)),
        out_shape=jax.ShapeDtypeStruct((M_pad, N_pad), out_dtype),
        scratch_shapes=[pltpu.VMEM((tm, tn), jnp.float32)],
        compiler_params=pltpu.CompilerParams(
            dimension_semantics=("parallel", "parallel", "arbitrary"),
            vmem_limit_bytes=48 * 1024 * 1024),
    )(*args)

    return out[:M, :N].reshape(*lead, N)


# ----------------------------------------------------------------------------
# Standalone LayerNorm kernel (fallback for very wide rows only)
# ----------------------------------------------------------------------------

def _layernorm_kernel(x_ref, g_ref, b_ref, o_ref, *, eps, d_real):
    x = x_ref[...].astype(jnp.float32)
    inv_d = 1.0 / d_real
    mu = jnp.sum(x, axis=-1, keepdims=True) * inv_d
    var = jnp.maximum(jnp.sum(x * x, axis=-1, keepdims=True) * inv_d - mu * mu, 0.0)
    y = (x - mu) * jax.lax.rsqrt(var + eps)
    o_ref[...] = (y * g_ref[...] + b_ref[...]).astype(o_ref.dtype)


def layernorm(x, gamma, beta, eps=1e-5, out_dtype=jnp.bfloat16):
    lead = x.shape[:-1]
    D = x.shape[-1]
    x2 = x.reshape(-1, D)
    M = x2.shape[0]
    tm = 256 if M > 256 else _round_up(M, 8)
    M_pad = _round_up(M, tm)
    xp = _pad2(x2, M_pad - M, 0)
    out = pl.pallas_call(
        functools.partial(_layernorm_kernel, eps=eps, d_real=float(D)),
        grid=(M_pad // tm,),
        in_specs=[pl.BlockSpec((tm, D), lambda i: (i, 0)),
                  pl.BlockSpec((1, D), lambda i: (0, 0)),
                  pl.BlockSpec((1, D), lambda i: (0, 0))],
        out_specs=pl.BlockSpec((tm, D), lambda i: (i, 0)),
        out_shape=jax.ShapeDtypeStruct((M_pad, D), out_dtype),
        compiler_params=pltpu.CompilerParams(dimension_semantics=("parallel",)),
    )(xp, gamma.astype(jnp.float32).reshape(1, D), beta.astype(jnp.float32).reshape(1, D))
    return out[:M].reshape(*lead, D)


# ----------------------------------------------------------------------------
# Fused multi-head relative attention kernel (per batch element, heads packed)
# ----------------------------------------------------------------------------

def _mhsa_attn_kernel(q_ref, k_ref, v_ref, u_ref, pos_ref, o_ref, *,
                      num_heads, head_dim, sm_scale):
    # q/k/v: (1, T, D) bf16 (heads packed on the lane axis)
    # pos:   (1, H, T, T) bf16, already relative-shifted and pre-scaled by 1/sqrt(d)
    # 1/sqrt(d) folded into (q + u) once, so no per-head (T,T) scaling is needed.
    q = ((q_ref[0].astype(jnp.float32) + u_ref[...]) * sm_scale).astype(q_ref.dtype)
    k = k_ref[0]
    v = v_ref[0]
    outs = []
    for h in range(num_heads):
        sl = slice(h * head_dim, (h + 1) * head_dim)
        qh, kh, vh = q[:, sl], k[:, sl], v[:, sl]
        content = jax.lax.dot_general(qh, kh, (((1,), (1,)), ((), ())),
                                      preferred_element_type=jnp.float32)
        score = content + pos_ref[0, h].astype(jnp.float32)
        score = score - jnp.max(score, axis=-1, keepdims=True)
        p = jnp.exp(score)
        p = p * pl.reciprocal(jnp.sum(p, axis=-1, keepdims=True), approx=True)
        outs.append(jnp.dot(p.astype(vh.dtype), vh, preferred_element_type=jnp.float32))
    o_ref[0] = jnp.concatenate(outs, axis=-1).astype(o_ref.dtype)


def mhsa_attention(q, k, v, u_bias, pos_shifted, num_heads, sm_scale):
    B, T, D = q.shape
    H = num_heads
    dh = D // H
    return pl.pallas_call(
        functools.partial(_mhsa_attn_kernel, num_heads=H, head_dim=dh,
                          sm_scale=sm_scale),
        grid=(B,),
        in_specs=[pl.BlockSpec((1, T, D), lambda b: (b, 0, 0)),
                  pl.BlockSpec((1, T, D), lambda b: (b, 0, 0)),
                  pl.BlockSpec((1, T, D), lambda b: (b, 0, 0)),
                  pl.BlockSpec((1, D), lambda b: (0, 0)),
                  pl.BlockSpec((1, H, T, T), lambda b: (b, 0, 0, 0))],
        out_specs=pl.BlockSpec((1, T, D), lambda b: (b, 0, 0)),
        out_shape=jax.ShapeDtypeStruct((B, T, D), jnp.bfloat16),
        compiler_params=pltpu.CompilerParams(dimension_semantics=("parallel",)),
    )(q.astype(jnp.bfloat16), k.astype(jnp.bfloat16), v.astype(jnp.bfloat16),
      u_bias.reshape(1, D).astype(jnp.float32), pos_shifted.astype(jnp.bfloat16))


# ----------------------------------------------------------------------------
# Depthwise conv + folded BatchNorm + Swish kernel
# ----------------------------------------------------------------------------

def _dwconv_kernel(x_ref, w_ref, cb_ref, scale_ref, shift_ref, o_ref, *, ksize, T):
    x = x_ref[0].astype(jnp.float32)            # (T + ksize - 1, D)
    w = w_ref[...].astype(jnp.float32)          # (ksize, D)
    D = x.shape[-1]
    acc = jnp.zeros((T, D), jnp.float32)
    for t in range(ksize):                      # static unrolled taps
        acc = acc + x[t:t + T, :] * w[t:t + 1, :]
    acc = acc + cb_ref[...]
    y = acc * scale_ref[...] + shift_ref[...]   # eval-mode BatchNorm folded
    y = y * jax.nn.sigmoid(y)                   # Swish
    o_ref[0] = y.astype(o_ref.dtype)


def depthwise_conv_bn_swish(xpad, w, cbias, bn_scale, bn_shift, T, ksize):
    B, Tp, D = xpad.shape
    return pl.pallas_call(
        functools.partial(_dwconv_kernel, ksize=ksize, T=T),
        grid=(B,),
        in_specs=[pl.BlockSpec((1, Tp, D), lambda b: (b, 0, 0)),
                  pl.BlockSpec((ksize, D), lambda b: (0, 0)),
                  pl.BlockSpec((1, D), lambda b: (0, 0)),
                  pl.BlockSpec((1, D), lambda b: (0, 0)),
                  pl.BlockSpec((1, D), lambda b: (0, 0))],
        out_specs=pl.BlockSpec((1, T, D), lambda b: (b, 0, 0)),
        out_shape=jax.ShapeDtypeStruct((B, T, D), jnp.bfloat16),
        compiler_params=pltpu.CompilerParams(dimension_semantics=("parallel",)),
    )(xpad, w.astype(jnp.float32), cbias.reshape(1, D).astype(jnp.float32),
      bn_scale.reshape(1, D).astype(jnp.float32), bn_shift.reshape(1, D).astype(jnp.float32))


# ----------------------------------------------------------------------------
# JAX glue (positional encoding, relative shift, im2col)
# ----------------------------------------------------------------------------

def sinusoidal_pe(T, d_model):
    position = jnp.arange(T, dtype=jnp.float32)[:, None]
    div_term = jnp.exp(jnp.arange(0, d_model, 2, dtype=jnp.float32)
                       * (-math.log(10000.0) / d_model))
    pe = jnp.zeros((T, d_model), jnp.float32)
    pe = pe.at[:, 0::2].set(jnp.sin(position * div_term))
    pe = pe.at[:, 1::2].set(jnp.cos(position * div_term))
    return pe


def relative_shift(pos_score):
    # pos_score: (B, H, T, T) -- exact Transformer-XL skew trick.
    B, H, T1, T2 = pos_score.shape
    zeros = jnp.zeros((B, H, T1, 1), pos_score.dtype)
    padded = jnp.concatenate([zeros, pos_score], axis=-1)
    padded = padded.reshape(B, H, T2 + 1, T1)
    return padded[:, :, 1:].reshape(B, H, T1, T2)


def conv2d_im2col(x, w, b, stride=2):
    """PyTorch Conv2d (NCHW, k=3, stride=2, no padding) + ReLU via im2col + fused matmul."""
    B, Cin, H, W = x.shape
    Cout = w.shape[0]
    KH = KW = 3
    Ho = (H - KH) // stride + 1
    Wo = (W - KW) // stride + 1
    patches = []
    for kh in range(KH):
        for kw in range(KW):
            patches.append(x[:, :, kh:kh + stride * Ho:stride, kw:kw + stride * Wo:stride])
    p = jnp.stack(patches, axis=2)                       # (B, Cin, 9, Ho, Wo)
    p = p.transpose(0, 3, 4, 1, 2).reshape(B * Ho * Wo, Cin * KH * KW)
    wm = w.reshape(Cout, Cin * KH * KW).T                # (Cin*9, Cout)
    y = fused_linear(p, wm, b, activation="relu", out_dtype=jnp.bfloat16)
    return y.reshape(B, Ho, Wo, Cout).transpose(0, 3, 1, 2)


# ----------------------------------------------------------------------------
# Conformer modules
# ----------------------------------------------------------------------------

def feed_forward(x, p, res_scale, out_ln=None):
    # out = x + res_scale * FF(LN(x));  LN fused into w1, residual (and optional
    # block-final LN) fused into the w2 epilogue.
    h = fused_linear(x, p["w1"], p["b1"], ln=(p["ln_g"], p["ln_b"]),
                     activation="swish", out_dtype=jnp.bfloat16)
    return fused_linear(h, p["w2"], p["b2"], residual=x, res_scale=res_scale,
                        out_ln=out_ln, out_dtype=jnp.bfloat16)


def mhsa(x, p, num_heads, pe_full):
    B, T, D = x.shape
    H = num_heads
    dh = D // H
    sm_scale = 1.0 / math.sqrt(D)

    # LN + combined Q/K/V projection in a single fused matmul (D -> 3D).
    wqkv = jnp.concatenate([p["wq"], p["wk"], p["wv"]], axis=1)
    bqkv = jnp.concatenate([p["bq"], p["bk"], p["bv"]])
    qkv = fused_linear(x, wqkv, bqkv, ln=(p["ln_g"], p["ln_b"]), out_dtype=jnp.bfloat16)
    q, k, v = qkv[..., :D], qkv[..., D:2 * D], qkv[..., 2 * D:]

    # Positional projection is batch independent: (T, D) only.
    pos = fused_linear(pe_full[:T], p["wp"], jnp.zeros((D,), jnp.float32),
                       out_dtype=jnp.float32)

    # Positional scores (1/sqrt(d) folded in here) + exact relative shift
    # (kept in XLA, bf16 in HBM).
    qv = (q.astype(jnp.float32) + p["v_bias"].reshape(-1)[None, None, :]) * sm_scale
    pos_score = jnp.einsum("bihd,jhd->bhij",
                           qv.reshape(B, T, H, dh), pos.reshape(T, H, dh))
    pos_shifted = relative_shift(pos_score).astype(jnp.bfloat16)

    ctx = mhsa_attention(q, k, v, p["u_bias"].reshape(-1), pos_shifted,
                         num_heads=H, sm_scale=sm_scale)

    # Output projection with the residual add fused into the epilogue.
    return fused_linear(ctx, p["wo"], p["bo"], residual=x, out_dtype=jnp.bfloat16)


def conv_module(x, p, kernel_size):
    B, T, D = x.shape
    # LN + pointwise conv1 + GLU fused into one matmul kernel (two weight halves).
    wa, wg = p["pw1_w"][:, :D], p["pw1_w"][:, D:]
    ba, bg = p["pw1_b"][:D], p["pw1_b"][D:]
    y = fused_linear(x, wa, ba, ln=(p["ln_g"], p["ln_b"]), glu=(wg, bg),
                     out_dtype=jnp.bfloat16)

    pad = (kernel_size - 1) // 2
    ypad = jnp.pad(y, ((0, 0), (pad, pad), (0, 0)))
    bn_scale = p["bn_g"] / jnp.sqrt(p["bn_var"] + 1e-5)
    bn_shift = p["bn_b"] - p["bn_mean"] * bn_scale
    y = depthwise_conv_bn_swish(ypad, p["dw_w"], p["dw_b"], bn_scale, bn_shift,
                                T=T, ksize=kernel_size)

    # Pointwise conv2 with the residual add fused into the epilogue.
    return fused_linear(y, p["pw2_w"], p["pw2_b"], residual=x, out_dtype=jnp.bfloat16)


def conformer_block(x, p, num_heads, kernel_size, pe_full):
    D = x.shape[-1]
    x = feed_forward(x, p["ff1"], res_scale=0.5)
    x = mhsa(x, p["mhsa"], num_heads, pe_full)
    x = conv_module(x, p["conv"], kernel_size)
    if D <= 256:
        # Block-final LayerNorm fused into the FF2 epilogue (full row in one N tile).
        x = feed_forward(x, p["ff2"], res_scale=0.5, out_ln=(p["ln_g"], p["ln_b"]))
    else:
        x = feed_forward(x, p["ff2"], res_scale=0.5)
        x = layernorm(x, p["ln_g"], p["ln_b"])
    return x


def conformer_encoder(inputs, input_lengths, params, num_heads, kernel_size):
    # inputs: (B, T, input_dim)
    x = inputs[:, None, :, :]                                  # (B, 1, T, Din)  NCHW
    x = conv2d_im2col(x, params["conv1_w"], params["conv1_b"])
    x = conv2d_im2col(x, params["conv2_w"], params["conv2_b"])
    B, C, Ht, Wf = x.shape
    x = x.transpose(0, 2, 1, 3).reshape(B, Ht, C * Wf)         # (B, T', D*F')
    x = fused_linear(x, params["proj_w"], params["proj_b"], out_dtype=jnp.bfloat16)
    out_lengths = (input_lengths >> 2) - 1
    pe_full = sinusoidal_pe(Ht, C)
    for blk in params["blocks"]:
        x = conformer_block(x, blk, num_heads, kernel_size, pe_full)
    return x.astype(jnp.float32), out_lengths


# ----------------------------------------------------------------------------
# Deterministic parameter init
# ----------------------------------------------------------------------------

def init_params(key, input_dim, encoder_dim, num_layers, num_heads, ff_exp, conv_exp, ksize):
    D = encoder_dim
    H = num_heads
    dh = D // H
    keys = iter(jax.random.split(key, 4096))

    def nrm(shape, scale=0.05):
        return scale * jax.random.normal(next(keys), shape, jnp.float32)

    def ff_params():
        return {"ln_g": jnp.ones((D,), jnp.float32), "ln_b": jnp.zeros((D,), jnp.float32),
                "w1": nrm((D, D * ff_exp)), "b1": nrm((D * ff_exp,)),
                "w2": nrm((D * ff_exp, D)), "b2": nrm((D,))}

    fdim = ((input_dim - 1) // 2 - 1) // 2
    params = {
        "conv1_w": nrm((D, 1, 3, 3)), "conv1_b": nrm((D,)),
        "conv2_w": nrm((D, D, 3, 3)), "conv2_b": nrm((D,)),
        "proj_w": nrm((D * fdim, D)), "proj_b": nrm((D,)),
        "blocks": [],
    }
    for _ in range(num_layers):
        blk = {
            "ff1": ff_params(),
            "mhsa": {"ln_g": jnp.ones((D,), jnp.float32), "ln_b": jnp.zeros((D,), jnp.float32),
                     "wq": nrm((D, D)), "bq": nrm((D,)),
                     "wk": nrm((D, D)), "bk": nrm((D,)),
                     "wv": nrm((D, D)), "bv": nrm((D,)),
                     "wp": nrm((D, D)),
                     "u_bias": nrm((H, dh)), "v_bias": nrm((H, dh)),
                     "wo": nrm((D, D)), "bo": nrm((D,))},
            "conv": {"ln_g": jnp.ones((D,), jnp.float32), "ln_b": jnp.zeros((D,), jnp.float32),
                     "pw1_w": nrm((D, D * conv_exp)), "pw1_b": nrm((D * conv_exp,)),
                     "dw_w": nrm((ksize, D)), "dw_b": nrm((D,)),
                     "bn_g": jnp.ones((D,), jnp.float32), "bn_b": jnp.zeros((D,), jnp.float32),
                     "bn_mean": jnp.zeros((D,), jnp.float32), "bn_var": jnp.ones((D,), jnp.float32),
                     "pw2_w": nrm((D, D)), "pw2_b": nrm((D,))},
            "ff2": ff_params(),
            "ln_g": jnp.ones((D,), jnp.float32), "ln_b": jnp.zeros((D,), jnp.float32),
        }
        params["blocks"].append(blk)
    return params


# ----------------------------------------------------------------------------
# Main
# ----------------------------------------------------------------------------

if __name__ == "__main__":
    B, T, INPUT_DIM = 2, 32, 16
    ENC_DIM, NUM_LAYERS, NUM_HEADS = 32, 2, 4
    FF_EXP, CONV_EXP, CONV_K = 4, 2, 7

    key = jax.random.PRNGKey(0)
    k_in, k_par = jax.random.split(key)
    inputs = jax.random.normal(k_in, (B, T, INPUT_DIM), jnp.float32)
    input_lengths = jnp.array([32, 28], jnp.int32)

    params = init_params(k_par, INPUT_DIM, ENC_DIM, NUM_LAYERS, NUM_HEADS,
                         FF_EXP, CONV_EXP, CONV_K)

    run = jax.jit(functools.partial(conformer_encoder,
                                    num_heads=NUM_HEADS, kernel_size=CONV_K))
    outputs, output_lengths = run(inputs, input_lengths, params)
    jax.block_until_ready(outputs)
    jax.block_until_ready(output_lengths)

    T1 = (T - 3) // 2 + 1
    T2 = (T1 - 3) // 2 + 1
    assert outputs.shape == (B, T2, ENC_DIM), outputs.shape
    assert output_lengths.shape == (B,), output_lengths.shape
    assert bool(jnp.all(jnp.isfinite(outputs))), "non-finite outputs"
    print("KERNEL_OK")
</pallas_src>

<mosaic_0001>
module attributes {stable_mosaic.version = 11 : i64} {
  func.func @_fused_mm_kernel(%arg0: i32, %arg1: i32, %arg2: i32, %arg3: memref<128x128xbf16, #tpu.memory_space<vmem>>, %arg4: memref<128x128xbf16, #tpu.memory_space<vmem>>, %arg5: memref<1x128xf32, #tpu.memory_space<vmem>>, %arg6: memref<128x128xbf16, #tpu.memory_space<vmem>>, %arg7: memref<128x128xf32, #tpu.memory_space<vmem>>) attributes {dimension_semantics = [#tpu.dimension_semantics<parallel>, #tpu.dimension_semantics<parallel>, #tpu.dimension_semantics<arbitrary>], iteration_bounds = array<i64: 2, 1, 1>, scalar_prefetch = 0 : i64, scratch_operands = 1 : i64, tpu.core_type = #tpu.core_type<tc>, window_params = [{transform_indices = @transform_0, window_bounds = array<i64: 128, 128>}, {transform_indices = @transform_1, window_bounds = array<i64: 128, 128>}, {transform_indices = @transform_2, window_bounds = array<i64: 1, 128>}, {transform_indices = @transform_3, window_bounds = array<i64: 128, 128>}]} {
    %c0_i32 = arith.constant 0 : i32
    %0 = arith.cmpi eq, %arg2, %c0_i32 : i32
    %1 = arith.extui %0 : i1 to i32
    %c0_i32_0 = arith.constant 0 : i32
    %2 = arith.cmpi ne, %1, %c0_i32_0 : i32
    scf.if %2 {
      %cst_10 = arith.constant 0.000000e+00 : f32
      %12 = vector.broadcast %cst_10 : f32 to vector<128x128xf32>
      %c0_11 = arith.constant 0 : index
      %c0_12 = arith.constant 0 : index
      %13 = vector.load %arg7[%c0_11, %c0_12] : memref<128x128xf32, #tpu.memory_space<vmem>>, vector<128x128xf32>
      tpu.vector_store %arg7[%c0_11, %c0_12], %12 {strides = array<i32>} : memref<128x128xf32, #tpu.memory_space<vmem>>, vector<128x128xf32>,
    } else {
    }
    %c0 = arith.constant 0 : index
    %c0_1 = arith.constant 0 : index
    %3 = vector.load %arg3[%c0, %c0_1] : memref<128x128xbf16, #tpu.memory_space<vmem>>, vector<128x128xbf16>
    %c0_2 = arith.constant 0 : index
    %c0_3 = arith.constant 0 : index
    %4 = vector.load %arg7[%c0_2, %c0_3] : memref<128x128xf32, #tpu.memory_space<vmem>>, vector<128x128xf32>
    %c0_4 = arith.constant 0 : index
    %c0_5 = arith.constant 0 : index
    %5 = vector.load %arg4[%c0_4, %c0_5] : memref<128x128xbf16, #tpu.memory_space<vmem>>, vector<128x128xbf16>
    %cst = arith.constant dense<0.000000e+00> : vector<128x128xf32>
    %6 = tpu.matmul %3, %5, %cst {dimension_numbers = #tpu.dot_dimension_numbers<[1], [0], [0], [1], [0, 0, 1, 1], [], []>} : vector<128x128xbf16>, vector<128x128xbf16>, vector<128x128xf32> -> vector<128x128xf32>
    %7 = arith.addf %4, %6 : vector<128x128xf32>
    %c0_6 = arith.constant 0 : index
    %c0_7 = arith.constant 0 : index
    %8 = vector.load %arg7[%c0_6, %c0_7] : memref<128x128xf32, #tpu.memory_space<vmem>>, vector<128x128xf32>
    tpu.vector_store %arg7[%c0_6, %c0_7], %7 {strides = array<i32>} : memref<128x128xf32, #tpu.memory_space<vmem>>, vector<128x128xf32>,
    %c0_i32_8 = arith.constant 0 : i32
    %9 = arith.cmpi eq, %arg2, %c0_i32_8 : i32
    %10 = arith.extui %9 : i1 to i32
    %c0_i32_9 = arith.constant 0 : i32
    %11 = arith.cmpi ne, %10, %c0_i32_9 : i32
    scf.if %11 {
      %c0_10 = arith.constant 0 : index
      %c0_11 = arith.constant 0 : index
      %12 = vector.load %arg7[%c0_10, %c0_11] : memref<128x128xf32, #tpu.memory_space<vmem>>, vector<128x128xf32>
      %c0_12 = arith.constant 0 : index
      %c0_13 = arith.constant 0 : index
      %13 = vector.load %arg5[%c0_12, %c0_13] : memref<1x128xf32, #tpu.memory_space<vmem>>, vector<1x128xf32>
      %14 = vector.broadcast %13 : vector<1x128xf32> to vector<128x128xf32>
      %15 = arith.addf %12, %14 : vector<128x128xf32>
      %cst_14 = arith.constant 0.000000e+00 : f32
      %16 = vector.broadcast %cst_14 : f32 to vector<128x128xf32>
      %17 = arith.maximumf %15, %16 : vector<128x128xf32>
      %18 = arith.truncf %17 : vector<128x128xf32> to vector<128x128xbf16>
      %c0_15 = arith.constant 0 : index
      %c0_16 = arith.constant 0 : index
      %19 = vector.load %arg6[%c0_15, %c0_16] : memref<128x128xbf16, #tpu.memory_space<vmem>>, vector<128x128xbf16>
      tpu.vector_store %arg6[%c0_15, %c0_16], %18 {strides = array<i32>} : memref<128x128xbf16, #tpu.memory_space<vmem>>, vector<128x128xbf16>,
    } else {
    }
    return
  }
  func.func @transform_0(%arg0: i32, %arg1: i32, %arg2: i32) -> (i32, i32) {
    %c0_i32 = arith.constant 0 : i32
    return %arg0, %arg2 : i32, i32
  }
  func.func @transform_1(%arg0: i32, %arg1: i32, %arg2: i32) -> (i32, i32) {
    %c0_i32 = arith.constant 0 : i32
    return %arg2, %arg1 : i32, i32
  }
  func.func @transform_2(%arg0: i32, %arg1: i32, %arg2: i32) -> (i32, i32) {
    %c0_i32 = arith.constant 0 : i32
    %c0_i32_0 = arith.constant 0 : i32
    return %c0_i32, %arg1 : i32, i32
  }
  func.func @transform_3(%arg0: i32, %arg1: i32, %arg2: i32) -> (i32, i32) {
    %c0_i32 = arith.constant 0 : i32
    return %arg0, %arg1 : i32, i32
  }
}

module attributes {stable_mosaic.version = 11 : i64} {
  func.func @_fused_mm_kernel(%arg0: i32, %arg1: i32, %arg2: i32, %arg3: memref<48x384xbf16, #tpu.memory_space<vmem>>, %arg4: memref<384x128xbf16, #tpu.memory_space<vmem>>, %arg5: memref<1x128xf32, #tpu.memory_space<vmem>>, %arg6: memref<48x128xbf16, #tpu.memory_space<vmem>>, %arg7: memref<48x128xf32, #tpu.memory_space<vmem>>) attributes {dimension_semantics = [#tpu.dimension_semantics<parallel>, #tpu.dimension_semantics<parallel>, #tpu.dimension_semantics<arbitrary>], iteration_bounds = array<i64: 1, 1, 1>, scalar_prefetch = 0 : i64, scratch_operands = 1 : i64, tpu.core_type = #tpu.core_type<tc>, window_params = [{transform_indices = @transform_0, window_bounds = array<i64: 48, 384>}, {transform_indices = @transform_1, window_bounds = array<i64: 384, 128>}, {transform_indices = @transform_2, window_bounds = array<i64: 1, 128>}, {transform_indices = @transform_3, window_bounds = array<i64: 48, 128>}]} {
    %c0_i32 = arith.constant 0 : i32
    %0 = arith.cmpi eq, %arg2, %c0_i32 : i32
    %1 = arith.extui %0 : i1 to i32
    %c0_i32_0 = arith.constant 0 : i32
    %2 = arith.cmpi ne, %1, %c0_i32_0 : i32
    scf.if %2 {
      %cst_10 = arith.constant 0.000000e+00 : f32
      %12 = vector.broadcast %cst_10 : f32 to vector<48x128xf32>
      %c0_11 = arith.constant 0 : index
      %c0_12 = arith.constant 0 : index
      %13 = vector.load %arg7[%c0_11, %c0_12] : memref<48x128xf32, #tpu.memory_space<vmem>>, vector<48x128xf32>
      tpu.vector_store %arg7[%c0_11, %c0_12], %12 {strides = array<i32>} : memref<48x128xf32, #tpu.memory_space<vmem>>, vector<48x128xf32>,
    } else {
    }
    %c0 = arith.constant 0 : index
    %c0_1 = arith.constant 0 : index
    %3 = vector.load %arg3[%c0, %c0_1] : memref<48x384xbf16, #tpu.memory_space<vmem>>, vector<48x384xbf16>
    %c0_2 = arith.constant 0 : index
    %c0_3 = arith.constant 0 : index
    %4 = vector.load %arg7[%c0_2, %c0_3] : memref<48x128xf32, #tpu.memory_space<vmem>>, vector<48x128xf32>
    %c0_4 = arith.constant 0 : index
    %c0_5 = arith.constant 0 : index
    %5 = vector.load %arg4[%c0_4, %c0_5] : memref<384x128xbf16, #tpu.memory_space<vmem>>, vector<384x128xbf16>
    %cst = arith.constant dense<0.000000e+00> : vector<48x128xf32>
    %6 = tpu.matmul %3, %5, %cst {dimension_numbers = #tpu.dot_dimension_numbers<[1], [0], [0], [1], [0, 0, 1, 1], [], []>} : vector<48x384xbf16>, vector<384x128xbf16>, vector<48x128xf32> -> vector<48x128xf32>
    %7 = arith.addf %4, %6 : vector<48x128xf32>
    %c0_6 = arith.constant 0 : index
    %c0_7 = arith.constant 0 : index
    %8 = vector.load %arg7[%c0_6, %c0_7] : memref<48x128xf32, #tpu.memory_space<vmem>>, vector<48x128xf32>
    tpu.vector_store %arg7[%c0_6, %c0_7], %7 {strides = array<i32>} : memref<48x128xf32, #tpu.memory_space<vmem>>, vector<48x128xf32>,
    %c0_i32_8 = arith.constant 0 : i32
    %9 = arith.cmpi eq, %arg2, %c0_i32_8 : i32
    %10 = arith.extui %9 : i1 to i32
    %c0_i32_9 = arith.constant 0 : i32
    %11 = arith.cmpi ne, %10, %c0_i32_9 : i32
    scf.if %11 {
      %c0_10 = arith.constant 0 : index
      %c0_11 = arith.constant 0 : index
      %12 = vector.load %arg7[%c0_10, %c0_11] : memref<48x128xf32, #tpu.memory_space<vmem>>, vector<48x128xf32>
      %c0_12 = arith.constant 0 : index
      %c0_13 = arith.constant 0 : index
      %13 = vector.load %arg5[%c0_12, %c0_13] : memref<1x128xf32, #tpu.memory_space<vmem>>, vector<1x128xf32>
      %14 = vector.broadcast %13 : vector<1x128xf32> to vector<48x128xf32>
      %15 = arith.addf %12, %14 : vector<48x128xf32>
      %cst_14 = arith.constant 0.000000e+00 : f32
      %16 = vector.broadcast %cst_14 : f32 to vector<48x128xf32>
      %17 = arith.maximumf %15, %16 : vector<48x128xf32>
      %18 = arith.truncf %17 : vector<48x128xf32> to vector<48x128xbf16>
      %c0_15 = arith.constant 0 : index
      %c0_16 = arith.constant 0 : index
      %19 = vector.load %arg6[%c0_15, %c0_16] : memref<48x128xbf16, #tpu.memory_space<vmem>>, vector<48x128xbf16>
      tpu.vector_store %arg6[%c0_15, %c0_16], %18 {strides = array<i32>} : memref<48x128xbf16, #tpu.memory_space<vmem>>, vector<48x128xbf16>,
    } else {
    }
    return
  }
  func.func @transform_0(%arg0: i32, %arg1: i32, %arg2: i32) -> (i32, i32) {
    %c0_i32 = arith.constant 0 : i32
    return %arg0, %arg2 : i32, i32
  }
  func.func @transform_1(%arg0: i32, %arg1: i32, %arg2: i32) -> (i32, i32) {
    %c0_i32 = arith.constant 0 : i32
    return %arg2, %arg1 : i32, i32
  }
  func.func @transform_2(%arg0: i32, %arg1: i32, %arg2: i32) -> (i32, i32) {
    %c0_i32 = arith.constant 0 : i32
    %c0_i32_0 = arith.constant 0 : i32
    return %c0_i32, %arg1 : i32, i32
  }
  func.func @transform_3(%arg0: i32, %arg1: i32, %arg2: i32) -> (i32, i32) {
    %c0_i32 = arith.constant 0 : i32
    return %arg0, %arg1 : i32, i32
  }
}

module attributes {stable_mosaic.version = 11 : i64} {
  func.func @_fused_mm_kernel(%arg0: i32, %arg1: i32, %arg2: i32, %arg3: memref<16x128xbf16, #tpu.memory_space<vmem>>, %arg4: memref<128x128xbf16, #tpu.memory_space<vmem>>, %arg5: memref<1x128xf32, #tpu.memory_space<vmem>>, %arg6: memref<1x128xf32, #tpu.memory_space<vmem>>, %arg7: memref<1x128xf32, #tpu.memory_space<vmem>>, %arg8: memref<16x128xbf16, #tpu.memory_space<vmem>>, %arg9: memref<16x128xf32, #tpu.memory_space<vmem>>) attributes {dimension_semantics = [#tpu.dimension_semantics<parallel>, #tpu.dimension_semantics<parallel>, #tpu.dimension_semantics<arbitrary>], iteration_bounds = array<i64: 1, 1, 1>, scalar_prefetch = 0 : i64, scratch_operands = 1 : i64, tpu.core_type = #tpu.core_type<tc>, window_params = [{transform_indices = @transform_0, window_bounds = array<i64: 16, 128>}, {transform_indices = @transform_1, window_bounds = array<i64: 128, 128>}, {transform_indices = @transform_2, window_bounds = array<i64: 1, 128>}, {transform_indices = @transform_3, window_bounds = array<i64: 1, 128>}, {transform_indices = @transform_4, window_bounds = array<i64: 1, 128>}, {transform_indices = @transform_5, window_bounds = array<i64: 16, 128>}]} {
    %c0_i32 = arith.constant 0 : i32
    %0 = arith.cmpi eq, %arg2, %c0_i32 : i32
    %1 = arith.extui %0 : i1 to i32
    %c0_i32_0 = arith.constant 0 : i32
    %2 = arith.cmpi ne, %1, %c0_i32_0 : i32
    scf.if %2 {
      %cst_20 = arith.constant 0.000000e+00 : f32
      %40 = vector.broadcast %cst_20 : f32 to vector<16x128xf32>
      %c0_21 = arith.constant 0 : index
      %c0_22 = arith.constant 0 : index
      %41 = vector.load %arg9[%c0_21, %c0_22] : memref<16x128xf32, #tpu.memory_space<vmem>>, vector<16x128xf32>
      tpu.vector_store %arg9[%c0_21, %c0_22], %40 {strides = array<i32>} : memref<16x128xf32, #tpu.memory_space<vmem>>, vector<16x128xf32>,
    } else {
    }
    %c0 = arith.constant 0 : index
    %c0_1 = arith.constant 0 : index
    %3 = vector.load %arg3[%c0, %c0_1] : memref<16x128xbf16, #tpu.memory_space<vmem>>, vector<16x128xbf16>
    %4 = arith.extf %3 : vector<16x128xbf16> to vector<16x128xf32>
    %cst = arith.constant dense<0.000000e+00> : vector<16xf32>
    %5 = vector.multi_reduction <add>, %4, %cst [1] : vector<16x128xf32> to vector<16xf32>
    %6 = vector.shape_cast %5 : vector<16xf32> to vector<16x1xf32>
    %cst_2 = arith.constant 3.125000e-02 : f32
    %7 = vector.broadcast %cst_2 : f32 to vector<16x1xf32>
    %8 = arith.mulf %6, %7 : vector<16x1xf32>
    %9 = arith.mulf %4, %4 : vector<16x128xf32>
    %cst_3 = arith.constant dense<0.000000e+00> : vector<16xf32>
    %10 = vector.multi_reduction <add>, %9, %cst_3 [1] : vector<16x128xf32> to vector<16xf32>
    %11 = vector.shape_cast %10 : vector<16xf32> to vector<16x1xf32>
    %cst_4 = arith.constant 3.125000e-02 : f32
    %12 = vector.broadcast %cst_4 : f32 to vector<16x1xf32>
    %13 = arith.mulf %11, %12 : vector<16x1xf32>
    %14 = arith.mulf %8, %8 : vector<16x1xf32>
    %15 = arith.subf %13, %14 : vector<16x1xf32>
    %cst_5 = arith.constant 0.000000e+00 : f32
    %16 = vector.broadcast %cst_5 : f32 to vector<16x1xf32>
    %17 = arith.maximumf %15, %16 : vector<16x1xf32>
    %18 = vector.broadcast %8 : vector<16x1xf32> to vector<16x128xf32>
    %19 = arith.subf %4, %18 : vector<16x128xf32>
    %cst_6 = arith.constant 9.99999974E-6 : f32
    %20 = vector.broadcast %cst_6 : f32 to vector<16x1xf32>
    %21 = arith.addf %17, %20 : vector<16x1xf32>
    %22 = math.rsqrt %21 : vector<16x1xf32>
    %23 = vector.broadcast %22 : vector<16x1xf32> to vector<16x128xf32>
    %24 = arith.mulf %19, %23 : vector<16x128xf32>
    %c0_7 = arith.constant 0 : index
    %c0_8 = arith.constant 0 : index
    %25 = vector.load %arg6[%c0_7, %c0_8] : memref<1x128xf32, #tpu.memory_space<vmem>>, vector<1x128xf32>
    %26 = vector.broadcast %25 : vector<1x128xf32> to vector<16x128xf32>
    %27 = arith.mulf %24, %26 : vector<16x128xf32>
    %c0_9 = arith.constant 0 : index
    %c0_10 = arith.constant 0 : index
    %28 = vector.load %arg7[%c0_9, %c0_10] : memref<1x128xf32, #tpu.memory_space<vmem>>, vector<1x128xf32>
    %29 = vector.broadcast %28 : vector<1x128xf32> to vector<16x128xf32>
    %30 = arith.addf %27, %29 : vector<16x128xf32>
    %31 = arith.truncf %30 : vector<16x128xf32> to vector<16x128xbf16>
    %c0_11 = arith.constant 0 : index
    %c0_12 = arith.constant 0 : index
    %32 = vector.load %arg9[%c0_11, %c0_12] : memref<16x128xf32, #tpu.memory_space<vmem>>, vector<16x128xf32>
    %c0_13 = arith.constant 0 : index
    %c0_14 = arith.constant 0 : index
    %33 = vector.load %arg4[%c0_13, %c0_14] : memref<128x128xbf16, #tpu.memory_space<vmem>>, vector<128x128xbf16>
    %cst_15 = arith.constant dense<0.000000e+00> : vector<16x128xf32>
    %34 = tpu.matmul %31, %33, %cst_15 {dimension_numbers = #tpu.dot_dimension_numbers<[1], [0], [0], [1], [0, 0, 1, 1], [], []>} : vector<16x128xbf16>, vector<128x128xbf16>, vector<16x128xf32> -> vector<16x128xf32>
    %35 = arith.addf %32, %34 : vector<16x128xf32>
    %c0_16 = arith.constant 0 : index
    %c0_17 = arith.constant 0 : index
    %36 = vector.load %arg9[%c0_16, %c0_17] : memref<16x128xf32, #tpu.memory_space<vmem>>, vector<16x128xf32>
    tpu.vector_store %arg9[%c0_16, %c0_17], %35 {strides = array<i32>} : memref<16x128xf32, #tpu.memory_space<vmem>>, vector<16x128xf32>,
    %c0_i32_18 = arith.constant 0 : i32
    %37 = arith.cmpi eq, %arg2, %c0_i32_18 : i32
    %38 = arith.extui %37 : i1 to i32
    %c0_i32_19 = arith.constant 0 : i32
    %39 = arith.cmpi ne, %38, %c0_i32_19 : i32
    scf.if %39 {
      %c0_20 = arith.constant 0 : index
      %c0_21 = arith.constant 0 : index
      %40 = vector.load %arg9[%c0_20, %c0_21] : memref<16x128xf32, #tpu.memory_space<vmem>>, vector<16x128xf32>
      %c0_22 = arith.constant 0 : index
      %c0_23 = arith.constant 0 : index
      %41 = vector.load %arg5[%c0_22, %c0_23] : memref<1x128xf32, #tpu.memory_space<vmem>>, vector<1x128xf32>
      %42 = vector.broadcast %41 : vector<1x128xf32> to vector<16x128xf32>
      %43 = arith.addf %40, %42 : vector<16x128xf32>
      %44 = arith.negf %43 : vector<16x128xf32>
      %45 = math.exp %44 : vector<16x128xf32>
      %cst_24 = arith.constant 1.000000e+00 : f32
      %46 = vector.broadcast %cst_24 : f32 to vector<16x128xf32>
      %47 = arith.addf %46, %45 : vector<16x128xf32>
      %48 = arith.divf %46, %47 : vector<16x128xf32>
      %49 = arith.mulf %43, %48 : vector<16x128xf32>
      %50 = arith.truncf %49 : vector<16x128xf32> to vector<16x128xbf16>
      %c0_25 = arith.constant 0 : index
      %c0_26 = arith.constant 0 : index
      %51 = vector.load %arg8[%c0_25, %c0_26] : memref<16x128xbf16, #tpu.memory_space<vmem>>, vector<16x128xbf16>
      tpu.vector_store %arg8[%c0_25, %c0_26], %50 {strides = array<i32>} : memref<16x128xbf16, #tpu.memory_space<vmem>>, vector<16x128xbf16>,
    } else {
    }
    return
  }
  func.func @transform_0(%arg0: i32, %arg1: i32, %arg2: i32) -> (i32, i32) {
    %c0_i32 = arith.constant 0 : i32
    return %arg0, %arg2 : i32, i32
  }
  func.func @transform_1(%arg0: i32, %arg1: i32, %arg2: i32) -> (i32, i32) {
    %c0_i32 = arith.constant 0 : i32
    return %arg2, %arg1 : i32, i32
  }
  func.func @transform_2(%arg0: i32, %arg1: i32, %arg2: i32) -> (i32, i32) {
    %c0_i32 = arith.constant 0 : i32
    %c0_i32_0 = arith.constant 0 : i32
    return %c0_i32, %arg1 : i32, i32
  }
  func.func @transform_3(%arg0: i32, %arg1: i32, %arg2: i32) -> (i32, i32) {
    %c0_i32 = arith.constant 0 : i32
    %c0_i32_0 = arith.constant 0 : i32
    return %c0_i32, %arg2 : i32, i32
  }
  func.func @transform_4(%arg0: i32, %arg1: i32, %arg2: i32) -> (i32, i32) {
    %c0_i32 = arith.constant 0 : i32
    %c0_i32_0 = arith.constant 0 : i32
    return %c0_i32, %arg2 : i32, i32
  }
  func.func @transform_5(%arg0: i32, %arg1: i32, %arg2: i32) -> (i32, i32) {
    %c0_i32 = arith.constant 0 : i32
    return %arg0, %arg1 : i32, i32
  }
}

module attributes {stable_mosaic.version = 11 : i64} {
  func.func @_fused_mm_kernel(%arg0: i32, %arg1: i32, %arg2: i32, %arg3: memref<16x128xbf16, #tpu.memory_space<vmem>>, %arg4: memref<128x128xbf16, #tpu.memory_space<vmem>>, %arg5: memref<1x128xf32, #tpu.memory_space<vmem>>, %arg6: memref<16x128xbf16, #tpu.memory_space<vmem>>, %arg7: memref<16x128xf32, #tpu.memory_space<vmem>>) attributes {dimension_semantics = [#tpu.dimension_semantics<parallel>, #tpu.dimension_semantics<parallel>, #tpu.dimension_semantics<arbitrary>], iteration_bounds = array<i64: 1, 1, 1>, scalar_prefetch = 0 : i64, scratch_operands = 1 : i64, tpu.core_type = #tpu.core_type<tc>, window_params = [{transform_indices = @transform_0, window_bounds = array<i64: 16, 128>}, {transform_indices = @transform_1, window_bounds = array<i64: 128, 128>}, {transform_indices = @transform_2, window_bounds = array<i64: 1, 128>}, {transform_indices = @transform_3, window_bounds = array<i64: 16, 128>}]} {
    %c0_i32 = arith.constant 0 : i32
    %0 = arith.cmpi eq, %arg2, %c0_i32 : i32
    %1 = arith.extui %0 : i1 to i32
    %c0_i32_0 = arith.constant 0 : i32
    %2 = arith.cmpi ne, %1, %c0_i32_0 : i32
    scf.if %2 {
      %cst_10 = arith.constant 0.000000e+00 : f32
      %12 = vector.broadcast %cst_10 : f32 to vector<16x128xf32>
      %c0_11 = arith.constant 0 : index
      %c0_12 = arith.constant 0 : index
      %13 = vector.load %arg7[%c0_11, %c0_12] : memref<16x128xf32, #tpu.memory_space<vmem>>, vector<16x128xf32>
      tpu.vector_store %arg7[%c0_11, %c0_12], %12 {strides = array<i32>} : memref<16x128xf32, #tpu.memory_space<vmem>>, vector<16x128xf32>,
    } else {
    }
    %c0 = arith.constant 0 : index
    %c0_1 = arith.constant 0 : index
    %3 = vector.load %arg3[%c0, %c0_1] : memref<16x128xbf16, #tpu.memory_space<vmem>>, vector<16x128xbf16>
    %c0_2 = arith.constant 0 : index
    %c0_3 = arith.constant 0 : index
    %4 = vector.load %arg7[%c0_2, %c0_3] : memref<16x128xf32, #tpu.memory_space<vmem>>, vector<16x128xf32>
    %c0_4 = arith.constant 0 : index
    %c0_5 = arith.constant 0 : index
    %5 = vector.load %arg4[%c0_4, %c0_5] : memref<128x128xbf16, #tpu.memory_space<vmem>>, vector<128x128xbf16>
    %cst = arith.constant dense<0.000000e+00> : vector<16x128xf32>
    %6 = tpu.matmul %3, %5, %cst {dimension_numbers = #tpu.dot_dimension_numbers<[1], [0], [0], [1], [0, 0, 1, 1], [], []>} : vector<16x128xbf16>, vector<128x128xbf16>, vector<16x128xf32> -> vector<16x128xf32>
    %7 = arith.addf %4, %6 : vector<16x128xf32>
    %c0_6 = arith.constant 0 : index
    %c0_7 = arith.constant 0 : index
    %8 = vector.load %arg7[%c0_6, %c0_7] : memref<16x128xf32, #tpu.memory_space<vmem>>, vector<16x128xf32>
    tpu.vector_store %arg7[%c0_6, %c0_7], %7 {strides = array<i32>} : memref<16x128xf32, #tpu.memory_space<vmem>>, vector<16x128xf32>,
    %c0_i32_8 = arith.constant 0 : i32
    %9 = arith.cmpi eq, %arg2, %c0_i32_8 : i32
    %10 = arith.extui %9 : i1 to i32
    %c0_i32_9 = arith.constant 0 : i32
    %11 = arith.cmpi ne, %10, %c0_i32_9 : i32
    scf.if %11 {
      %c0_10 = arith.constant 0 : index
      %c0_11 = arith.constant 0 : index
      %12 = vector.load %arg7[%c0_10, %c0_11] : memref<16x128xf32, #tpu.memory_space<vmem>>, vector<16x128xf32>
      %c0_12 = arith.constant 0 : index
      %c0_13 = arith.constant 0 : index
      %13 = vector.load %arg5[%c0_12, %c0_13] : memref<1x128xf32, #tpu.memory_space<vmem>>, vector<1x128xf32>
      %14 = vector.broadcast %13 : vector<1x128xf32> to vector<16x128xf32>
      %15 = arith.addf %12, %14 : vector<16x128xf32>
      %16 = arith.truncf %15 : vector<16x128xf32> to vector<16x128xbf16>
      %c0_14 = arith.constant 0 : index
      %c0_15 = arith.constant 0 : index
      %17 = vector.load %arg6[%c0_14, %c0_15] : memref<16x128xbf16, #tpu.memory_space<vmem>>, vector<16x128xbf16>
      tpu.vector_store %arg6[%c0_14, %c0_15], %16 {strides = array<i32>} : memref<16x128xbf16, #tpu.memory_space<vmem>>, vector<16x128xbf16>,
    } else {
    }
    return
  }
  func.func @transform_0(%arg0: i32, %arg1: i32, %arg2: i32) -> (i32, i32) {
    %c0_i32 = arith.constant 0 : i32
    return %arg0, %arg2 : i32, i32
  }
  func.func @transform_1(%arg0: i32, %arg1: i32, %arg2: i32) -> (i32, i32) {
    %c0_i32 = arith.constant 0 : i32
    return %arg2, %arg1 : i32, i32
  }
  func.func @transform_2(%arg0: i32, %arg1: i32, %arg2: i32) -> (i32, i32) {
    %c0_i32 = arith.constant 0 : i32
    %c0_i32_0 = arith.constant 0 : i32
    return %c0_i32, %arg1 : i32, i32
  }
  func.func @transform_3(%arg0: i32, %arg1: i32, %arg2: i32) -> (i32, i32) {
    %c0_i32 = arith.constant 0 : i32
    return %arg0, %arg1 : i32, i32
  }
}

module attributes {stable_mosaic.version = 11 : i64} {
  func.func @_fused_mm_kernel(%arg0: i32, %arg1: i32, %arg2: i32, %arg3: memref<16x128xbf16, #tpu.memory_space<vmem>>, %arg4: memref<128x128xbf16, #tpu.memory_space<vmem>>, %arg5: memref<1x128xf32, #tpu.memory_space<vmem>>, %arg6: memref<16x128xbf16, #tpu.memory_space<vmem>>, %arg7: memref<16x128xbf16, #tpu.memory_space<vmem>>, %arg8: memref<16x128xf32, #tpu.memory_space<vmem>>) attributes {dimension_semantics = [#tpu.dimension_semantics<parallel>, #tpu.dimension_semantics<parallel>, #tpu.dimension_semantics<arbitrary>], iteration_bounds = array<i64: 1, 1, 1>, scalar_prefetch = 0 : i64, scratch_operands = 1 : i64, tpu.core_type = #tpu.core_type<tc>, window_params = [{transform_indices = @transform_0, window_bounds = array<i64: 16, 128>}, {transform_indices = @transform_1, window_bounds = array<i64: 128, 128>}, {transform_indices = @transform_2, window_bounds = array<i64: 1, 128>}, {transform_indices = @transform_3, window_bounds = array<i64: 16, 128>}, {transform_indices = @transform_4, window_bounds = array<i64: 16, 128>}]} {
    %c0_i32 = arith.constant 0 : i32
    %0 = arith.cmpi eq, %arg2, %c0_i32 : i32
    %1 = arith.extui %0 : i1 to i32
    %c0_i32_0 = arith.constant 0 : i32
    %2 = arith.cmpi ne, %1, %c0_i32_0 : i32
    scf.if %2 {
      %cst_10 = arith.constant 0.000000e+00 : f32
      %12 = vector.broadcast %cst_10 : f32 to vector<16x128xf32>
      %c0_11 = arith.constant 0 : index
      %c0_12 = arith.constant 0 : index
      %13 = vector.load %arg8[%c0_11, %c0_12] : memref<16x128xf32, #tpu.memory_space<vmem>>, vector<16x128xf32>
      tpu.vector_store %arg8[%c0_11, %c0_12], %12 {strides = array<i32>} : memref<16x128xf32, #tpu.memory_space<vmem>>, vector<16x128xf32>,
    } else {
    }
    %c0 = arith.constant 0 : index
    %c0_1 = arith.constant 0 : index
    %3 = vector.load %arg3[%c0, %c0_1] : memref<16x128xbf16, #tpu.memory_space<vmem>>, vector<16x128xbf16>
    %c0_2 = arith.constant 0 : index
    %c0_3 = arith.constant 0 : index
    %4 = vector.load %arg8[%c0_2, %c0_3] : memref<16x128xf32, #tpu.memory_space<vmem>>, vector<16x128xf32>
    %c0_4 = arith.constant 0 : index
    %c0_5 = arith.constant 0 : index
    %5 = vector.load %arg4[%c0_4, %c0_5] : memref<128x128xbf16, #tpu.memory_space<vmem>>, vector<128x128xbf16>
    %cst = arith.constant dense<0.000000e+00> : vector<16x128xf32>
    %6 = tpu.matmul %3, %5, %cst {dimension_numbers = #tpu.dot_dimension_numbers<[1], [0], [0], [1], [0, 0, 1, 1], [], []>} : vector<16x128xbf16>, vector<128x128xbf16>, vector<16x128xf32> -> vector<16x128xf32>
    %7 = arith.addf %4, %6 : vector<16x128xf32>
    %c0_6 = arith.constant 0 : index
    %c0_7 = arith.constant 0 : index
    %8 = vector.load %arg8[%c0_6, %c0_7] : memref<16x128xf32, #tpu.memory_space<vmem>>, vector<16x128xf32>
    tpu.vector_store %arg8[%c0_6, %c0_7], %7 {strides = array<i32>} : memref<16x128xf32, #tpu.memory_space<vmem>>, vector<16x128xf32>,
    %c0_i32_8 = arith.constant 0 : i32
    %9 = arith.cmpi eq, %arg2, %c0_i32_8 : i32
    %10 = arith.extui %9 : i1 to i32
    %c0_i32_9 = arith.constant 0 : i32
    %11 = arith.cmpi ne, %10, %c0_i32_9 : i32
    scf.if %11 {
      %c0_10 = arith.constant 0 : index
      %c0_11 = arith.constant 0 : index
      %12 = vector.load %arg8[%c0_10, %c0_11] : memref<16x128xf32, #tpu.memory_space<vmem>>, vector<16x128xf32>
      %c0_12 = arith.constant 0 : index
      %c0_13 = arith.constant 0 : index
      %13 = vector.load %arg5[%c0_12, %c0_13] : memref<1x128xf32, #tpu.memory_space<vmem>>, vector<1x128xf32>
      %14 = vector.broadcast %13 : vector<1x128xf32> to vector<16x128xf32>
      %15 = arith.addf %12, %14 : vector<16x128xf32>
      %cst_14 = arith.constant 5.000000e-01 : f32
      %16 = vector.broadcast %cst_14 : f32 to vector<16x128xf32>
      %17 = arith.mulf %15, %16 : vector<16x128xf32>
      %c0_15 = arith.constant 0 : index
      %c0_16 = arith.constant 0 : index
      %18 = vector.load %arg6[%c0_15, %c0_16] : memref<16x128xbf16, #tpu.memory_space<vmem>>, vector<16x128xbf16>
      %19 = arith.extf %18 : vector<16x128xbf16> to vector<16x128xf32>
      %20 = arith.addf %17, %19 : vector<16x128xf32>
      %21 = arith.truncf %20 : vector<16x128xf32> to vector<16x128xbf16>
      %c0_17 = arith.constant 0 : index
      %c0_18 = arith.constant 0 : index
      %22 = vector.load %arg7[%c0_17, %c0_18] : memref<16x128xbf16, #tpu.memory_space<vmem>>, vector<16x128xbf16>
      tpu.vector_store %arg7[%c0_17, %c0_18], %21 {strides = array<i32>} : memref<16x128xbf16, #tpu.memory_space<vmem>>, vector<16x128xbf16>,
    } else {
    }
    return
  }
  func.func @transform_0(%arg0: i32, %arg1: i32, %arg2: i32) -> (i32, i32) {
    %c0_i32 = arith.constant 0 : i32
    return %arg0, %arg2 : i32, i32
  }
  func.func @transform_1(%arg0: i32, %arg1: i32, %arg2: i32) -> (i32, i32) {
    %c0_i32 = arith.constant 0 : i32
    return %arg2, %arg1 : i32, i32
  }
  func.func @transform_2(%arg0: i32, %arg1: i32, %arg2: i32) -> (i32, i32) {
    %c0_i32 = arith.constant 0 : i32
    %c0_i32_0 = arith.constant 0 : i32
    return %c0_i32, %arg1 : i32, i32
  }
  func.func @transform_3(%arg0: i32, %arg1: i32, %arg2: i32) -> (i32, i32) {
    %c0_i32 = arith.constant 0 : i32
    return %arg0, %arg1 : i32, i32
  }
  func.func @transform_4(%arg0: i32, %arg1: i32, %arg2: i32) -> (i32, i32) {
    %c0_i32 = arith.constant 0 : i32
    return %arg0, %arg1 : i32, i32
  }
}

module attributes {stable_mosaic.version = 11 : i64} {
  func.func @_fused_mm_kernel(%arg0: i32, %arg1: i32, %arg2: i32, %arg3: memref<16x128xbf16, #tpu.memory_space<vmem>>, %arg4: memref<128x128xbf16, #tpu.memory_space<vmem>>, %arg5: memref<1x128xf32, #tpu.memory_space<vmem>>, %arg6: memref<1x128xf32, #tpu.memory_space<vmem>>, %arg7: memref<1x128xf32, #tpu.memory_space<vmem>>, %arg8: memref<16x128xbf16, #tpu.memory_space<vmem>>, %arg9: memref<16x128xf32, #tpu.memory_space<vmem>>) attributes {dimension_semantics = [#tpu.dimension_semantics<parallel>, #tpu.dimension_semantics<parallel>, #tpu.dimension_semantics<arbitrary>], iteration_bounds = array<i64: 1, 1, 1>, scalar_prefetch = 0 : i64, scratch_operands = 1 : i64, tpu.core_type = #tpu.core_type<tc>, window_params = [{transform_indices = @transform_0, window_bounds = array<i64: 16, 128>}, {transform_indices = @transform_1, window_bounds = array<i64: 128, 128>}, {transform_indices = @transform_2, window_bounds = array<i64: 1, 128>}, {transform_indices = @transform_3, window_bounds = array<i64: 1, 128>}, {transform_indices = @transform_4, window_bounds = array<i64: 1, 128>}, {transform_indices = @transform_5, window_bounds = array<i64: 16, 128>}]} {
    %c0_i32 = arith.constant 0 : i32
    %0 = arith.cmpi eq, %arg2, %c0_i32 : i32
    %1 = arith.extui %0 : i1 to i32
    %c0_i32_0 = arith.constant 0 : i32
    %2 = arith.cmpi ne, %1, %c0_i32_0 : i32
    scf.if %2 {
      %cst_20 = arith.constant 0.000000e+00 : f32
      %40 = vector.broadcast %cst_20 : f32 to vector<16x128xf32>
      %c0_21 = arith.constant 0 : index
      %c0_22 = arith.constant 0 : index
      %41 = vector.load %arg9[%c0_21, %c0_22] : memref<16x128xf32, #tpu.memory_space<vmem>>, vector<16x128xf32>
      tpu.vector_store %arg9[%c0_21, %c0_22], %40 {strides = array<i32>} : memref<16x128xf32, #tpu.memory_space<vmem>>, vector<16x128xf32>,
    } else {
    }
    %c0 = arith.constant 0 : index
    %c0_1 = arith.constant 0 : index
    %3 = vector.load %arg3[%c0, %c0_1] : memref<16x128xbf16, #tpu.memory_space<vmem>>, vector<16x128xbf16>
    %4 = arith.extf %3 : vector<16x128xbf16> to vector<16x128xf32>
    %cst = arith.constant dense<0.000000e+00> : vector<16xf32>
    %5 = vector.multi_reduction <add>, %4, %cst [1] : vector<16x128xf32> to vector<16xf32>
    %6 = vector.shape_cast %5 : vector<16xf32> to vector<16x1xf32>
    %cst_2 = arith.constant 3.125000e-02 : f32
    %7 = vector.broadcast %cst_2 : f32 to vector<16x1xf32>
    %8 = arith.mulf %6, %7 : vector<16x1xf32>
    %9 = arith.mulf %4, %4 : vector<16x128xf32>
    %cst_3 = arith.constant dense<0.000000e+00> : vector<16xf32>
    %10 = vector.multi_reduction <add>, %9, %cst_3 [1] : vector<16x128xf32> to vector<16xf32>
    %11 = vector.shape_cast %10 : vector<16xf32> to vector<16x1xf32>
    %cst_4 = arith.constant 3.125000e-02 : f32
    %12 = vector.broadcast %cst_4 : f32 to vector<16x1xf32>
    %13 = arith.mulf %11, %12 : vector<16x1xf32>
    %14 = arith.mulf %8, %8 : vector<16x1xf32>
    %15 = arith.subf %13, %14 : vector<16x1xf32>
    %cst_5 = arith.constant 0.000000e+00 : f32
    %16 = vector.broadcast %cst_5 : f32 to vector<16x1xf32>
    %17 = arith.maximumf %15, %16 : vector<16x1xf32>
    %18 = vector.broadcast %8 : vector<16x1xf32> to vector<16x128xf32>
    %19 = arith.subf %4, %18 : vector<16x128xf32>
    %cst_6 = arith.constant 9.99999974E-6 : f32
    %20 = vector.broadcast %cst_6 : f32 to vector<16x1xf32>
    %21 = arith.addf %17, %20 : vector<16x1xf32>
    %22 = math.rsqrt %21 : vector<16x1xf32>
    %23 = vector.broadcast %22 : vector<16x1xf32> to vector<16x128xf32>
    %24 = arith.mulf %19, %23 : vector<16x128xf32>
    %c0_7 = arith.constant 0 : index
    %c0_8 = arith.constant 0 : index
    %25 = vector.load %arg6[%c0_7, %c0_8] : memref<1x128xf32, #tpu.memory_space<vmem>>, vector<1x128xf32>
    %26 = vector.broadcast %25 : vector<1x128xf32> to vector<16x128xf32>
    %27 = arith.mulf %24, %26 : vector<16x128xf32>
    %c0_9 = arith.constant 0 : index
    %c0_10 = arith.constant 0 : index
    %28 = vector.load %arg7[%c0_9, %c0_10] : memref<1x128xf32, #tpu.memory_space<vmem>>, vector<1x128xf32>
    %29 = vector.broadcast %28 : vector<1x128xf32> to vector<16x128xf32>
    %30 = arith.addf %27, %29 : vector<16x128xf32>
    %31 = arith.truncf %30 : vector<16x128xf32> to vector<16x128xbf16>
    %c0_11 = arith.constant 0 : index
    %c0_12 = arith.constant 0 : index
    %32 = vector.load %arg9[%c0_11, %c0_12] : memref<16x128xf32, #tpu.memory_space<vmem>>, vector<16x128xf32>
    %c0_13 = arith.constant 0 : index
    %c0_14 = arith.constant 0 : index
    %33 = vector.load %arg4[%c0_13, %c0_14] : memref<128x128xbf16, #tpu.memory_space<vmem>>, vector<128x128xbf16>
    %cst_15 = arith.constant dense<0.000000e+00> : vector<16x128xf32>
    %34 = tpu.matmul %31, %33, %cst_15 {dimension_numbers = #tpu.dot_dimension_numbers<[1], [0], [0], [1], [0, 0, 1, 1], [], []>} : vector<16x128xbf16>, vector<128x128xbf16>, vector<16x128xf32> -> vector<16x128xf32>
    %35 = arith.addf %32, %34 : vector<16x128xf32>
    %c0_16 = arith.constant 0 : index
    %c0_17 = arith.constant 0 : index
    %36 = vector.load %arg9[%c0_16, %c0_17] : memref<16x128xf32, #tpu.memory_space<vmem>>, vector<16x128xf32>
    tpu.vector_store %arg9[%c0_16, %c0_17], %35 {strides = array<i32>} : memref<16x128xf32, #tpu.memory_space<vmem>>, vector<16x128xf32>,
    %c0_i32_18 = arith.constant 0 : i32
    %37 = arith.cmpi eq, %arg2, %c0_i32_18 : i32
    %38 = arith.extui %37 : i1 to i32
    %c0_i32_19 = arith.constant 0 : i32
    %39 = arith.cmpi ne, %38, %c0_i32_19 : i32
    scf.if %39 {
      %c0_20 = arith.constant 0 : index
      %c0_21 = arith.constant 0 : index
      %40 = vector.load %arg9[%c0_20, %c0_21] : memref<16x128xf32, #tpu.memory_space<vmem>>, vector<16x128xf32>
      %c0_22 = arith.constant 0 : index
      %c0_23 = arith.constant 0 : index
      %41 = vector.load %arg5[%c0_22, %c0_23] : memref<1x128xf32, #tpu.memory_space<vmem>>, vector<1x128xf32>
      %42 = vector.broadcast %41 : vector<1x128xf32> to vector<16x128xf32>
      %43 = arith.addf %40, %42 : vector<16x128xf32>
      %44 = arith.truncf %43 : vector<16x128xf32> to vector<16x128xbf16>
      %c0_24 = arith.constant 0 : index
      %c0_25 = arith.constant 0 : index
      %45 = vector.load %arg8[%c0_24, %c0_25] : memref<16x128xbf16, #tpu.memory_space<vmem>>, vector<16x128xbf16>
      tpu.vector_store %arg8[%c0_24, %c0_25], %44 {strides = array<i32>} : memref<16x128xbf16, #tpu.memory_space<vmem>>, vector<16x128xbf16>,
    } else {
    }
    return
  }
  func.func @transform_0(%arg0: i32, %arg1: i32, %arg2: i32) -> (i32, i32) {
    %c0_i32 = arith.constant 0 : i32
    return %arg0, %arg2 : i32, i32
  }
  func.func @transform_1(%arg0: i32, %arg1: i32, %arg2: i32) -> (i32, i32) {
    %c0_i32 = arith.constant 0 : i32
    return %arg2, %arg1 : i32, i32
  }
  func.func @transform_2(%arg0: i32, %arg1: i32, %arg2: i32) -> (i32, i32) {
    %c0_i32 = arith.constant 0 : i32
    %c0_i32_0 = arith.constant 0 : i32
    return %c0_i32, %arg1 : i32, i32
  }
  func.func @transform_3(%arg0: i32, %arg1: i32, %arg2: i32) -> (i32, i32) {
    %c0_i32 = arith.constant 0 : i32
    %c0_i32_0 = arith.constant 0 : i32
    return %c0_i32, %arg2 : i32, i32
  }
  func.func @transform_4(%arg0: i32, %arg1: i32, %arg2: i32) -> (i32, i32) {
    %c0_i32 = arith.constant 0 : i32
    %c0_i32_0 = arith.constant 0 : i32
    return %c0_i32, %arg2 : i32, i32
  }
  func.func @transform_5(%arg0: i32, %arg1: i32, %arg2: i32) -> (i32, i32) {
    %c0_i32 = arith.constant 0 : i32
    return %arg0, %arg1 : i32, i32
  }
}

module attributes {stable_mosaic.version = 11 : i64} {
  func.func @_fused_mm_kernel(%arg0: i32, %arg1: i32, %arg2: i32, %arg3: memref<8x128xbf16, #tpu.memory_space<vmem>>, %arg4: memref<128x128xbf16, #tpu.memory_space<vmem>>, %arg5: memref<1x128xf32, #tpu.memory_space<vmem>>, %arg6: memref<8x128xf32, #tpu.memory_space<vmem>>, %arg7: memref<8x128xf32, #tpu.memory_space<vmem>>) attributes {dimension_semantics = [#tpu.dimension_semantics<parallel>, #tpu.dimension_semantics<parallel>, #tpu.dimension_semantics<arbitrary>], iteration_bounds = array<i64: 1, 1, 1>, scalar_prefetch = 0 : i64, scratch_operands = 1 : i64, tpu.core_type = #tpu.core_type<tc>, window_params = [{transform_indices = @transform_0, window_bounds = array<i64: 8, 128>}, {transform_indices = @transform_1, window_bounds = array<i64: 128, 128>}, {transform_indices = @transform_2, window_bounds = array<i64: 1, 128>}, {transform_indices = @transform_3, window_bounds = array<i64: 8, 128>}]} {
    %c0_i32 = arith.constant 0 : i32
    %0 = arith.cmpi eq, %arg2, %c0_i32 : i32
    %1 = arith.extui %0 : i1 to i32
    %c0_i32_0 = arith.constant 0 : i32
    %2 = arith.cmpi ne, %1, %c0_i32_0 : i32
    scf.if %2 {
      %cst_10 = arith.constant 0.000000e+00 : f32
      %12 = vector.broadcast %cst_10 : f32 to vector<8x128xf32>
      %c0_11 = arith.constant 0 : index
      %c0_12 = arith.constant 0 : index
      %13 = vector.load %arg7[%c0_11, %c0_12] : memref<8x128xf32, #tpu.memory_space<vmem>>, vector<8x128xf32>
      tpu.vector_store %arg7[%c0_11, %c0_12], %12 {strides = array<i32>} : memref<8x128xf32, #tpu.memory_space<vmem>>, vector<8x128xf32>,
    } else {
    }
    %c0 = arith.constant 0 : index
    %c0_1 = arith.constant 0 : index
    %3 = vector.load %arg3[%c0, %c0_1] : memref<8x128xbf16, #tpu.memory_space<vmem>>, vector<8x128xbf16>
    %c0_2 = arith.constant 0 : index
    %c0_3 = arith.constant 0 : index
    %4 = vector.load %arg7[%c0_2, %c0_3] : memref<8x128xf32, #tpu.memory_space<vmem>>, vector<8x128xf32>
    %c0_4 = arith.constant 0 : index
    %c0_5 = arith.constant 0 : index
    %5 = vector.load %arg4[%c0_4, %c0_5] : memref<128x128xbf16, #tpu.memory_space<vmem>>, vector<128x128xbf16>
    %cst = arith.constant dense<0.000000e+00> : vector<8x128xf32>
    %6 = tpu.matmul %3, %5, %cst {dimension_numbers = #tpu.dot_dimension_numbers<[1], [0], [0], [1], [0, 0, 1, 1], [], []>} : vector<8x128xbf16>, vector<128x128xbf16>, vector<8x128xf32> -> vector<8x128xf32>
    %7 = arith.addf %4, %6 : vector<8x128xf32>
    %c0_6 = arith.constant 0 : index
    %c0_7 = arith.constant 0 : index
    %8 = vector.load %arg7[%c0_6, %c0_7] : memref<8x128xf32, #tpu.memory_space<vmem>>, vector<8x128xf32>
    tpu.vector_store %arg7[%c0_6, %c0_7], %7 {strides = array<i32>} : memref<8x128xf32, #tpu.memory_space<vmem>>, vector<8x128xf32>,
    %c0_i32_8 = arith.constant 0 : i32
    %9 = arith.cmpi eq, %arg2, %c0_i32_8 : i32
    %10 = arith.extui %9 : i1 to i32
    %c0_i32_9 = arith.constant 0 : i32
    %11 = arith.cmpi ne, %10, %c0_i32_9 : i32
    scf.if %11 {
      %c0_10 = arith.constant 0 : index
      %c0_11 = arith.constant 0 : index
      %12 = vector.load %arg7[%c0_10, %c0_11] : memref<8x128xf32, #tpu.memory_space<vmem>>, vector<8x128xf32>
      %c0_12 = arith.constant 0 : index
      %c0_13 = arith.constant 0 : index
      %13 = vector.load %arg5[%c0_12, %c0_13] : memref<1x128xf32, #tpu.memory_space<vmem>>, vector<1x128xf32>
      %14 = vector.broadcast %13 : vector<1x128xf32> to vector<8x128xf32>
      %15 = arith.addf %12, %14 : vector<8x128xf32>
      %c0_14 = arith.constant 0 : index
      %c0_15 = arith.constant 0 : index
      %16 = vector.load %arg6[%c0_14, %c0_15] : memref<8x128xf32, #tpu.memory_space<vmem>>, vector<8x128xf32>
      tpu.vector_store %arg6[%c0_14, %c0_15], %15 {strides = array<i32>} : memref<8x128xf32, #tpu.memory_space<vmem>>, vector<8x128xf32>,
    } else {
    }
    return
  }
  func.func @transform_0(%arg0: i32, %arg1: i32, %arg2: i32) -> (i32, i32) {
    %c0_i32 = arith.constant 0 : i32
    return %arg0, %arg2 : i32, i32
  }
  func.func @transform_1(%arg0: i32, %arg1: i32, %arg2: i32) -> (i32, i32) {
    %c0_i32 = arith.constant 0 : i32
    return %arg2, %arg1 : i32, i32
  }
  func.func @transform_2(%arg0: i32, %arg1: i32, %arg2: i32) -> (i32, i32) {
    %c0_i32 = arith.constant 0 : i32
    %c0_i32_0 = arith.constant 0 : i32
    return %c0_i32, %arg1 : i32, i32
  }
  func.func @transform_3(%arg0: i32, %arg1: i32, %arg2: i32) -> (i32, i32) {
    %c0_i32 = arith.constant 0 : i32
    return %arg0, %arg1 : i32, i32
  }
}

module attributes {stable_mosaic.version = 11 : i64} {
  func.func @_mhsa_attn_kernel(%arg0: i32, %arg1: memref<1x7x32xbf16, #tpu.memory_space<vmem>>, %arg2: memref<1x7x32xbf16, #tpu.memory_space<vmem>>, %arg3: memref<1x7x32xbf16, #tpu.memory_space<vmem>>, %arg4: memref<1x32xf32, #tpu.memory_space<vmem>>, %arg5: memref<1x4x7x7xbf16, #tpu.memory_space<vmem>>, %arg6: memref<1x7x32xbf16, #tpu.memory_space<vmem>>) attributes {dimension_semantics = [#tpu.dimension_semantics<parallel>], iteration_bounds = array<i64: 2>, scalar_prefetch = 0 : i64, scratch_operands = 0 : i64, tpu.core_type = #tpu.core_type<tc>, window_params = [{transform_indices = @transform_0, window_bounds = array<i64: 1, 7, 32>}, {transform_indices = @transform_1, window_bounds = array<i64: 1, 7, 32>}, {transform_indices = @transform_2, window_bounds = array<i64: 1, 7, 32>}, {pipeline_mode = #tpu.pipeline_mode<synchronous>, transform_indices = @transform_3, window_bounds = array<i64: 1, 32>}, {transform_indices = @transform_4, window_bounds = array<i64: 1, 4, 7, 7>}, {transform_indices = @transform_5, window_bounds = array<i64: 1, 7, 32>}]} {
    %c0 = arith.constant 0 : index
    %c0_0 = arith.constant 0 : index
    %c0_1 = arith.constant 0 : index
    %0 = vector.load %arg1[%c0, %c0_0, %c0_1] : memref<1x7x32xbf16, #tpu.memory_space<vmem>>, vector<1x7x32xbf16>
    %1 = vector.shape_cast %0 : vector<1x7x32xbf16> to vector<7x32xbf16>
    %2 = arith.extf %1 : vector<7x32xbf16> to vector<7x32xf32>
    %c0_2 = arith.constant 0 : index
    %c0_3 = arith.constant 0 : index
    %3 = vector.load %arg4[%c0_2, %c0_3] : memref<1x32xf32, #tpu.memory_space<vmem>>, vector<1x32xf32>
    %4 = vector.broadcast %3 : vector<1x32xf32> to vector<7x32xf32>
    %5 = arith.addf %2, %4 : vector<7x32xf32>
    %cst = arith.constant 0.176776692 : f32
    %6 = vector.broadcast %cst : f32 to vector<7x32xf32>
    %7 = arith.mulf %5, %6 : vector<7x32xf32>
    %8 = arith.truncf %7 : vector<7x32xf32> to vector<7x32xbf16>
    %c0_4 = arith.constant 0 : index
    %c0_5 = arith.constant 0 : index
    %c0_6 = arith.constant 0 : index
    %9 = vector.load %arg2[%c0_4, %c0_5, %c0_6] : memref<1x7x32xbf16, #tpu.memory_space<vmem>>, vector<1x7x32xbf16>
    %10 = vector.shape_cast %9 : vector<1x7x32xbf16> to vector<7x32xbf16>
    %c0_7 = arith.constant 0 : index
    %c0_8 = arith.constant 0 : index
    %c0_9 = arith.constant 0 : index
    %11 = vector.load %arg3[%c0_7, %c0_8, %c0_9] : memref<1x7x32xbf16, #tpu.memory_space<vmem>>, vector<1x7x32xbf16>
    %12 = vector.shape_cast %11 : vector<1x7x32xbf16> to vector<7x32xbf16>
    %13 = vector.extract_strided_slice %8 {offsets = [0, 0], sizes = [7, 8], strides = [1, 1]} : vector<7x32xbf16> to vector<7x8xbf16>
    %14 = vector.extract_strided_slice %10 {offsets = [0, 0], sizes = [7, 8], strides = [1, 1]} : vector<7x32xbf16> to vector<7x8xbf16>
    %15 = vector.extract_strided_slice %12 {offsets = [0, 0], sizes = [7, 8], strides = [1, 1]} : vector<7x32xbf16> to vector<7x8xbf16>
    %cst_10 = arith.constant dense<0.000000e+00> : vector<7x7xf32>
    %16 = tpu.matmul %13, %14, %cst_10 {dimension_numbers = #tpu.dot_dimension_numbers<[1], [1], [0], [0], [0, 0, 1, 0], [], []>} : vector<7x8xbf16>, vector<7x8xbf16>, vector<7x7xf32> -> vector<7x7xf32>
    %c0_11 = arith.constant 0 : index
    %c0_12 = arith.constant 0 : index
    %c0_13 = arith.constant 0 : index
    %c0_14 = arith.constant 0 : index
    %17 = vector.load %arg5[%c0_11, %c0_12, %c0_13, %c0_14] : memref<1x4x7x7xbf16, #tpu.memory_space<vmem>>, vector<1x1x7x7xbf16>
    %18 = vector.shape_cast %17 : vector<1x1x7x7xbf16> to vector<7x7xbf16>
    %19 = arith.extf %18 : vector<7x7xbf16> to vector<7x7xf32>
    %20 = arith.addf %16, %19 : vector<7x7xf32>
    %cst_15 = arith.constant dense<0xFF800000> : vector<7xf32>
    %21 = vector.multi_reduction <maximumf>, %20, %cst_15 [1] : vector<7x7xf32> to vector<7xf32>
    %22 = vector.shape_cast %21 : vector<7xf32> to vector<7x1xf32>
    %23 = vector.broadcast %22 : vector<7x1xf32> to vector<7x7xf32>
    %24 = arith.subf %20, %23 : vector<7x7xf32>
    %25 = math.exp %24 : vector<7x7xf32>
    %cst_16 = arith.constant dense<0.000000e+00> : vector<7xf32>
    %26 = vector.multi_reduction <add>, %25, %cst_16 [1] : vector<7x7xf32> to vector<7xf32>
    %27 = vector.shape_cast %26 : vector<7xf32> to vector<7x1xf32>
    %28 = tpu.reciprocal %27 {approx = true} : vector<7x1xf32> -> vector<7x1xf32>
    %29 = vector.broadcast %28 : vector<7x1xf32> to vector<7x7xf32>
    %30 = arith.mulf %25, %29 : vector<7x7xf32>
    %31 = arith.truncf %30 : vector<7x7xf32> to vector<7x7xbf16>
    %cst_17 = arith.constant dense<0.000000e+00> : vector<7x8xf32>
    %32 = tpu.matmul %31, %15, %cst_17 {dimension_numbers = #tpu.dot_dimension_numbers<[1], [0], [0], [1], [0, 0, 1, 1], [], []>} : vector<7x7xbf16>, vector<7x8xbf16>, vector<7x8xf32> -> vector<7x8xf32>
    %33 = vector.extract_strided_slice %8 {offsets = [0, 8], sizes = [7, 8], strides = [1, 1]} : vector<7x32xbf16> to vector<7x8xbf16>
    %34 = vector.extract_strided_slice %10 {offsets = [0, 8], sizes = [7, 8], strides = [1, 1]} : vector<7x32xbf16> to vector<7x8xbf16>
    %35 = vector.extract_strided_slice %12 {offsets = [0, 8], sizes = [7, 8], strides = [1, 1]} : vector<7x32xbf16> to vector<7x8xbf16>
    %cst_18 = arith.constant dense<0.000000e+00> : vector<7x7xf32>
    %36 = tpu.matmul %33, %34, %cst_18 {dimension_numbers = #tpu.dot_dimension_numbers<[1], [1], [0], [0], [0, 0, 1, 0], [], []>} : vector<7x8xbf16>, vector<7x8xbf16>, vector<7x7xf32> -> vector<7x7xf32>
    %c0_19 = arith.constant 0 : index
    %c1 = arith.constant 1 : index
    %c0_20 = arith.constant 0 : index
    %c0_21 = arith.constant 0 : index
    %37 = vector.load %arg5[%c0_19, %c1, %c0_20, %c0_21] : memref<1x4x7x7xbf16, #tpu.memory_space<vmem>>, vector<1x1x7x7xbf16>
    %38 = vector.shape_cast %37 : vector<1x1x7x7xbf16> to vector<7x7xbf16>
    %39 = arith.extf %38 : vector<7x7xbf16> to vector<7x7xf32>
    %40 = arith.addf %36, %39 : vector<7x7xf32>
    %cst_22 = arith.constant dense<0xFF800000> : vector<7xf32>
    %41 = vector.multi_reduction <maximumf>, %40, %cst_22 [1] : vector<7x7xf32> to vector<7xf32>
    %42 = vector.shape_cast %41 : vector<7xf32> to vector<7x1xf32>
    %43 = vector.broadcast %42 : vector<7x1xf32> to vector<7x7xf32>
    %44 = arith.subf %40, %43 : vector<7x7xf32>
    %45 = math.exp %44 : vector<7x7xf32>
    %cst_23 = arith.constant dense<0.000000e+00> : vector<7xf32>
    %46 = vector.multi_reduction <add>, %45, %cst_23 [1] : vector<7x7xf32> to vector<7xf32>
    %47 = vector.shape_cast %46 : vector<7xf32> to vector<7x1xf32>
    %48 = tpu.reciprocal %47 {approx = true} : vector<7x1xf32> -> vector<7x1xf32>
    %49 = vector.broadcast %48 : vector<7x1xf32> to vector<7x7xf32>
    %50 = arith.mulf %45, %49 : vector<7x7xf32>
    %51 = arith.truncf %50 : vector<7x7xf32> to vector<7x7xbf16>
    %cst_24 = arith.constant dense<0.000000e+00> : vector<7x8xf32>
    %52 = tpu.matmul %51, %35, %cst_24 {dimension_numbers = #tpu.dot_dimension_numbers<[1], [0], [0], [1], [0, 0, 1, 1], [], []>} : vector<7x7xbf16>, vector<7x8xbf16>, vector<7x8xf32> -> vector<7x8xf32>
    %53 = vector.extract_strided_slice %8 {offsets = [0, 16], sizes = [7, 8], strides = [1, 1]} : vector<7x32xbf16> to vector<7x8xbf16>
    %54 = vector.extract_strided_slice %10 {offsets = [0, 16], sizes = [7, 8], strides = [1, 1]} : vector<7x32xbf16> to vector<7x8xbf16>
    %55 = vector.extract_strided_slice %12 {offsets = [0, 16], sizes = [7, 8], strides = [1, 1]} : vector<7x32xbf16> to vector<7x8xbf16>
    %cst_25 = arith.constant dense<0.000000e+00> : vector<7x7xf32>
    %56 = tpu.matmul %53, %54, %cst_25 {dimension_numbers = #tpu.dot_dimension_numbers<[1], [1], [0], [0], [0, 0, 1, 0], [], []>} : vector<7x8xbf16>, vector<7x8xbf16>, vector<7x7xf32> -> vector<7x7xf32>
    %c0_26 = arith.constant 0 : index
    %c2 = arith.constant 2 : index
    %c0_27 = arith.constant 0 : index
    %c0_28 = arith.constant 0 : index
    %57 = vector.load %arg5[%c0_26, %c2, %c0_27, %c0_28] : memref<1x4x7x7xbf16, #tpu.memory_space<vmem>>, vector<1x1x7x7xbf16>
    %58 = vector.shape_cast %57 : vector<1x1x7x7xbf16> to vector<7x7xbf16>
    %59 = arith.extf %58 : vector<7x7xbf16> to vector<7x7xf32>
    %60 = arith.addf %56, %59 : vector<7x7xf32>
    %cst_29 = arith.constant dense<0xFF800000> : vector<7xf32>
    %61 = vector.multi_reduction <maximumf>, %60, %cst_29 [1] : vector<7x7xf32> to vector<7xf32>
    %62 = vector.shape_cast %61 : vector<7xf32> to vector<7x1xf32>
    %63 = vector.broadcast %62 : vector<7x1xf32> to vector<7x7xf32>
    %64 = arith.subf %60, %63 : vector<7x7xf32>
    %65 = math.exp %64 : vector<7x7xf32>
    %cst_30 = arith.constant dense<0.000000e+00> : vector<7xf32>
    %66 = vector.multi_reduction <add>, %65, %cst_30 [1] : vector<7x7xf32> to vector<7xf32>
    %67 = vector.shape_cast %66 : vector<7xf32> to vector<7x1xf32>
    %68 = tpu.reciprocal %67 {approx = true} : vector<7x1xf32> -> vector<7x1xf32>
    %69 = vector.broadcast %68 : vector<7x1xf32> to vector<7x7xf32>
    %70 = arith.mulf %65, %69 : vector<7x7xf32>
    %71 = arith.truncf %70 : vector<7x7xf32> to vector<7x7xbf16>
    %cst_31 = arith.constant dense<0.000000e+00> : vector<7x8xf32>
    %72 = tpu.matmul %71, %55, %cst_31 {dimension_numbers = #tpu.dot_dimension_numbers<[1], [0], [0], [1], [0, 0, 1, 1], [], []>} : vector<7x7xbf16>, vector<7x8xbf16>, vector<7x8xf32> -> vector<7x8xf32>
    %73 = vector.extract_strided_slice %8 {offsets = [0, 24], sizes = [7, 8], strides = [1, 1]} : vector<7x32xbf16> to vector<7x8xbf16>
    %74 = vector.extract_strided_slice %10 {offsets = [0, 24], sizes = [7, 8], strides = [1, 1]} : vector<7x32xbf16> to vector<7x8xbf16>
    %75 = vector.extract_strided_slice %12 {offsets = [0, 24], sizes = [7, 8], strides = [1, 1]} : vector<7x32xbf16> to vector<7x8xbf16>
    %cst_32 = arith.constant dense<0.000000e+00> : vector<7x7xf32>
    %76 = tpu.matmul %73, %74, %cst_32 {dimension_numbers = #tpu.dot_dimension_numbers<[1], [1], [0], [0], [0, 0, 1, 0], [], []>} : vector<7x8xbf16>, vector<7x8xbf16>, vector<7x7xf32> -> vector<7x7xf32>
    %c0_33 = arith.constant 0 : index
    %c3 = arith.constant 3 : index
    %c0_34 = arith.constant 0 : index
    %c0_35 = arith.constant 0 : index
    %77 = vector.load %arg5[%c0_33, %c3, %c0_34, %c0_35] : memref<1x4x7x7xbf16, #tpu.memory_space<vmem>>, vector<1x1x7x7xbf16>
    %78 = vector.shape_cast %77 : vector<1x1x7x7xbf16> to vector<7x7xbf16>
    %79 = arith.extf %78 : vector<7x7xbf16> to vector<7x7xf32>
    %80 = arith.addf %76, %79 : vector<7x7xf32>
    %cst_36 = arith.constant dense<0xFF800000> : vector<7xf32>
    %81 = vector.multi_reduction <maximumf>, %80, %cst_36 [1] : vector<7x7xf32> to vector<7xf32>
    %82 = vector.shape_cast %81 : vector<7xf32> to vector<7x1xf32>
    %83 = vector.broadcast %82 : vector<7x1xf32> to vector<7x7xf32>
    %84 = arith.subf %80, %83 : vector<7x7xf32>
    %85 = math.exp %84 : vector<7x7xf32>
    %cst_37 = arith.constant dense<0.000000e+00> : vector<7xf32>
    %86 = vector.multi_reduction <add>, %85, %cst_37 [1] : vector<7x7xf32> to vector<7xf32>
    %87 = vector.shape_cast %86 : vector<7xf32> to vector<7x1xf32>
    %88 = tpu.reciprocal %87 {approx = true} : vector<7x1xf32> -> vector<7x1xf32>
    %89 = vector.broadcast %88 : vector<7x1xf32> to vector<7x7xf32>
    %90 = arith.mulf %85, %89 : vector<7x7xf32>
    %91 = arith.truncf %90 : vector<7x7xf32> to vector<7x7xbf16>
    %cst_38 = arith.constant dense<0.000000e+00> : vector<7x8xf32>
    %92 = tpu.matmul %91, %75, %cst_38 {dimension_numbers = #tpu.dot_dimension_numbers<[1], [0], [0], [1], [0, 0, 1, 1], [], []>} : vector<7x7xbf16>, vector<7x8xbf16>, vector<7x8xf32> -> vector<7x8xf32>
    %93 = tpu.concatenate %32, %52, %72, %92 in 1 : vector<7x8xf32>, vector<7x8xf32>, vector<7x8xf32>, vector<7x8xf32> -> vector<7x32xf32>
    %94 = arith.truncf %93 : vector<7x32xf32> to vector<7x32xbf16>
    %c0_39 = arith.constant 0 : index
    %c0_40 = arith.constant 0 : index
    %c0_41 = arith.constant 0 : index
    %95 = vector.load %arg6[%c0_39, %c0_40, %c0_41] : memref<1x7x32xbf16, #tpu.memory_space<vmem>>, vector<1x7x32xbf16>
    %96 = vector.shape_cast %95 : vector<1x7x32xbf16> to vector<7x32xbf16>
    %97 = vector.shape_cast %94 : vector<7x32xbf16> to vector<1x7x32xbf16>
    tpu.vector_store %arg6[%c0_39, %c0_40, %c0_41], %97 {strides = array<i32>} : memref<1x7x32xbf16, #tpu.memory_space<vmem>>, vector<1x7x32xbf16>,
    return
  }
  func.func @transform_0(%arg0: i32) -> (i32, i32, i32) {
    %c0_i32 = arith.constant 0 : i32
    %c0_i32_0 = arith.constant 0 : i32
    %c0_i32_1 = arith.constant 0 : i32
    return %arg0, %c0_i32, %c0_i32_0 : i32, i32, i32
  }
  func.func @transform_1(%arg0: i32) -> (i32, i32, i32) {
    %c0_i32 = arith.constant 0 : i32
    %c0_i32_0 = arith.constant 0 : i32
    %c0_i32_1 = arith.constant 0 : i32
    return %arg0, %c0_i32, %c0_i32_0 : i32, i32, i32
  }
  func.func @transform_2(%arg0: i32) -> (i32, i32, i32) {
    %c0_i32 = arith.constant 0 : i32
    %c0_i32_0 = arith.constant 0 : i32
    %c0_i32_1 = arith.constant 0 : i32
    return %arg0, %c0_i32, %c0_i32_0 : i32, i32, i32
  }
  func.func @transform_3(%arg0: i32) -> (i32, i32) {
    %c0_i32 = arith.constant 0 : i32
    %c0_i32_0 = arith.constant 0 : i32
    %c0_i32_1 = arith.constant 0 : i32
    return %c0_i32, %c0_i32_0 : i32, i32
  }
  func.func @transform_4(%arg0: i32) -> (i32, i32, i32, i32) {
    %c0_i32 = arith.constant 0 : i32
    %c0_i32_0 = arith.constant 0 : i32
    %c0_i32_1 = arith.constant 0 : i32
    %c0_i32_2 = arith.constant 0 : i32
    return %arg0, %c0_i32, %c0_i32_0, %c0_i32_1 : i32, i32, i32, i32
  }
  func.func @transform_5(%arg0: i32) -> (i32, i32, i32) {
    %c0_i32 = arith.constant 0 : i32
    %c0_i32_0 = arith.constant 0 : i32
    %c0_i32_1 = arith.constant 0 : i32
    return %arg0, %c0_i32, %c0_i32_0 : i32, i32, i32
  }
}

module attributes {stable_mosaic.version = 11 : i64} {
  func.func @_fused_mm_kernel(%arg0: i32, %arg1: i32, %arg2: i32, %arg3: memref<16x128xbf16, #tpu.memory_space<vmem>>, %arg4: memref<128x128xbf16, #tpu.memory_space<vmem>>, %arg5: memref<1x128xf32, #tpu.memory_space<vmem>>, %arg6: memref<16x128xbf16, #tpu.memory_space<vmem>>, %arg7: memref<16x128xbf16, #tpu.memory_space<vmem>>, %arg8: memref<16x128xf32, #tpu.memory_space<vmem>>) attributes {dimension_semantics = [#tpu.dimension_semantics<parallel>, #tpu.dimension_semantics<parallel>, #tpu.dimension_semantics<arbitrary>], iteration_bounds = array<i64: 1, 1, 1>, scalar_prefetch = 0 : i64, scratch_operands = 1 : i64, tpu.core_type = #tpu.core_type<tc>, window_params = [{transform_indices = @transform_0, window_bounds = array<i64: 16, 128>}, {transform_indices = @transform_1, window_bounds = array<i64: 128, 128>}, {transform_indices = @transform_2, window_bounds = array<i64: 1, 128>}, {transform_indices = @transform_3, window_bounds = array<i64: 16, 128>}, {transform_indices = @transform_4, window_bounds = array<i64: 16, 128>}]} {
    %c0_i32 = arith.constant 0 : i32
    %0 = arith.cmpi eq, %arg2, %c0_i32 : i32
    %1 = arith.extui %0 : i1 to i32
    %c0_i32_0 = arith.constant 0 : i32
    %2 = arith.cmpi ne, %1, %c0_i32_0 : i32
    scf.if %2 {
      %cst_10 = arith.constant 0.000000e+00 : f32
      %12 = vector.broadcast %cst_10 : f32 to vector<16x128xf32>
      %c0_11 = arith.constant 0 : index
      %c0_12 = arith.constant 0 : index
      %13 = vector.load %arg8[%c0_11, %c0_12] : memref<16x128xf32, #tpu.memory_space<vmem>>, vector<16x128xf32>
      tpu.vector_store %arg8[%c0_11, %c0_12], %12 {strides = array<i32>} : memref<16x128xf32, #tpu.memory_space<vmem>>, vector<16x128xf32>,
    } else {
    }
    %c0 = arith.constant 0 : index
    %c0_1 = arith.constant 0 : index
    %3 = vector.load %arg3[%c0, %c0_1] : memref<16x128xbf16, #tpu.memory_space<vmem>>, vector<16x128xbf16>
    %c0_2 = arith.constant 0 : index
    %c0_3 = arith.constant 0 : index
    %4 = vector.load %arg8[%c0_2, %c0_3] : memref<16x128xf32, #tpu.memory_space<vmem>>, vector<16x128xf32>
    %c0_4 = arith.constant 0 : index
    %c0_5 = arith.constant 0 : index
    %5 = vector.load %arg4[%c0_4, %c0_5] : memref<128x128xbf16, #tpu.memory_space<vmem>>, vector<128x128xbf16>
    %cst = arith.constant dense<0.000000e+00> : vector<16x128xf32>
    %6 = tpu.matmul %3, %5, %cst {dimension_numbers = #tpu.dot_dimension_numbers<[1], [0], [0], [1], [0, 0, 1, 1], [], []>} : vector<16x128xbf16>, vector<128x128xbf16>, vector<16x128xf32> -> vector<16x128xf32>
    %7 = arith.addf %4, %6 : vector<16x128xf32>
    %c0_6 = arith.constant 0 : index
    %c0_7 = arith.constant 0 : index
    %8 = vector.load %arg8[%c0_6, %c0_7] : memref<16x128xf32, #tpu.memory_space<vmem>>, vector<16x128xf32>
    tpu.vector_store %arg8[%c0_6, %c0_7], %7 {strides = array<i32>} : memref<16x128xf32, #tpu.memory_space<vmem>>, vector<16x128xf32>,
    %c0_i32_8 = arith.constant 0 : i32
    %9 = arith.cmpi eq, %arg2, %c0_i32_8 : i32
    %10 = arith.extui %9 : i1 to i32
    %c0_i32_9 = arith.constant 0 : i32
    %11 = arith.cmpi ne, %10, %c0_i32_9 : i32
    scf.if %11 {
      %c0_10 = arith.constant 0 : index
      %c0_11 = arith.constant 0 : index
      %12 = vector.load %arg8[%c0_10, %c0_11] : memref<16x128xf32, #tpu.memory_space<vmem>>, vector<16x128xf32>
      %c0_12 = arith.constant 0 : index
      %c0_13 = arith.constant 0 : index
      %13 = vector.load %arg5[%c0_12, %c0_13] : memref<1x128xf32, #tpu.memory_space<vmem>>, vector<1x128xf32>
      %14 = vector.broadcast %13 : vector<1x128xf32> to vector<16x128xf32>
      %15 = arith.addf %12, %14 : vector<16x128xf32>
      %cst_14 = arith.constant 1.000000e+00 : f32
      %16 = vector.broadcast %cst_14 : f32 to vector<16x128xf32>
      %17 = arith.mulf %15, %16 : vector<16x128xf32>
      %c0_15 = arith.constant 0 : index
      %c0_16 = arith.constant 0 : index
      %18 = vector.load %arg6[%c0_15, %c0_16] : memref<16x128xbf16, #tpu.memory_space<vmem>>, vector<16x128xbf16>
      %19 = arith.extf %18 : vector<16x128xbf16> to vector<16x128xf32>
      %20 = arith.addf %17, %19 : vector<16x128xf32>
      %21 = arith.truncf %20 : vector<16x128xf32> to vector<16x128xbf16>
      %c0_17 = arith.constant 0 : index
      %c0_18 = arith.constant 0 : index
      %22 = vector.load %arg7[%c0_17, %c0_18] : memref<16x128xbf16, #tpu.memory_space<vmem>>, vector<16x128xbf16>
      tpu.vector_store %arg7[%c0_17, %c0_18], %21 {strides = array<i32>} : memref<16x128xbf16, #tpu.memory_space<vmem>>, vector<16x128xbf16>,
    } else {
    }
    return
  }
  func.func @transform_0(%arg0: i32, %arg1: i32, %arg2: i32) -> (i32, i32) {
    %c0_i32 = arith.constant 0 : i32
    return %arg0, %arg2 : i32, i32
  }
  func.func @transform_1(%arg0: i32, %arg1: i32, %arg2: i32) -> (i32, i32) {
    %c0_i32 = arith.constant 0 : i32
    return %arg2, %arg1 : i32, i32
  }
  func.func @transform_2(%arg0: i32, %arg1: i32, %arg2: i32) -> (i32, i32) {
    %c0_i32 = arith.constant 0 : i32
    %c0_i32_0 = arith.constant 0 : i32
    return %c0_i32, %arg1 : i32, i32
  }
  func.func @transform_3(%arg0: i32, %arg1: i32, %arg2: i32) -> (i32, i32) {
    %c0_i32 = arith.constant 0 : i32
    return %arg0, %arg1 : i32, i32
  }
  func.func @transform_4(%arg0: i32, %arg1: i32, %arg2: i32) -> (i32, i32) {
    %c0_i32 = arith.constant 0 : i32
    return %arg0, %arg1 : i32, i32
  }
}

module attributes {stable_mosaic.version = 11 : i64} {
  func.func @_fused_mm_kernel(%arg0: i32, %arg1: i32, %arg2: i32, %arg3: memref<16x128xbf16, #tpu.memory_space<vmem>>, %arg4: memref<128x128xbf16, #tpu.memory_space<vmem>>, %arg5: memref<1x128xf32, #tpu.memory_space<vmem>>, %arg6: memref<1x128xf32, #tpu.memory_space<vmem>>, %arg7: memref<1x128xf32, #tpu.memory_space<vmem>>, %arg8: memref<128x128xbf16, #tpu.memory_space<vmem>>, %arg9: memref<1x128xf32, #tpu.memory_space<vmem>>, %arg10: memref<16x128xbf16, #tpu.memory_space<vmem>>, %arg11: memref<16x128xf32, #tpu.memory_space<vmem>>) attributes {dimension_semantics = [#tpu.dimension_semantics<parallel>, #tpu.dimension_semantics<parallel>, #tpu.dimension_semantics<arbitrary>], iteration_bounds = array<i64: 1, 1, 1>, scalar_prefetch = 0 : i64, scratch_operands = 1 : i64, tpu.core_type = #tpu.core_type<tc>, window_params = [{transform_indices = @transform_0, window_bounds = array<i64: 16, 128>}, {transform_indices = @transform_1, window_bounds = array<i64: 128, 128>}, {transform_indices = @transform_2, window_bounds = array<i64: 1, 128>}, {transform_indices = @transform_3, window_bounds = array<i64: 1, 128>}, {transform_indices = @transform_4, window_bounds = array<i64: 1, 128>}, {transform_indices = @transform_5, window_bounds = array<i64: 128, 128>}, {transform_indices = @transform_6, window_bounds = array<i64: 1, 128>}, {transform_indices = @transform_7, window_bounds = array<i64: 16, 128>}]} {
    %c0_i32 = arith.constant 0 : i32
    %0 = arith.cmpi eq, %arg2, %c0_i32 : i32
    %1 = arith.extui %0 : i1 to i32
    %c0_i32_0 = arith.constant 0 : i32
    %2 = arith.cmpi ne, %1, %c0_i32_0 : i32
    scf.if %2 {
      %cst_20 = arith.constant 0.000000e+00 : f32
      %40 = vector.broadcast %cst_20 : f32 to vector<16x128xf32>
      %c0_21 = arith.constant 0 : index
      %c0_22 = arith.constant 0 : index
      %41 = vector.load %arg11[%c0_21, %c0_22] : memref<16x128xf32, #tpu.memory_space<vmem>>, vector<16x128xf32>
      tpu.vector_store %arg11[%c0_21, %c0_22], %40 {strides = array<i32>} : memref<16x128xf32, #tpu.memory_space<vmem>>, vector<16x128xf32>,
    } else {
    }
    %c0 = arith.constant 0 : index
    %c0_1 = arith.constant 0 : index
    %3 = vector.load %arg3[%c0, %c0_1] : memref<16x128xbf16, #tpu.memory_space<vmem>>, vector<16x128xbf16>
    %4 = arith.extf %3 : vector<16x128xbf16> to vector<16x128xf32>
    %cst = arith.constant dense<0.000000e+00> : vector<16xf32>
    %5 = vector.multi_reduction <add>, %4, %cst [1] : vector<16x128xf32> to vector<16xf32>
    %6 = vector.shape_cast %5 : vector<16xf32> to vector<16x1xf32>
    %cst_2 = arith.constant 3.125000e-02 : f32
    %7 = vector.broadcast %cst_2 : f32 to vector<16x1xf32>
    %8 = arith.mulf %6, %7 : vector<16x1xf32>
    %9 = arith.mulf %4, %4 : vector<16x128xf32>
    %cst_3 = arith.constant dense<0.000000e+00> : vector<16xf32>
    %10 = vector.multi_reduction <add>, %9, %cst_3 [1] : vector<16x128xf32> to vector<16xf32>
    %11 = vector.shape_cast %10 : vector<16xf32> to vector<16x1xf32>
    %cst_4 = arith.constant 3.125000e-02 : f32
    %12 = vector.broadcast %cst_4 : f32 to vector<16x1xf32>
    %13 = arith.mulf %11, %12 : vector<16x1xf32>
    %14 = arith.mulf %8, %8 : vector<16x1xf32>
    %15 = arith.subf %13, %14 : vector<16x1xf32>
    %cst_5 = arith.constant 0.000000e+00 : f32
    %16 = vector.broadcast %cst_5 : f32 to vector<16x1xf32>
    %17 = arith.maximumf %15, %16 : vector<16x1xf32>
    %18 = vector.broadcast %8 : vector<16x1xf32> to vector<16x128xf32>
    %19 = arith.subf %4, %18 : vector<16x128xf32>
    %cst_6 = arith.constant 9.99999974E-6 : f32
    %20 = vector.broadcast %cst_6 : f32 to vector<16x1xf32>
    %21 = arith.addf %17, %20 : vector<16x1xf32>
    %22 = math.rsqrt %21 : vector<16x1xf32>
    %23 = vector.broadcast %22 : vector<16x1xf32> to vector<16x128xf32>
    %24 = arith.mulf %19, %23 : vector<16x128xf32>
    %c0_7 = arith.constant 0 : index
    %c0_8 = arith.constant 0 : index
    %25 = vector.load %arg6[%c0_7, %c0_8] : memref<1x128xf32, #tpu.memory_space<vmem>>, vector<1x128xf32>
    %26 = vector.broadcast %25 : vector<1x128xf32> to vector<16x128xf32>
    %27 = arith.mulf %24, %26 : vector<16x128xf32>
    %c0_9 = arith.constant 0 : index
    %c0_10 = arith.constant 0 : index
    %28 = vector.load %arg7[%c0_9, %c0_10] : memref<1x128xf32, #tpu.memory_space<vmem>>, vector<1x128xf32>
    %29 = vector.broadcast %28 : vector<1x128xf32> to vector<16x128xf32>
    %30 = arith.addf %27, %29 : vector<16x128xf32>
    %31 = arith.truncf %30 : vector<16x128xf32> to vector<16x128xbf16>
    %c0_11 = arith.constant 0 : index
    %c0_12 = arith.constant 0 : index
    %32 = vector.load %arg11[%c0_11, %c0_12] : memref<16x128xf32, #tpu.memory_space<vmem>>, vector<16x128xf32>
    %c0_13 = arith.constant 0 : index
    %c0_14 = arith.constant 0 : index
    %33 = vector.load %arg4[%c0_13, %c0_14] : memref<128x128xbf16, #tpu.memory_space<vmem>>, vector<128x128xbf16>
    %cst_15 = arith.constant dense<0.000000e+00> : vector<16x128xf32>
    %34 = tpu.matmul %31, %33, %cst_15 {dimension_numbers = #tpu.dot_dimension_numbers<[1], [0], [0], [1], [0, 0, 1, 1], [], []>} : vector<16x128xbf16>, vector<128x128xbf16>, vector<16x128xf32> -> vector<16x128xf32>
    %35 = arith.addf %32, %34 : vector<16x128xf32>
    %c0_16 = arith.constant 0 : index
    %c0_17 = arith.constant 0 : index
    %36 = vector.load %arg11[%c0_16, %c0_17] : memref<16x128xf32, #tpu.memory_space<vmem>>, vector<16x128xf32>
    tpu.vector_store %arg11[%c0_16, %c0_17], %35 {strides = array<i32>} : memref<16x128xf32, #tpu.memory_space<vmem>>, vector<16x128xf32>,
    %c0_i32_18 = arith.constant 0 : i32
    %37 = arith.cmpi eq, %arg2, %c0_i32_18 : i32
    %38 = arith.extui %37 : i1 to i32
    %c0_i32_19 = arith.constant 0 : i32
    %39 = arith.cmpi ne, %38, %c0_i32_19 : i32
    scf.if %39 {
      %c0_20 = arith.constant 0 : index
      %c0_21 = arith.constant 0 : index
      %40 = vector.load %arg11[%c0_20, %c0_21] : memref<16x128xf32, #tpu.memory_space<vmem>>, vector<16x128xf32>
      %c0_22 = arith.constant 0 : index
      %c0_23 = arith.constant 0 : index
      %41 = vector.load %arg5[%c0_22, %c0_23] : memref<1x128xf32, #tpu.memory_space<vmem>>, vector<1x128xf32>
      %42 = vector.broadcast %41 : vector<1x128xf32> to vector<16x128xf32>
      %43 = arith.addf %40, %42 : vector<16x128xf32>
      %c0_24 = arith.constant 0 : index
      %c0_25 = arith.constant 0 : index
      %44 = vector.load %arg8[%c0_24, %c0_25] : memref<128x128xbf16, #tpu.memory_space<vmem>>, vector<128x128xbf16>
      %cst_26 = arith.constant dense<0.000000e+00> : vector<16x128xf32>
      %45 = tpu.matmul %31, %44, %cst_26 {dimension_numbers = #tpu.dot_dimension_numbers<[1], [0], [0], [1], [0, 0, 1, 1], [], []>} : vector<16x128xbf16>, vector<128x128xbf16>, vector<16x128xf32> -> vector<16x128xf32>
      %c0_27 = arith.constant 0 : index
      %c0_28 = arith.constant 0 : index
      %46 = vector.load %arg9[%c0_27, %c0_28] : memref<1x128xf32, #tpu.memory_space<vmem>>, vector<1x128xf32>
      %47 = vector.broadcast %46 : vector<1x128xf32> to vector<16x128xf32>
      %48 = arith.addf %45, %47 : vector<16x128xf32>
      %49 = arith.negf %48 : vector<16x128xf32>
      %50 = math.exp %49 : vector<16x128xf32>
      %cst_29 = arith.constant 1.000000e+00 : f32
      %51 = vector.broadcast %cst_29 : f32 to vector<16x128xf32>
      %52 = arith.addf %51, %50 : vector<16x128xf32>
      %53 = arith.divf %51, %52 : vector<16x128xf32>
      %54 = arith.mulf %43, %53 : vector<16x128xf32>
      %55 = arith.truncf %54 : vector<16x128xf32> to vector<16x128xbf16>
      %c0_30 = arith.constant 0 : index
      %c0_31 = arith.constant 0 : index
      %56 = vector.load %arg10[%c0_30, %c0_31] : memref<16x128xbf16, #tpu.memory_space<vmem>>, vector<16x128xbf16>
      tpu.vector_store %arg10[%c0_30, %c0_31], %55 {strides = array<i32>} : memref<16x128xbf16, #tpu.memory_space<vmem>>, vector<16x128xbf16>,
    } else {
    }
    return
  }
  func.func @transform_0(%arg0: i32, %arg1: i32, %arg2: i32) -> (i32, i32) {
    %c0_i32 = arith.constant 0 : i32
    return %arg0, %arg2 : i32, i32
  }
  func.func @transform_1(%arg0: i32, %arg1: i32, %arg2: i32) -> (i32, i32) {
    %c0_i32 = arith.constant 0 : i32
    return %arg2, %arg1 : i32, i32
  }
  func.func @transform_2(%arg0: i32, %arg1: i32, %arg2: i32) -> (i32, i32) {
    %c0_i32 = arith.constant 0 : i32
    %c0_i32_0 = arith.constant 0 : i32
    return %c0_i32, %arg1 : i32, i32
  }
  func.func @transform_3(%arg0: i32, %arg1: i32, %arg2: i32) -> (i32, i32) {
    %c0_i32 = arith.constant 0 : i32
    %c0_i32_0 = arith.constant 0 : i32
    return %c0_i32, %arg2 : i32, i32
  }
  func.func @transform_4(%arg0: i32, %arg1: i32, %arg2: i32) -> (i32, i32) {
    %c0_i32 = arith.constant 0 : i32
    %c0_i32_0 = arith.constant 0 : i32
    return %c0_i32, %arg2 : i32, i32
  }
  func.func @transform_5(%arg0: i32, %arg1: i32, %arg2: i32) -> (i32, i32) {
    %c0_i32 = arith.constant 0 : i32
    return %arg2, %arg1 : i32, i32
  }
  func.func @transform_6(%arg0: i32, %arg1: i32, %arg2: i32) -> (i32, i32) {
    %c0_i32 = arith.constant 0 : i32
    %c0_i32_0 = arith.constant 0 : i32
    return %c0_i32, %arg1 : i32, i32
  }
  func.func @transform_7(%arg0: i32, %arg1: i32, %arg2: i32) -> (i32, i32) {
    %c0_i32 = arith.constant 0 : i32
    return %arg0, %arg1 : i32, i32
  }
}

module attributes {stable_mosaic.version = 11 : i64} {
  func.func @_fused_mm_kernel(%arg0: i32, %arg1: i32, %arg2: i32, %arg3: memref<16x128xbf16, #tpu.memory_space<vmem>>, %arg4: memref<128x128xbf16, #tpu.memory_space<vmem>>, %arg5: memref<1x128xf32, #tpu.memory_space<vmem>>, %arg6: memref<16x128xbf16, #tpu.memory_space<vmem>>, %arg7: memref<1x128xf32, #tpu.memory_space<vmem>>, %arg8: memref<1x128xf32, #tpu.memory_space<vmem>>, %arg9: memref<16x128xbf16, #tpu.memory_space<vmem>>, %arg10: memref<16x128xf32, #tpu.memory_space<vmem>>) attributes {dimension_semantics = [#tpu.dimension_semantics<parallel>, #tpu.dimension_semantics<parallel>, #tpu.dimension_semantics<arbitrary>], iteration_bounds = array<i64: 1, 1, 1>, scalar_prefetch = 0 : i64, scratch_operands = 1 : i64, tpu.core_type = #tpu.core_type<tc>, window_params = [{transform_indices = @transform_0, window_bounds = array<i64: 16, 128>}, {transform_indices = @transform_1, window_bounds = array<i64: 128, 128>}, {transform_indices = @transform_2, window_bounds = array<i64: 1, 128>}, {transform_indices = @transform_3, window_bounds = array<i64: 16, 128>}, {transform_indices = @transform_4, window_bounds = array<i64: 1, 128>}, {transform_indices = @transform_5, window_bounds = array<i64: 1, 128>}, {transform_indices = @transform_6, window_bounds = array<i64: 16, 128>}]} {
    %c0_i32 = arith.constant 0 : i32
    %0 = arith.cmpi eq, %arg2, %c0_i32 : i32
    %1 = arith.extui %0 : i1 to i32
    %c0_i32_0 = arith.constant 0 : i32
    %2 = arith.cmpi ne, %1, %c0_i32_0 : i32
    scf.if %2 {
      %cst_10 = arith.constant 0.000000e+00 : f32
      %12 = vector.broadcast %cst_10 : f32 to vector<16x128xf32>
      %c0_11 = arith.constant 0 : index
      %c0_12 = arith.constant 0 : index
      %13 = vector.load %arg10[%c0_11, %c0_12] : memref<16x128xf32, #tpu.memory_space<vmem>>, vector<16x128xf32>
      tpu.vector_store %arg10[%c0_11, %c0_12], %12 {strides = array<i32>} : memref<16x128xf32, #tpu.memory_space<vmem>>, vector<16x128xf32>,
    } else {
    }
    %c0 = arith.constant 0 : index
    %c0_1 = arith.constant 0 : index
    %3 = vector.load %arg3[%c0, %c0_1] : memref<16x128xbf16, #tpu.memory_space<vmem>>, vector<16x128xbf16>
    %c0_2 = arith.constant 0 : index
    %c0_3 = arith.constant 0 : index
    %4 = vector.load %arg10[%c0_2, %c0_3] : memref<16x128xf32, #tpu.memory_space<vmem>>, vector<16x128xf32>
    %c0_4 = arith.constant 0 : index
    %c0_5 = arith.constant 0 : index
    %5 = vector.load %arg4[%c0_4, %c0_5] : memref<128x128xbf16, #tpu.memory_space<vmem>>, vector<128x128xbf16>
    %cst = arith.constant dense<0.000000e+00> : vector<16x128xf32>
    %6 = tpu.matmul %3, %5, %cst {dimension_numbers = #tpu.dot_dimension_numbers<[1], [0], [0], [1], [0, 0, 1, 1], [], []>} : vector<16x128xbf16>, vector<128x128xbf16>, vector<16x128xf32> -> vector<16x128xf32>
    %7 = arith.addf %4, %6 : vector<16x128xf32>
    %c0_6 = arith.constant 0 : index
    %c0_7 = arith.constant 0 : index
    %8 = vector.load %arg10[%c0_6, %c0_7] : memref<16x128xf32, #tpu.memory_space<vmem>>, vector<16x128xf32>
    tpu.vector_store %arg10[%c0_6, %c0_7], %7 {strides = array<i32>} : memref<16x128xf32, #tpu.memory_space<vmem>>, vector<16x128xf32>,
    %c0_i32_8 = arith.constant 0 : i32
    %9 = arith.cmpi eq, %arg2, %c0_i32_8 : i32
    %10 = arith.extui %9 : i1 to i32
    %c0_i32_9 = arith.constant 0 : i32
    %11 = arith.cmpi ne, %10, %c0_i32_9 : i32
    scf.if %11 {
      %c0_10 = arith.constant 0 : index
      %c0_11 = arith.constant 0 : index
      %12 = vector.load %arg10[%c0_10, %c0_11] : memref<16x128xf32, #tpu.memory_space<vmem>>, vector<16x128xf32>
      %c0_12 = arith.constant 0 : index
      %c0_13 = arith.constant 0 : index
      %13 = vector.load %arg5[%c0_12, %c0_13] : memref<1x128xf32, #tpu.memory_space<vmem>>, vector<1x128xf32>
      %14 = vector.broadcast %13 : vector<1x128xf32> to vector<16x128xf32>
      %15 = arith.addf %12, %14 : vector<16x128xf32>
      %cst_14 = arith.constant 5.000000e-01 : f32
      %16 = vector.broadcast %cst_14 : f32 to vector<16x128xf32>
      %17 = arith.mulf %15, %16 : vector<16x128xf32>
      %c0_15 = arith.constant 0 : index
      %c0_16 = arith.constant 0 : index
      %18 = vector.load %arg6[%c0_15, %c0_16] : memref<16x128xbf16, #tpu.memory_space<vmem>>, vector<16x128xbf16>
      %19 = arith.extf %18 : vector<16x128xbf16> to vector<16x128xf32>
      %20 = arith.addf %17, %19 : vector<16x128xf32>
      %cst_17 = arith.constant dense<0.000000e+00> : vector<16xf32>
      %21 = vector.multi_reduction <add>, %20, %cst_17 [1] : vector<16x128xf32> to vector<16xf32>
      %22 = vector.shape_cast %21 : vector<16xf32> to vector<16x1xf32>
      %cst_18 = arith.constant 3.125000e-02 : f32
      %23 = vector.broadcast %cst_18 : f32 to vector<16x1xf32>
      %24 = arith.mulf %22, %23 : vector<16x1xf32>
      %25 = arith.mulf %20, %20 : vector<16x128xf32>
      %cst_19 = arith.constant dense<0.000000e+00> : vector<16xf32>
      %26 = vector.multi_reduction <add>, %25, %cst_19 [1] : vector<16x128xf32> to vector<16xf32>
      %27 = vector.shape_cast %26 : vector<16xf32> to vector<16x1xf32>
      %cst_20 = arith.constant 3.125000e-02 : f32
      %28 = vector.broadcast %cst_20 : f32 to vector<16x1xf32>
      %29 = arith.mulf %27, %28 : vector<16x1xf32>
      %30 = arith.mulf %24, %24 : vector<16x1xf32>
      %31 = arith.subf %29, %30 : vector<16x1xf32>
      %cst_21 = arith.constant 0.000000e+00 : f32
      %32 = vector.broadcast %cst_21 : f32 to vector<16x1xf32>
      %33 = arith.maximumf %31, %32 : vector<16x1xf32>
      %34 = vector.broadcast %24 : vector<16x1xf32> to vector<16x128xf32>
      %35 = arith.subf %20, %34 : vector<16x128xf32>
      %cst_22 = arith.constant 9.99999974E-6 : f32
      %36 = vector.broadcast %cst_22 : f32 to vector<16x1xf32>
      %37 = arith.addf %33, %36 : vector<16x1xf32>
      %38 = math.rsqrt %37 : vector<16x1xf32>
      %39 = vector.broadcast %38 : vector<16x1xf32> to vector<16x128xf32>
      %40 = arith.mulf %35, %39 : vector<16x128xf32>
      %c0_23 = arith.constant 0 : index
      %c0_24 = arith.constant 0 : index
      %41 = vector.load %arg7[%c0_23, %c0_24] : memref<1x128xf32, #tpu.memory_space<vmem>>, vector<1x128xf32>
      %42 = vector.broadcast %41 : vector<1x128xf32> to vector<16x128xf32>
      %43 = arith.mulf %40, %42 : vector<16x128xf32>
      %c0_25 = arith.constant 0 : index
      %c0_26 = arith.constant 0 : index
      %44 = vector.load %arg8[%c0_25, %c0_26] : memref<1x128xf32, #tpu.memory_space<vmem>>, vector<1x128xf32>
      %45 = vector.broadcast %44 : vector<1x128xf32> to vector<16x128xf32>
      %46 = arith.addf %43, %45 : vector<16x128xf32>
      %47 = arith.truncf %46 : vector<16x128xf32> to vector<16x128xbf16>
      %c0_27 = arith.constant 0 : index
      %c0_28 = arith.constant 0 : index
      %48 = vector.load %arg9[%c0_27, %c0_28] : memref<16x128xbf16, #tpu.memory_space<vmem>>, vector<16x128xbf16>
      tpu.vector_store %arg9[%c0_27, %c0_28], %47 {strides = array<i32>} : memref<16x128xbf16, #tpu.memory_space<vmem>>, vector<16x128xbf16>,
    } else {
    }
    return
  }
  func.func @transform_0(%arg0: i32, %arg1: i32, %arg2: i32) -> (i32, i32) {
    %c0_i32 = arith.constant 0 : i32
    return %arg0, %arg2 : i32, i32
  }
  func.func @transform_1(%arg0: i32, %arg1: i32, %arg2: i32) -> (i32, i32) {
    %c0_i32 = arith.constant 0 : i32
    return %arg2, %arg1 : i32, i32
  }
  func.func @transform_2(%arg0: i32, %arg1: i32, %arg2: i32) -> (i32, i32) {
    %c0_i32 = arith.constant 0 : i32
    %c0_i32_0 = arith.constant 0 : i32
    return %c0_i32, %arg1 : i32, i32
  }
  func.func @transform_3(%arg0: i32, %arg1: i32, %arg2: i32) -> (i32, i32) {
    %c0_i32 = arith.constant 0 : i32
    return %arg0, %arg1 : i32, i32
  }
  func.func @transform_4(%arg0: i32, %arg1: i32, %arg2: i32) -> (i32, i32) {
    %c0_i32 = arith.constant 0 : i32
    %c0_i32_0 = arith.constant 0 : i32
    return %c0_i32, %arg1 : i32, i32
  }
  func.func @transform_5(%arg0: i32, %arg1: i32, %arg2: i32) -> (i32, i32) {
    %c0_i32 = arith.constant 0 : i32
    %c0_i32_0 = arith.constant 0 : i32
    return %c0_i32, %arg1 : i32, i32
  }
  func.func @transform_6(%arg0: i32, %arg1: i32, %arg2: i32) -> (i32, i32) {
    %c0_i32 = arith.constant 0 : i32
    return %arg0, %arg1 : i32, i32
  }
}

module attributes {stable_mosaic.version = 11 : i64} {
  func.func @_dwconv_kernel(%arg0: i32, %arg1: memref<1x13x32xbf16, #tpu.memory_space<vmem>>, %arg2: memref<7x32xf32, #tpu.memory_space<vmem>>, %arg3: memref<1x32xf32, #tpu.memory_space<vmem>>, %arg4: memref<1x32xf32, #tpu.memory_space<vmem>>, %arg5: memref<1x32xf32, #tpu.memory_space<vmem>>, %arg6: memref<1x7x32xbf16, #tpu.memory_space<vmem>>) attributes {dimension_semantics = [#tpu.dimension_semantics<parallel>], iteration_bounds = array<i64: 2>, scalar_prefetch = 0 : i64, scratch_operands = 0 : i64, tpu.core_type = #tpu.core_type<tc>, window_params = [{transform_indices = @transform_0, window_bounds = array<i64: 1, 13, 32>}, {pipeline_mode = #tpu.pipeline_mode<synchronous>, transform_indices = @transform_1, window_bounds = array<i64: 7, 32>}, {pipeline_mode = #tpu.pipeline_mode<synchronous>, transform_indices = @transform_2, window_bounds = array<i64: 1, 32>}, {pipeline_mode = #tpu.pipeline_mode<synchronous>, transform_indices = @transform_3, window_bounds = array<i64: 1, 32>}, {pipeline_mode = #tpu.pipeline_mode<synchronous>, transform_indices = @transform_4, window_bounds = array<i64: 1, 32>}, {transform_indices = @transform_5, window_bounds = array<i64: 1, 7, 32>}]} {
    %c0 = arith.constant 0 : index
    %c0_0 = arith.constant 0 : index
    %c0_1 = arith.constant 0 : index
    %0 = vector.load %arg1[%c0, %c0_0, %c0_1] : memref<1x13x32xbf16, #tpu.memory_space<vmem>>, vector<1x13x32xbf16>
    %1 = vector.shape_cast %0 : vector<1x13x32xbf16> to vector<13x32xbf16>
    %2 = arith.extf %1 : vector<13x32xbf16> to vector<13x32xf32>
    %c0_2 = arith.constant 0 : index
    %c0_3 = arith.constant 0 : index
    %3 = vector.load %arg2[%c0_2, %c0_3] : memref<7x32xf32, #tpu.memory_space<vmem>>, vector<7x32xf32>
    %cst = arith.constant 0.000000e+00 : f32
    %4 = vector.broadcast %cst : f32 to vector<7x32xf32>
    %5 = vector.extract_strided_slice %2 {offsets = [0, 0], sizes = [7, 32], strides = [1, 1]} : vector<13x32xf32> to vector<7x32xf32>
    %6 = vector.extract_strided_slice %3 {offsets = [0, 0], sizes = [1, 32], strides = [1, 1]} : vector<7x32xf32> to vector<1x32xf32>
    %7 = vector.broadcast %6 : vector<1x32xf32> to vector<7x32xf32>
    %8 = arith.mulf %5, %7 : vector<7x32xf32>
    %9 = arith.addf %4, %8 : vector<7x32xf32>
    %10 = vector.extract_strided_slice %2 {offsets = [1, 0], sizes = [7, 32], strides = [1, 1]} : vector<13x32xf32> to vector<7x32xf32>
    %11 = vector.extract_strided_slice %3 {offsets = [1, 0], sizes = [1, 32], strides = [1, 1]} : vector<7x32xf32> to vector<1x32xf32>
    %12 = vector.broadcast %11 : vector<1x32xf32> to vector<7x32xf32>
    %13 = arith.mulf %10, %12 : vector<7x32xf32>
    %14 = arith.addf %9, %13 : vector<7x32xf32>
    %15 = vector.extract_strided_slice %2 {offsets = [2, 0], sizes = [7, 32], strides = [1, 1]} : vector<13x32xf32> to vector<7x32xf32>
    %16 = vector.extract_strided_slice %3 {offsets = [2, 0], sizes = [1, 32], strides = [1, 1]} : vector<7x32xf32> to vector<1x32xf32>
    %17 = vector.broadcast %16 : vector<1x32xf32> to vector<7x32xf32>
    %18 = arith.mulf %15, %17 : vector<7x32xf32>
    %19 = arith.addf %14, %18 : vector<7x32xf32>
    %20 = vector.extract_strided_slice %2 {offsets = [3, 0], sizes = [7, 32], strides = [1, 1]} : vector<13x32xf32> to vector<7x32xf32>
    %21 = vector.extract_strided_slice %3 {offsets = [3, 0], sizes = [1, 32], strides = [1, 1]} : vector<7x32xf32> to vector<1x32xf32>
    %22 = vector.broadcast %21 : vector<1x32xf32> to vector<7x32xf32>
    %23 = arith.mulf %20, %22 : vector<7x32xf32>
    %24 = arith.addf %19, %23 : vector<7x32xf32>
    %25 = vector.extract_strided_slice %2 {offsets = [4, 0], sizes = [7, 32], strides = [1, 1]} : vector<13x32xf32> to vector<7x32xf32>
    %26 = vector.extract_strided_slice %3 {offsets = [4, 0], sizes = [1, 32], strides = [1, 1]} : vector<7x32xf32> to vector<1x32xf32>
    %27 = vector.broadcast %26 : vector<1x32xf32> to vector<7x32xf32>
    %28 = arith.mulf %25, %27 : vector<7x32xf32>
    %29 = arith.addf %24, %28 : vector<7x32xf32>
    %30 = vector.extract_strided_slice %2 {offsets = [5, 0], sizes = [7, 32], strides = [1, 1]} : vector<13x32xf32> to vector<7x32xf32>
    %31 = vector.extract_strided_slice %3 {offsets = [5, 0], sizes = [1, 32], strides = [1, 1]} : vector<7x32xf32> to vector<1x32xf32>
    %32 = vector.broadcast %31 : vector<1x32xf32> to vector<7x32xf32>
    %33 = arith.mulf %30, %32 : vector<7x32xf32>
    %34 = arith.addf %29, %33 : vector<7x32xf32>
    %35 = vector.extract_strided_slice %2 {offsets = [6, 0], sizes = [7, 32], strides = [1, 1]} : vector<13x32xf32> to vector<7x32xf32>
    %36 = vector.extract_strided_slice %3 {offsets = [6, 0], sizes = [1, 32], strides = [1, 1]} : vector<7x32xf32> to vector<1x32xf32>
    %37 = vector.broadcast %36 : vector<1x32xf32> to vector<7x32xf32>
    %38 = arith.mulf %35, %37 : vector<7x32xf32>
    %39 = arith.addf %34, %38 : vector<7x32xf32>
    %c0_4 = arith.constant 0 : index
    %c0_5 = arith.constant 0 : index
    %40 = vector.load %arg3[%c0_4, %c0_5] : memref<1x32xf32, #tpu.memory_space<vmem>>, vector<1x32xf32>
    %41 = vector.broadcast %40 : vector<1x32xf32> to vector<7x32xf32>
    %42 = arith.addf %39, %41 : vector<7x32xf32>
    %c0_6 = arith.constant 0 : index
    %c0_7 = arith.constant 0 : index
    %43 = vector.load %arg4[%c0_6, %c0_7] : memref<1x32xf32, #tpu.memory_space<vmem>>, vector<1x32xf32>
    %44 = vector.broadcast %43 : vector<1x32xf32> to vector<7x32xf32>
    %45 = arith.mulf %42, %44 : vector<7x32xf32>
    %c0_8 = arith.constant 0 : index
    %c0_9 = arith.constant 0 : index
    %46 = vector.load %arg5[%c0_8, %c0_9] : memref<1x32xf32, #tpu.memory_space<vmem>>, vector<1x32xf32>
    %47 = vector.broadcast %46 : vector<1x32xf32> to vector<7x32xf32>
    %48 = arith.addf %45, %47 : vector<7x32xf32>
    %49 = arith.negf %48 : vector<7x32xf32>
    %50 = math.exp %49 : vector<7x32xf32>
    %cst_10 = arith.constant 1.000000e+00 : f32
    %51 = vector.broadcast %cst_10 : f32 to vector<7x32xf32>
    %52 = arith.addf %51, %50 : vector<7x32xf32>
    %53 = arith.divf %51, %52 : vector<7x32xf32>
    %54 = arith.mulf %48, %53 : vector<7x32xf32>
    %55 = arith.truncf %54 : vector<7x32xf32> to vector<7x32xbf16>
    %c0_11 = arith.constant 0 : index
    %c0_12 = arith.constant 0 : index
    %c0_13 = arith.constant 0 : index
    %56 = vector.load %arg6[%c0_11, %c0_12, %c0_13] : memref<1x7x32xbf16, #tpu.memory_space<vmem>>, vector<1x7x32xbf16>
    %57 = vector.shape_cast %56 : vector<1x7x32xbf16> to vector<7x32xbf16>
    %58 = vector.shape_cast %55 : vector<7x32xbf16> to vector<1x7x32xbf16>
    tpu.vector_store %arg6[%c0_11, %c0_12, %c0_13], %58 {strides = array<i32>} : memref<1x7x32xbf16, #tpu.memory_space<vmem>>, vector<1x7x32xbf16>,
    return
  }
  func.func @transform_0(%arg0: i32) -> (i32, i32, i32) {
    %c0_i32 = arith.constant 0 : i32
    %c0_i32_0 = arith.constant 0 : i32
    %c0_i32_1 = arith.constant 0 : i32
    return %arg0, %c0_i32, %c0_i32_0 : i32, i32, i32
  }
  func.func @transform_1(%arg0: i32) -> (i32, i32) {
    %c0_i32 = arith.constant 0 : i32
    %c0_i32_0 = arith.constant 0 : i32
    %c0_i32_1 = arith.constant 0 : i32
    return %c0_i32, %c0_i32_0 : i32, i32
  }
  func.func @transform_2(%arg0: i32) -> (i32, i32) {
    %c0_i32 = arith.constant 0 : i32
    %c0_i32_0 = arith.constant 0 : i32
    %c0_i32_1 = arith.constant 0 : i32
    return %c0_i32, %c0_i32_0 : i32, i32
  }
  func.func @transform_3(%arg0: i32) -> (i32, i32) {
    %c0_i32 = arith.constant 0 : i32
    %c0_i32_0 = arith.constant 0 : i32
    %c0_i32_1 = arith.constant 0 : i32
    return %c0_i32, %c0_i32_0 : i32, i32
  }
  func.func @transform_4(%arg0: i32) -> (i32, i32) {
    %c0_i32 = arith.constant 0 : i32
    %c0_i32_0 = arith.constant 0 : i32
    %c0_i32_1 = arith.constant 0 : i32
    return %c0_i32, %c0_i32_0 : i32, i32
  }
  func.func @transform_5(%arg0: i32) -> (i32, i32, i32) {
    %c0_i32 = arith.constant 0 : i32
    %c0_i32_0 = arith.constant 0 : i32
    %c0_i32_1 = arith.constant 0 : i32
    return %arg0, %c0_i32, %c0_i32_0 : i32, i32, i32
  }
}

</mosaic_0001>

<llo_original>
// kernel: conformer_encoder.25
$region0: #{conformer_encoder.25}
  #allocation0 [shape = 'u32[]', space=smem, size = 0x4, offset = 0x4, fixed_abs, tag = 'smem constant byte address 0x4 - core index']
  #allocation1 [shape = 'u32[144,128]{1,0:T(1,128)}', space=vmem, size = 0x12000, scoped, tag = 'internal scratch']
  #allocation2 [shape = 'f32[128,128]{1,0:T(8,128)}', space=vmem, size = 0x10000, scoped, tag = 'scratch operand']
  %s0 = inlined_call_operand.vmem [shape: bf16[256,128], index: 0, kind: input, shape index: {}]
  %s1 = inlined_call_operand.vmem [shape: bf16[128,128], index: 1, kind: input, shape index: {}]
  %s2 = inlined_call_operand.vmem [shape: f32[1,128], index: 2, kind: input, shape index: {}]
  %s3 = inlined_call_operand.vmem [shape: bf16[256,128], index: 3, kind: output, shape index: {}]
  %s4 = sld [smem:[#allocation0]]
  $region53: #{conformer_encoder.25} parent=0
    _
  %s6 = ssub.s32 1, %s4
  %s7 = scalar_select 0, %s6, %s4
  loop: start=0, step=1, limit=4
  $region2: #{conformer_encoder.25} parent=0 // loop_pre_header
    _
  $region3: #{conformer_encoder.25} parent=0 // loop_header
    %s9 = sphi 0, %s13
    %p10 = scmp.ge.s32.totalorder %s9, 4
    %s16 = sphi 0, %s35
    %s17 = sphi 0, %s31
    %s18 = sphi 0, %s27
    %s19 = sphi 0, %s16
    %s20 = sphi 0, %s17
    %s21 = sphi 0, %s18
    %s22 = sphi 0, %s19
    %s23 = sphi 0, %s20
    %s24 = sphi 0, %s21
    %s40 = sphi 0, %s42
    %s43 = sphi 0, %s40
    %s44 = sphi 0, %s43
    %s60 = sphi 0, %s44
    %s68 = sphi 0, %s70
    %s71 = sphi 0, %s68
    %s72 = sphi 0, %s71
    %s88 = sphi 0, %s72
    %s94 = sphi 0, %s96
    %s97 = sphi 0, %s94
    %s98 = sphi 0, %s97
    %s114 = sphi 0, %s98
    %s122 = sphi 0, %s124
    %s125 = sphi 0, %s122
    %s126 = sphi 0, %s125
    %s142 = sphi 0, %s126
  $region4: #{conformer_encoder.25} parent=0 // loop_header_branch
    %12 = sbr.rel (%p10) target = $region8
  $region5: #{conformer_encoder.25} parent=0 // loop_body
    %s14 = ssub.s32 %s9, 1
    %s15 = ssub.s32 %s9, 2
    %s25 = sadd.s32 1, %s18
    %p26 = scmp.ge.s32.totalorder %s25, 1
    %s27 = scalar_select %p26, 0, %s25
    %s28 = sadd.s32 1, %s17
    %s29 = scalar_select %p26, %s28, %s17
    %p30 = scmp.ge.s32.totalorder %s29, 1
    %s31 = scalar_select %p30, 0, %s29
    %s32 = sadd.s32 1, %s16
    %s33 = scalar_select %p30, %s32, %s16
    %p34 = scmp.ge.s32.totalorder %s33, 2
    %s35 = scalar_select %p34, 0, %s33
    %s36 = ssub.s32 %s16, %s35
    %s37 = ssub.s32 %s18, %s27
    %s38 = sor.u32 %s36, %s37
    %p39 = scmp.eq.s32.totalorder %s38, 0
    %s41 = sadd.s32 %s40, 1
    %s42 = scalar_select %p39, %s40, %s41
    %p45 = pneg %p39
    %p46 = scmp.eq.s32.totalorder %s9, 1
    %p47 = por %p45, %p46
    %p48 = scmp.ne.s32.totalorder %s40, %s43
    %p49 = scmp.eq.s32.totalorder %s9, 0
    %p50 = por %p48, %p49
    %p51 = scmp.ne.s32.totalorder %s40, %s43
    %p52 = scmp.eq.s32.totalorder %s14, 1
    %p53 = por %p51, %p52
    %p54 = scmp.ne.s32.totalorder %s43, %s44
    %p55 = scmp.eq.s32.totalorder %s14, 0
    %p56 = por %p54, %p55
    %p57 = scmp.ne.s32.totalorder %s43, %s44
    %p58 = scmp.eq.s32.totalorder %s15, 1
    %p59 = por %p57, %p58
    %p61 = scmp.ne.s32.totalorder %s44, %s60
    %p62 = scmp.eq.s32.totalorder %s15, 0
    %p63 = por %p61, %p62
    %s64 = ssub.s32 %s18, %s27
    %s65 = ssub.s32 %s17, %s31
    %s66 = sor.u32 %s64, %s65
    %p67 = scmp.eq.s32.totalorder %s66, 0
    %s69 = sadd.s32 %s68, 1
    %s70 = scalar_select %p67, %s68, %s69
    %p73 = pneg %p67
    %p74 = scmp.eq.s32.totalorder %s9, 1
    %p75 = por %p73, %p74
    %p76 = scmp.ne.s32.totalorder %s68, %s71
    %p77 = scmp.eq.s32.totalorder %s9, 0
    %p78 = por %p76, %p77
    %p79 = scmp.ne.s32.totalorder %s68, %s71
    %p80 = scmp.eq.s32.totalorder %s14, 1
    %p81 = por %p79, %p80
    %p82 = scmp.ne.s32.totalorder %s71, %s72
    %p83 = scmp.eq.s32.totalorder %s14, 0
    %p84 = por %p82, %p83
    %p85 = scmp.ne.s32.totalorder %s71, %s72
    %p86 = scmp.eq.s32.totalorder %s15, 1
    %p87 = por %p85, %p86
    %p89 = scmp.ne.s32.totalorder %s72, %s88
    %p90 = scmp.eq.s32.totalorder %s15, 0
    %p91 = por %p89, %p90
    %s92 = ssub.s32 %s17, %s31
    %p93 = scmp.eq.s32.totalorder %s92, 0
    %s95 = sadd.s32 %s94, 1
    %s96 = scalar_select %p93, %s94, %s95
    %p99 = pneg %p93
    %p100 = scmp.eq.s32.totalorder %s9, 1
    %p101 = por %p99, %p100
    %p102 = scmp.ne.s32.totalorder %s94, %s97
    %p103 = scmp.eq.s32.totalorder %s9, 0
    %p104 = por %p102, %p103
    %p105 = scmp.ne.s32.totalorder %s94, %s97
    %p106 = scmp.eq.s32.totalorder %s14, 1
    %p107 = por %p105, %p106
    %p108 = scmp.ne.s32.totalorder %s97, %s98
    %p109 = scmp.eq.s32.totalorder %s14, 0
    %p110 = por %p108, %p109
    %p111 = scmp.ne.s32.totalorder %s97, %s98
    %p112 = scmp.eq.s32.totalorder %s15, 1
    %p113 = por %p111, %p112
    %p115 = scmp.ne.s32.totalorder %s98, %s114
    %p116 = scmp.eq.s32.totalorder %s15, 0
    %p117 = por %p115, %p116
    %s118 = ssub.s32 %s16, %s35
    %s119 = ssub.s32 %s17, %s31
    %s120 = sor.u32 %s118, %s119
    %p121 = scmp.eq.s32.totalorder %s120, 0
    %s123 = sadd.s32 %s122, 1
    %s124 = scalar_select %p121, %s122, %s123
    %p127 = pneg %p121
    %p128 = scmp.eq.s32.totalorder %s9, 1
    %p129 = por %p127, %p128
    %p130 = scmp.ne.s32.totalorder %s122, %s125
    %p131 = scmp.eq.s32.totalorder %s9, 0
    %p132 = por %p130, %p131
    %p133 = scmp.ne.s32.totalorder %s122, %s125
    %p134 = scmp.eq.s32.totalorder %s14, 1
    %p135 = por %p133, %p134
    %p136 = scmp.ne.s32.totalorder %s125, %s126
    %p137 = scmp.eq.s32.totalorder %s14, 0
    %p138 = por %p136, %p137
    %p139 = scmp.ne.s32.totalorder %s125, %s126
    %p140 = scmp.eq.s32.totalorder %s15, 1
    %p141 = por %p139, %p140
    %p143 = scmp.ne.s32.totalorder %s126, %s142
    %p144 = scmp.eq.s32.totalorder %s15, 0
    %p145 = por %p143, %p144
    %p146 = scmp.le.s32.totalorder 1, %s9
    %p147 = scmp.lt.s32.totalorder %s9, 3
    %p148 = pnand %p146, %p147
    %p149 = pneg %p148
    // Predicated region
    $region9: #{conformer_encoder.25} parent=5 // pred_check
      _
    $region10: #{conformer_encoder.25} parent=5 // pred_check_branch
      %151 = sbr.rel (%p148) target = $region12
    $region11: #{conformer_encoder.25} parent=5 // pred_region
      %s152 = ssub.s32 %s9, 1
      // Predicated region
      $region13: #{conformer_encoder.25} parent=11 // pred_check
        %p153 = pneg %p84
      $region14: #{conformer_encoder.25} parent=11 // pred_check_branch
        %155 = sbr.rel (%p153) target = $region16
      $region15: #{conformer_encoder.25} parent=11 // pred_region
        %s156 = smul.u32 16, %s21
        %p157 = scmp.lt.s32.totalorder %s156, 15
        %s158 = scalar_select %p157, %s156, 15
        %p159 = scmp.lt.s32.totalorder %s20, 0
        %s160 = scalar_select %p159, %s20, 0
        %s161 = sadd.s32 %s160, %s158
        %s162 = smul.addr %s161, 4
        %s163 = scalar_lea.vmem %s1, %s162
        %s164 = smul.u32 16, %s21
      $region16: #{conformer_encoder.25} parent=11 // pred_fallthru
        _
      // Predicated region
      $region17: #{conformer_encoder.25} parent=11 // pred_check
        %p165 = pneg %p110
      $region18: #{conformer_encoder.25} parent=11 // pred_check_branch
        %167 = sbr.rel (%p165) target = $region20
      $region19: #{conformer_encoder.25} parent=11 // pred_region
        %p168 = scmp.lt.s32.totalorder %s20, 0
        %s169 = scalar_select %p168, %s20, 0
        %s170 = scalar_lea.vmem %s2, %s169
      $region20: #{conformer_encoder.25} parent=11 // pred_fallthru
        _
    $region12: #{conformer_encoder.25} parent=5 // pred_fallthru
      _
    %p171 = scmp.lt.s32.totalorder %s9, 2
    // Predicated region
    $region21: #{conformer_encoder.25} parent=5 // pred_check
      %p172 = pneg %p171
    $region22: #{conformer_encoder.25} parent=5 // pred_check_branch
      %174 = sbr.rel (%p172) target = $region24
    $region23: #{conformer_encoder.25} parent=5 // pred_region
      // Predicated region
      $region25: #{conformer_encoder.25} parent=23 // pred_check
        %p175 = pneg %p50
      $region26: #{conformer_encoder.25} parent=23 // pred_check_branch
        %177 = sbr.rel (%p175) target = $region28
      $region27: #{conformer_encoder.25} parent=23 // pred_region
        %s178 = smul.u32 16, %s16
        %p179 = scmp.lt.s32.totalorder %s178, 31
        %s180 = scalar_select %p179, %s178, 31
        %p181 = scmp.lt.s32.totalorder %s18, 0
        %s182 = scalar_select %p181, %s18, 0
        %s183 = sadd.s32 %s182, %s180
        %s184 = smul.addr %s183, 4
        %s185 = scalar_lea.vmem %s0, %s184
        %s186 = smul.u32 16, %s16
      $region28: #{conformer_encoder.25} parent=23 // pred_fallthru
        _
    $region24: #{conformer_encoder.25} parent=5 // pred_fallthru
      _
    %p187 = scmp.le.s32.totalorder 1, %s9
    %p188 = scmp.lt.s32.totalorder %s9, 3
    %p189 = pnand %p187, %p188
    %p190 = pneg %p189
    // Predicated region
    $region29: #{conformer_encoder.25} parent=5 // pred_check
      _
    $region30: #{conformer_encoder.25} parent=5 // pred_check_branch
      %192 = sbr.rel (%p189) target = $region32
    $region31: #{conformer_encoder.25} parent=5 // pred_region
      %s193 = ssub.s32 %s9, 1
      %s194 = smul.u32 16, %s19
      %p195 = scmp.lt.s32.totalorder %s194, 31
      %s196 = scalar_select %p195, %s194, 31
      %p197 = scmp.lt.s32.totalorder %s21, 0
      %s198 = scalar_select %p197, %s21, 0
      %s199 = sadd.s32 %s198, %s196
      %s200 = smul.addr %s199, 4
      %s201 = scalar_lea.vmem %s0, %s200
      %p202 = pneg %p56
      %p203 = pneg %p53
      %s204 = smul.u32 16, %s21
      %p205 = scmp.lt.s32.totalorder %s204, 15
      %s206 = scalar_select %p205, %s204, 15
      %p207 = scmp.lt.s32.totalorder %s20, 0
      %s208 = scalar_select %p207, %s20, 0
      %s209 = sadd.s32 %s208, %s206
      %s210 = smul.addr %s209, 4
      %s211 = scalar_lea.vmem %s1, %s210
      %p212 = pneg %p84
      %p213 = pneg %p81
      %p214 = scmp.lt.s32.totalorder %s20, 0
      %s215 = scalar_select %p214, %s20, 0
      %s216 = scalar_lea.vmem %s2, %s215
      %p217 = pneg %p110
      %p218 = pneg %p107
      %p219 = pneg %p138
      %p220 = pneg %p135
      %s221 = smul.u32 16, %s19
      %p222 = scmp.lt.s32.totalorder %s221, 31
      %s223 = scalar_select %p222, %s221, 31
      %p224 = scmp.lt.s32.totalorder %s20, 0
      %s225 = scalar_select %p224, %s20, 0
      %s226 = sadd.s32 %s225, %s223
      %s227 = smul.addr %s226, 4
      %s228 = scalar_lea.vmem %s3, %s227
      %s229 = smul.u32 16, %s19
      %p230 = scmp.lt.s32.totalorder %s229, 31
      %s231 = scalar_select %p230, %s229, 31
      %p232 = scmp.lt.s32.totalorder %s21, 0
      %s233 = scalar_select %p232, %s21, 0
      %s234 = sadd.s32 %s233, %s231
      %s235 = smul.addr %s234, 4
      %s236 = scalar_lea.vmem %s0, %s235
      %s237 = smul.u32 16, %s19
      %s238 = smul.u32 16, %s21
      %p239 = scmp.lt.s32.totalorder %s238, 15
      %s240 = scalar_select %p239, %s238, 15
      %p241 = scmp.lt.s32.totalorder %s20, 0
      %s242 = scalar_select %p241, %s20, 0
      %s243 = sadd.s32 %s242, %s240
      %s244 = smul.addr %s243, 4
      %s245 = scalar_lea.vmem %s1, %s244
      %s246 = smul.u32 16, %s21
      %p247 = scmp.lt.s32.totalorder %s20, 0
      %s248 = scalar_select %p247, %s20, 0
      %s249 = scalar_lea.vmem %s2, %s248
      %s250 = smul.u32 16, %s19
      %p251 = scmp.lt.s32.totalorder %s250, 31
      %s252 = scalar_select %p251, %s250, 31
      %p253 = scmp.lt.s32.totalorder %s20, 0
      %s254 = scalar_select %p253, %s20, 0
      %s255 = sadd.s32 %s254, %s252
      %s256 = smul.addr %s255, 4
      %s257 = scalar_lea.vmem %s3, %s256
      %s258 = smul.u32 16, %s19
      %p260 = scmp.eq.s32.totalorder %s21, 0
      // Predicated region
      $region33: #{conformer_encoder.25} parent=31 // pred_check
        %p261 = pneg %p260
      $region34: #{conformer_encoder.25} parent=31 // pred_check_branch
        %263 = sbr.rel (%p261) target = $region36
      $region35: #{conformer_encoder.25} parent=31 // pred_region
        %264 = vst [vmem:[#allocation2] sm:$0xff] 0.0
        %265 = vst [vmem:[#allocation2 + $0x8] sm:$0xff] 0.0
        %266 = vst [vmem:[#allocation2 + $0x10] sm:$0xff] 0.0
        %267 = vst [vmem:[#allocation2 + $0x18] sm:$0xff] 0.0
        %268 = vst [vmem:[#allocation2 + $0x20] sm:$0xff] 0.0
        %269 = vst [vmem:[#allocation2 + $0x28] sm:$0xff] 0.0
        %270 = vst [vmem:[#allocation2 + $0x30] sm:$0xff] 0.0
        %271 = vst [vmem:[#allocation2 + $0x38] sm:$0xff] 0.0
        %272 = vst [vmem:[#allocation2 + $0x40] sm:$0xff] 0.0
        %273 = vst [vmem:[#allocation2 + $0x48] sm:$0xff] 0.0
        %274 = vst [vmem:[#allocation2 + $0x50] sm:$0xff] 0.0
        %275 = vst [vmem:[#allocation2 + $0x58] sm:$0xff] 0.0
        %276 = vst [vmem:[#allocation2 + $0x60] sm:$0xff] 0.0
        %277 = vst [vmem:[#allocation2 + $0x68] sm:$0xff] 0.0
        %278 = vst [vmem:[#allocation2 + $0x70] sm:$0xff] 0.0
        %279 = vst [vmem:[#allocation2 + $0x78] sm:$0xff] 0.0
      $region36: #{conformer_encoder.25} parent=31 // pred_fallthru
        _
      %v280 = vld [vmem:[%s236] sm:$0xf]
      %v281 = vld [vmem:[%s236 + $0x4] sm:$0xf]
      %v282 = vld [vmem:[%s236 + $0x8] sm:$0xf]
      %v283 = vld [vmem:[%s236 + $0xc] sm:$0xf]
      %v284 = vld [vmem:[%s236 + $0x10] sm:$0xf]
      %v285 = vld [vmem:[%s236 + $0x14] sm:$0xf]
      %v286 = vld [vmem:[%s236 + $0x18] sm:$0xf]
      %v287 = vld [vmem:[%s236 + $0x1c] sm:$0xf]
      %v288 = vld [vmem:[%s236 + $0x20] sm:$0xf]
      %v289 = vld [vmem:[%s236 + $0x24] sm:$0xf]
      %v290 = vld [vmem:[%s236 + $0x28] sm:$0xf]
      %v291 = vld [vmem:[%s236 + $0x2c] sm:$0xf]
      %v292 = vld [vmem:[%s236 + $0x30] sm:$0xf]
      %v293 = vld [vmem:[%s236 + $0x34] sm:$0xf]
      %v294 = vld [vmem:[%s236 + $0x38] sm:$0xf]
      %v295 = vld [vmem:[%s236 + $0x3c] sm:$0xf]
      %v296 = vld [vmem:[#allocation2] sm:$0xff]
      %v297 = vld [vmem:[#allocation2 + $0x8] sm:$0xff]
      %v298 = vld [vmem:[#allocation2 + $0x10] sm:$0xff]
      %v299 = vld [vmem:[#allocation2 + $0x18] sm:$0xff]
      %v300 = vld [vmem:[#allocation2 + $0x20] sm:$0xff]
      %v301 = vld [vmem:[#allocation2 + $0x28] sm:$0xff]
      %v302 = vld [vmem:[#allocation2 + $0x30] sm:$0xff]
      %v303 = vld [vmem:[#allocation2 + $0x38] sm:$0xff]
      %v304 = vld [vmem:[#allocation2 + $0x40] sm:$0xff]
      %v305 = vld [vmem:[#allocation2 + $0x48] sm:$0xff]
      %v306 = vld [vmem:[#allocation2 + $0x50] sm:$0xff]
      %v307 = vld [vmem:[#allocation2 + $0x58] sm:$0xff]
      %v308 = vld [vmem:[#allocation2 + $0x60] sm:$0xff]
      %v309 = vld [vmem:[#allocation2 + $0x68] sm:$0xff]
      %v310 = vld [vmem:[#allocation2 + $0x70] sm:$0xff]
      %v311 = vld [vmem:[#allocation2 + $0x78] sm:$0xff]
      %v312 = vld [vmem:[%s245] sm:$0xf]
      %v313 = vld [vmem:[%s245 + $0x4] sm:$0xf]
      %v314 = vld [vmem:[%s245 + $0x8] sm:$0xf]
      %v315 = vld [vmem:[%s245 + $0xc] sm:$0xf]
      %v316 = vld [vmem:[%s245 + $0x10] sm:$0xf]
      %v317 = vld [vmem:[%s245 + $0x14] sm:$0xf]
      %v318 = vld [vmem:[%s245 + $0x18] sm:$0xf]
      %v319 = vld [vmem:[%s245 + $0x1c] sm:$0xf]
      %v320 = vld [vmem:[%s245 + $0x20] sm:$0xf]
      %v321 = vld [vmem:[%s245 + $0x24] sm:$0xf]
      %v322 = vld [vmem:[%s245 + $0x28] sm:$0xf]
      %v323 = vld [vmem:[%s245 + $0x2c] sm:$0xf]
      %v324 = vld [vmem:[%s245 + $0x30] sm:$0xf]
      %v325 = vld [vmem:[%s245 + $0x34] sm:$0xf]
      %v326 = vld [vmem:[%s245 + $0x38] sm:$0xf]
      %v327 = vld [vmem:[%s245 + $0x3c] sm:$0xf]
      %v344 = vunpack.c.l.b16 %v280
      %v345 = vunpack.c.l.b16 %v281
      %v346 = vunpack.c.l.b16 %v282
      %v347 = vunpack.c.l.b16 %v283
      %v348 = vunpack.c.l.b16 %v284
      %v349 = vunpack.c.l.b16 %v285
      %v350 = vunpack.c.l.b16 %v286
      %v351 = vunpack.c.l.b16 %v287
      %v352 = vunpack.c.l.b16 %v288
      %v353 = vunpack.c.l.b16 %v289
      %v354 = vunpack.c.l.b16 %v290
      %v355 = vunpack.c.l.b16 %v291
      %v356 = vunpack.c.l.b16 %v292
      %v357 = vunpack.c.l.b16 %v293
      %v358 = vunpack.c.l.b16 %v294
      %v359 = vunpack.c.l.b16 %v295
      %v360 = vpack.c.b16 %v345, %v344
      %v361 = vpack.c.b16 %v347, %v346
      %v362 = vpack.c.b16 %v349, %v348
      %v363 = vpack.c.b16 %v351, %v350
      %v364 = vpack.c.b16 %v353, %v352
      %v365 = vpack.c.b16 %v355, %v354
      %v366 = vpack.c.b16 %v357, %v356
      %v367 = vpack.c.b16 %v359, %v358
      %v392 = vunpack.c.l.b16 %v312
      %v393 = vunpack.c.l.b16 %v313
      %v394 = vunpack.c.l.b16 %v314
      %v395 = vunpack.c.l.b16 %v315
      %v396 = vunpack.c.l.b16 %v316
      %v397 = vunpack.c.l.b16 %v317
      %v398 = vunpack.c.l.b16 %v318
      %v399 = vunpack.c.l.b16 %v319
      %v400 = vunpack.c.l.b16 %v320
      %v401 = vunpack.c.l.b16 %v321
      %v402 = vunpack.c.l.b16 %v322
      %v403 = vunpack.c.l.b16 %v323
      %v404 = vunpack.c.l.b16 %v324
      %v405 = vunpack.c.l.b16 %v325
      %v406 = vunpack.c.l.b16 %v326
      %v407 = vunpack.c.l.b16 %v327
      %v408 = vpack.c.b16 %v393, %v392
      %v409 = vpack.c.b16 %v395, %v394
      %v410 = vpack.c.b16 %v397, %v396
      %v411 = vpack.c.b16 %v399, %v398
      %v412 = vpack.c.b16 %v401, %v400
      %v413 = vpack.c.b16 %v403, %v402
      %v414 = vpack.c.b16 %v405, %v404
      %v415 = vpack.c.b16 %v407, %v406
      %424 = vmatprep.subr.bf16.mxu0 0
      %425 = vmatpush1.bf16.msra.mxu0 %v408
      %426 = vmatprep.subr.bf16.mxu0 0
      %427 = vmatpush1.bf16.msra.mxu0 %v409
      %428 = vmatprep.subr.bf16.mxu0 0
      %429 = vmatpush1.bf16.msra.mxu0 %v410
      %430 = vmatprep.subr.bf16.mxu0 0
      %431 = vmatpush1.bf16.msra.mxu0 %v411
      %432 = vmatprep.subr.bf16.mxu0 0
      %433 = vmatpush1.bf16.msra.mxu0 %v412
      %434 = vmatprep.subr.bf16.mxu0 0
      %435 = vmatpush1.bf16.msra.mxu0 %v413
      %436 = vmatprep.subr.bf16.mxu0 0
      %437 = vmatpush1.bf16.msra.mxu0 %v414
      %438 = vmatprep.subr.bf16.mxu0 0
      %439 = vmatpush1.bf16.msra.mxu0 %v415
      %440 = vmatprep.subr.bf16.mxu0 0
      %441 = vmatpush1.bf16.msra.mxu0 0
      %442 = vmatprep.subr.bf16.mxu0 0
      %443 = vmatpush1.bf16.msra.mxu0 0
      %444 = vmatprep.subr.bf16.mxu0 0
      %445 = vmatpush1.bf16.msra.mxu0 0
      %446 = vmatprep.subr.bf16.mxu0 0
      %447 = vmatpush1.bf16.msra.mxu0 0
      %448 = vmatprep.subr.bf16.mxu0 0
      %449 = vmatpush1.bf16.msra.mxu0 0
      %450 = vmatprep.subr.bf16.mxu0 0
      %451 = vmatpush1.bf16.msra.mxu0 0
      %452 = vmatprep.subr.bf16.mxu0 0
      %453 = vmatpush1.bf16.msra.mxu0 0
      %454 = vmatprep.subr.bf16.mxu0 0
      %455 = vmatpush1.bf16.msra.mxu0 0
      %456 = vmatprep.mubr.bf16.mxu0 0
      %457 = vmatmul.mubr.bf16.gmra.mrb[0].mxu0 %v360
      %v458 = vpop.f32.mrb[0].mxu0
      %v459 = vadd.f32 0.0, %v458
      %v460 = vpop.f32.mrb[0].mxu0
      %v461 = vpop.f32.mrb[0].mxu0
      %v462 = vadd.f32 0.0, %v461
      %v463 = vpop.f32.mrb[0].mxu0
      %464 = vmatprep.mubr.bf16.mxu0 0
      %465 = vmatmul.mubr.bf16.gmra.mrb[0].mxu0 %v361
      %v466 = vpop.f32.mrb[0].mxu0
      %v467 = vadd.f32 0.0, %v466
      %v468 = vpop.f32.mrb[0].mxu0
      %v469 = vpop.f32.mrb[0].mxu0
      %v470 = vadd.f32 0.0, %v469
      %v471 = vpop.f32.mrb[0].mxu0
      %472 = vmatprep.mubr.bf16.mxu0 0
      %473 = vmatmul.mubr.bf16.gmra.mrb[0].mxu0 %v362
      %v474 = vpop.f32.mrb[0].mxu0
      %v475 = vadd.f32 0.0, %v474
      %v476 = vpop.f32.mrb[0].mxu0
      %v477 = vpop.f32.mrb[0].mxu0
      %v478 = vadd.f32 0.0, %v477
      %v479 = vpop.f32.mrb[0].mxu0
      %480 = vmatprep.mubr.bf16.mxu0 0
      %481 = vmatmul.mubr.bf16.gmra.mrb[0].mxu0 %v363
      %v482 = vpop.f32.mrb[0].mxu0
      %v483 = vadd.f32 0.0, %v482
      %v484 = vpop.f32.mrb[0].mxu0
      %v485 = vpop.f32.mrb[0].mxu0
      %v486 = vadd.f32 0.0, %v485
      %v487 = vpop.f32.mrb[0].mxu0
      %488 = vmatprep.mubr.bf16.mxu0 0
      %489 = vmatmul.mubr.bf16.gmra.mrb[0].mxu0 %v364
      %v490 = vpop.f32.mrb[0].mxu0
      %v491 = vadd.f32 0.0, %v490
      %v492 = vpop.f32.mrb[0].mxu0
      %v493 = vpop.f32.mrb[0].mxu0
      %v494 = vadd.f32 0.0, %v493
      %v495 = vpop.f32.mrb[0].mxu0
      %496 = vmatprep.mubr.bf16.mxu0 0
      %497 = vmatmul.mubr.bf16.gmra.mrb[0].mxu0 %v365
      %v498 = vpop.f32.mrb[0].mxu0
      %v499 = vadd.f32 0.0, %v498
      %v500 = vpop.f32.mrb[0].mxu0
      %v501 = vpop.f32.mrb[0].mxu0
      %v502 = vadd.f32 0.0, %v501
      %v503 = vpop.f32.mrb[0].mxu0
      %504 = vmatprep.mubr.bf16.mxu0 0
      %505 = vmatmul.mubr.bf16.gmra.mrb[0].mxu0 %v366
      %v506 = vpop.f32.mrb[0].mxu0
      %v507 = vadd.f32 0.0, %v506
      %v508 = vpop.f32.mrb[0].mxu0
      %v509 = vpop.f32.mrb[0].mxu0
      %v510 = vadd.f32 0.0, %v509
      %v511 = vpop.f32.mrb[0].mxu0
      %512 = vmatprep.mubr.bf16.mxu0 0
      %513 = vmatmul.mubr.bf16.gmra.mrb[0].mxu0 %v367
      %v514 = vpop.f32.mrb[0].mxu0
      %v515 = vadd.f32 0.0, %v514
      %v516 = vpop.f32.mrb[0].mxu0
      %v517 = vpop.f32.mrb[0].mxu0
      %v518 = vadd.f32 0.0, %v517
      %v519 = vpop.f32.mrb[0].mxu0
      %520 = vdwg.mxu0
      %v521 = vadd.f32 %v296, %v459
      %v522 = vadd.f32 %v297, %v462
      %v523 = vadd.f32 %v298, %v467
      %v524 = vadd.f32 %v299, %v470
      %v525 = vadd.f32 %v300, %v475
      %v526 = vadd.f32 %v301, %v478
      %v527 = vadd.f32 %v302, %v483
      %v528 = vadd.f32 %v303, %v486
      %v529 = vadd.f32 %v304, %v491
      %v530 = vadd.f32 %v305, %v494
      %v531 = vadd.f32 %v306, %v499
      %v532 = vadd.f32 %v307, %v502
      %v533 = vadd.f32 %v308, %v507
      %v534 = vadd.f32 %v309, %v510
      %v535 = vadd.f32 %v310, %v515
      %v536 = vadd.f32 %v311, %v518
      %537 = vst [vmem:[#allocation2] sm:$0xff] %v521
      %538 = vst [vmem:[#allocation2 + $0x8] sm:$0xff] %v522
      %539 = vst [vmem:[#allocation2 + $0x10] sm:$0xff] %v523
      %540 = vst [vmem:[#allocation2 + $0x18] sm:$0xff] %v524
      %541 = vst [vmem:[#allocation2 + $0x20] sm:$0xff] %v525
      %542 = vst [vmem:[#allocation2 + $0x28] sm:$0xff] %v526
      %543 = vst [vmem:[#allocation2 + $0x30] sm:$0xff] %v527
      %544 = vst [vmem:[#allocation2 + $0x38] sm:$0xff] %v528
      %545 = vst [vmem:[#allocation2 + $0x40] sm:$0xff] %v529
      %546 = vst [vmem:[#allocation2 + $0x48] sm:$0xff] %v530
      %547 = vst [vmem:[#allocation2 + $0x50] sm:$0xff] %v531
      %548 = vst [vmem:[#allocation2 + $0x58] sm:$0xff] %v532
      %549 = vst [vmem:[#allocation2 + $0x60] sm:$0xff] %v533
      %550 = vst [vmem:[#allocation2 + $0x68] sm:$0xff] %v534
      %551 = vst [vmem:[#allocation2 + $0x70] sm:$0xff] %v535
      %552 = vst [vmem:[#allocation2 + $0x78] sm:$0xff] %v536
      // Predicated region
      $region37: #{conformer_encoder.25} parent=31 // pred_check
        %p553 = pneg %p260
      $region38: #{conformer_encoder.25} parent=31 // pred_check_branch
        %555 = sbr.rel (%p553) target = $region40
      $region39: #{conformer_encoder.25} parent=31 // pred_region
        %v556 = vld [vmem:[#allocation2] sm:$0xff]
        %v557 = vld [vmem:[#allocation2 + $0x8] sm:$0xff]
        %v558 = vld [vmem:[#allocation2 + $0x10] sm:$0xff]
        %v559 = vld [vmem:[#allocation2 + $0x18] sm:$0xff]
        %v560 = vld [vmem:[#allocation2 + $0x20] sm:$0xff]
        %v561 = vld [vmem:[#allocation2 + $0x28] sm:$0xff]
        %v562 = vld [vmem:[#allocation2 + $0x30] sm:$0xff]
        %v563 = vld [vmem:[#allocation2 + $0x38] sm:$0xff]
        %v564 = vld [vmem:[#allocation2 + $0x40] sm:$0xff]
        %v565 = vld [vmem:[#allocation2 + $0x48] sm:$0xff]
        %v566 = vld [vmem:[#allocation2 + $0x50] sm:$0xff]
        %v567 = vld [vmem:[#allocation2 + $0x58] sm:$0xff]
        %v568 = vld [vmem:[#allocation2 + $0x60] sm:$0xff]
        %v569 = vld [vmem:[#allocation2 + $0x68] sm:$0xff]
        %v570 = vld [vmem:[#allocation2 + $0x70] sm:$0xff]
        %v571 = vld [vmem:[#allocation2 + $0x78] sm:$0xff]
        %v572 = vld [vmem:[%s249] sm:$0x1]
        %v574 = vlaneseq
        %v575 = vshrl.u32 %v574, 7
        %v576 = vsub.s32 0, %v575
        %v577 = vrot.slane %v572, %v576
        %v579 = vadd.f32 %v556, %v577
        %v580 = vadd.f32 %v557, %v577
        %v581 = vadd.f32 %v558, %v577
        %v582 = vadd.f32 %v559, %v577
        %v583 = vadd.f32 %v560, %v577
        %v584 = vadd.f32 %v561, %v577
        %v585 = vadd.f32 %v562, %v577
        %v586 = vadd.f32 %v563, %v577
        %v587 = vadd.f32 %v564, %v577
        %v588 = vadd.f32 %v565, %v577
        %v589 = vadd.f32 %v566, %v577
        %v590 = vadd.f32 %v567, %v577
        %v591 = vadd.f32 %v568, %v577
        %v592 = vadd.f32 %v569, %v577
        %v593 = vadd.f32 %v570, %v577
        %v594 = vadd.f32 %v571, %v577
        %v595 = vmax.f32 %v579, 0.0
        %v596 = vmax.f32 %v580, 0.0
        %v597 = vmax.f32 %v581, 0.0
        %v598 = vmax.f32 %v582, 0.0
        %v599 = vmax.f32 %v583, 0.0
        %v600 = vmax.f32 %v584, 0.0
        %v601 = vmax.f32 %v585, 0.0
        %v602 = vmax.f32 %v586, 0.0
        %v603 = vmax.f32 %v587, 0.0
        %v604 = vmax.f32 %v588, 0.0
        %v605 = vmax.f32 %v589, 0.0
        %v606 = vmax.f32 %v590, 0.0
        %v607 = vmax.f32 %v591, 0.0
        %v608 = vmax.f32 %v592, 0.0
        %v609 = vmax.f32 %v593, 0.0
        %v610 = vmax.f32 %v594, 0.0
        %v611 = vpack.c.bf16 %v596, %v595
        %v612 = vpack.c.bf16 %v598, %v597
        %v613 = vpack.c.bf16 %v600, %v599
        %v614 = vpack.c.bf16 %v602, %v601
        %v615 = vpack.c.bf16 %v604, %v603
        %v616 = vpack.c.bf16 %v606, %v605
        %v617 = vpack.c.bf16 %v608, %v607
        %v618 = vpack.c.bf16 %v610, %v609
        %v627 = vunpack.c.l.b16 %v611
        %v628 = vunpack.c.h.b16 %v611
        %v629 = vunpack.c.l.b16 %v612
        %v630 = vunpack.c.h.b16 %v612
        %v631 = vunpack.c.l.b16 %v613
        %v632 = vunpack.c.h.b16 %v613
        %v633 = vunpack.c.l.b16 %v614
        %v634 = vunpack.c.h.b16 %v614
        %v635 = vunpack.c.l.b16 %v615
        %v636 = vunpack.c.h.b16 %v615
        %v637 = vunpack.c.l.b16 %v616
        %v638 = vunpack.c.h.b16 %v616
        %v639 = vunpack.c.l.b16 %v617
        %v640 = vunpack.c.h.b16 %v617
        %v641 = vunpack.c.l.b16 %v618
        %v642 = vunpack.c.h.b16 %v618
        %v643 = vpack.c.b16 %v627, %v627
        %v644 = vpack.c.b16 %v628, %v628
        %v645 = vpack.c.b16 %v629, %v629
        %v646 = vpack.c.b16 %v630, %v630
        %v647 = vpack.c.b16 %v631, %v631
        %v648 = vpack.c.b16 %v632, %v632
        %v649 = vpack.c.b16 %v633, %v633
        %v650 = vpack.c.b16 %v634, %v634
        %v651 = vpack.c.b16 %v635, %v635
        %v652 = vpack.c.b16 %v636, %v636
        %v653 = vpack.c.b16 %v637, %v637
        %v654 = vpack.c.b16 %v638, %v638
        %v655 = vpack.c.b16 %v639, %v639
        %v656 = vpack.c.b16 %v640, %v640
        %v657 = vpack.c.b16 %v641, %v641
        %v658 = vpack.c.b16 %v642, %v642
        %675 = vst [vmem:[%s257] sm:$0xf] %v643
        %676 = vst [vmem:[%s257 + $0x4] sm:$0xf] %v644
        %677 = vst [vmem:[%s257 + $0x8] sm:$0xf] %v645
        %678 = vst [vmem:[%s257 + $0xc] sm:$0xf] %v646
        %679 = vst [vmem:[%s257 + $0x10] sm:$0xf] %v647
        %680 = vst [vmem:[%s257 + $0x14] sm:$0xf] %v648
        %681 = vst [vmem:[%s257 + $0x18] sm:$0xf] %v649
        %682 = vst [vmem:[%s257 + $0x1c] sm:$0xf] %v650
        %683 = vst [vmem:[%s257 + $0x20] sm:$0xf] %v651
        %684 = vst [vmem:[%s257 + $0x24] sm:$0xf] %v652
        %685 = vst [vmem:[%s257 + $0x28] sm:$0xf] %v653
        %686 = vst [vmem:[%s257 + $0x2c] sm:$0xf] %v654
        %687 = vst [vmem:[%s257 + $0x30] sm:$0xf] %v655
        %688 = vst [vmem:[%s257 + $0x34] sm:$0xf] %v656
        %689 = vst [vmem:[%s257 + $0x38] sm:$0xf] %v657
        %690 = vst [vmem:[%s257 + $0x3c] sm:$0xf] %v658
      $region40: #{conformer_encoder.25} parent=31 // pred_fallthru
        _
      %s691 = smul.u32 16, %s19
      %p692 = scmp.lt.s32.totalorder %s691, 31
      %s693 = scalar_select %p692, %s691, 31
      %p694 = scmp.lt.s32.totalorder %s20, 0
      %s695 = scalar_select %p694, %s20, 0
      %s696 = sadd.s32 %s695, %s693
      %s697 = smul.addr %s696, 4
      %s698 = scalar_lea.vmem %s3, %s697
      // Predicated region
      $region41: #{conformer_encoder.25} parent=31 // pred_check
        %p699 = pneg %p135
      $region42: #{conformer_encoder.25} parent=31 // pred_check_branch
        %701 = sbr.rel (%p699) target = $region44
      $region43: #{conformer_encoder.25} parent=31 // pred_region
        %s702 = smul.u32 16, %s19
      $region44: #{conformer_encoder.25} parent=31 // pred_fallthru
        _
    $region32: #{conformer_encoder.25} parent=5 // pred_fallthru
      _
    %p703 = scmp.le.s32.totalorder 2, %s9
    // Predicated region
    $region45: #{conformer_encoder.25} parent=5 // pred_check
      %p704 = pneg %p703
    $region46: #{conformer_encoder.25} parent=5 // pred_check_branch
      %706 = sbr.rel (%p704) target = $region48
    $region47: #{conformer_encoder.25} parent=5 // pred_region
      %s707 = ssub.s32 %s9, 2
      // Predicated region
      $region49: #{conformer_encoder.25} parent=47 // pred_check
        %p708 = pneg %p141
      $region50: #{conformer_encoder.25} parent=47 // pred_check_branch
        %710 = sbr.rel (%p708) target = $region52
      $region51: #{conformer_encoder.25} parent=47 // pred_region
        %s711 = smul.u32 16, %s22
        %p712 = scmp.lt.s32.totalorder %s711, 31
        %s713 = scalar_select %p712, %s711, 31
        %p714 = scmp.lt.s32.totalorder %s23, 0
        %s715 = scalar_select %p714, %s23, 0
        %s716 = sadd.s32 %s715, %s713
        %s717 = smul.addr %s716, 4
        %s718 = scalar_lea.vmem %s3, %s717
      $region52: #{conformer_encoder.25} parent=47 // pred_fallthru
        _
    $region48: #{conformer_encoder.25} parent=5 // pred_fallthru
      _
  $region6: #{conformer_encoder.25} parent=0 // loop_footer
    %s13 = sadd.s32 1, %s9
  $region7: #{conformer_encoder.25} parent=0 // loop_footer_branch
    %8 = sbr.rel target = $region3
  $region8: #{conformer_encoder.25} parent=0 // loop_exit
    _

// kernel: conformer_encoder.26
$region0: #{conformer_encoder.26}
  #allocation0 [shape = 'u32[]', space=smem, size = 0x4, offset = 0x4, fixed_abs, tag = 'smem constant byte address 0x4 - core index']
  #allocation1 [shape = 'u32[144,128]{1,0:T(1,128)}', space=vmem, size = 0x12000, scoped, tag = 'internal scratch']
  #allocation2 [shape = 'f32[48,128]{1,0:T(8,128)}', space=vmem, size = 0x6000, scoped, tag = 'scratch operand']
  %s0 = inlined_call_operand.vmem [shape: bf16[48,384], index: 0, kind: input, shape index: {}]
  %s1 = inlined_call_operand.vmem [shape: bf16[384,128], index: 1, kind: input, shape index: {}]
  %s2 = inlined_call_operand.vmem [shape: f32[1,128], index: 2, kind: input, shape index: {}]
  %s3 = inlined_call_operand.vmem [shape: bf16[48,128], index: 3, kind: output, shape index: {}]
  %s4 = sld [smem:[#allocation0]]
  $region30: #{conformer_encoder.26} parent=0
    _
  %s6 = ssub.s32 1, %s4
  %s7 = scalar_select 0, %s6, %s4
  // Predicated region
  $region2: #{conformer_encoder.26} parent=0 // pred_check
    _
  $region3: #{conformer_encoder.26} parent=0 // pred_check_branch
    %9 = sbr.rel (0) target = $region5
  $region4: #{conformer_encoder.26} parent=0 // pred_region
    _
  $region5: #{conformer_encoder.26} parent=0 // pred_fallthru
    _
  // Predicated region
  $region6: #{conformer_encoder.26} parent=0 // pred_check
    _
  $region7: #{conformer_encoder.26} parent=0 // pred_check_branch
    %11 = sbr.rel (0) target = $region9
  $region8: #{conformer_encoder.26} parent=0 // pred_region
    _
  $region9: #{conformer_encoder.26} parent=0 // pred_fallthru
    _
  // Predicated region
  $region10: #{conformer_encoder.26} parent=0 // pred_check
    _
  $region11: #{conformer_encoder.26} parent=0 // pred_check_branch
    %13 = sbr.rel (0) target = $region13
  $region12: #{conformer_encoder.26} parent=0 // pred_region
    _
  $region13: #{conformer_encoder.26} parent=0 // pred_fallthru
    _
  %p15 = scmp.eq.s32.totalorder 0, 0
  // Predicated region
  $region14: #{conformer_encoder.26} parent=0 // pred_check
    %p16 = pneg %p15
  $region15: #{conformer_encoder.26} parent=0 // pred_check_branch
    %18 = sbr.rel (%p16) target = $region17
  $region16: #{conformer_encoder.26} parent=0 // pred_region
    %19 = vst [vmem:[#allocation2] sm:$0xff] 0.0
    %20 = vst [vmem:[#allocation2 + $0x8] sm:$0xff] 0.0
    %21 = vst [vmem:[#allocation2 + $0x10] sm:$0xff] 0.0
    %22 = vst [vmem:[#allocation2 + $0x18] sm:$0xff] 0.0
    %23 = vst [vmem:[#allocation2 + $0x20] sm:$0xff] 0.0
    %24 = vst [vmem:[#allocation2 + $0x28] sm:$0xff] 0.0
  $region17: #{conformer_encoder.26} parent=0 // pred_fallthru
    _
  %v25 = vld [vmem:[%s0] sm:$0xff]
  %v26 = vld [vmem:[%s0 + $0x8] sm:$0xf]
  %v27 = vld [vmem:[%s0 + $0xc] sm:$0xff]
  %v28 = vld [vmem:[%s0 + $0x14] sm:$0xf]
  %v29 = vld [vmem:[%s0 + $0x18] sm:$0xff]
  %v30 = vld [vmem:[%s0 + $0x20] sm:$0xf]
  %v31 = vld [vmem:[%s0 + $0x24] sm:$0xff]
  %v32 = vld [vmem:[%s0 + $0x2c] sm:$0xf]
  %v33 = vld [vmem:[%s0 + $0x30] sm:$0xff]
  %v34 = vld [vmem:[%s0 + $0x38] sm:$0xf]
  %v35 = vld [vmem:[%s0 + $0x3c] sm:$0xff]
  %v36 = vld [vmem:[%s0 + $0x44] sm:$0xf]
  %v37 = vld [vmem:[#allocation2] sm:$0xff]
  %v38 = vld [vmem:[#allocation2 + $0x8] sm:$0xff]
  %v39 = vld [vmem:[#allocation2 + $0x10] sm:$0xff]
  %v40 = vld [vmem:[#allocation2 + $0x18] sm:$0xff]
  %v41 = vld [vmem:[#allocation2 + $0x20] sm:$0xff]
  %v42 = vld [vmem:[#allocation2 + $0x28] sm:$0xff]
  %v43 = vld [vmem:[%s1] sm:$0xf]
  %v44 = vld [vmem:[%s1 + $0x4] sm:$0xf]
  %v45 = vld [vmem:[%s1 + $0x8] sm:$0xf]
  %v46 = vld [vmem:[%s1 + $0xc] sm:$0xf]
  %v47 = vld [vmem:[%s1 + $0x10] sm:$0xf]
  %v48 = vld [vmem:[%s1 + $0x14] sm:$0xf]
  %v49 = vld [vmem:[%s1 + $0x18] sm:$0xf]
  %v50 = vld [vmem:[%s1 + $0x1c] sm:$0xf]
  %v51 = vld [vmem:[%s1 + $0x20] sm:$0xf]
  %v52 = vld [vmem:[%s1 + $0x24] sm:$0xf]
  %v53 = vld [vmem:[%s1 + $0x28] sm:$0xf]
  %v54 = vld [vmem:[%s1 + $0x2c] sm:$0xf]
  %v55 = vld [vmem:[%s1 + $0x30] sm:$0xf]
  %v56 = vld [vmem:[%s1 + $0x34] sm:$0xf]
  %v57 = vld [vmem:[%s1 + $0x38] sm:$0xf]
  %v58 = vld [vmem:[%s1 + $0x3c] sm:$0xf]
  %v59 = vld [vmem:[%s1 + $0x40] sm:$0xf]
  %v60 = vld [vmem:[%s1 + $0x44] sm:$0xf]
  %v61 = vld [vmem:[%s1 + $0x48] sm:$0xf]
  %v62 = vld [vmem:[%s1 + $0x4c] sm:$0xf]
  %v63 = vld [vmem:[%s1 + $0x50] sm:$0xf]
  %v64 = vld [vmem:[%s1 + $0x54] sm:$0xf]
  %v65 = vld [vmem:[%s1 + $0x58] sm:$0xf]
  %v66 = vld [vmem:[%s1 + $0x5c] sm:$0xf]
  %v67 = vld [vmem:[%s1 + $0x60] sm:$0xf]
  %v68 = vld [vmem:[%s1 + $0x64] sm:$0xf]
  %v69 = vld [vmem:[%s1 + $0x68] sm:$0xf]
  %v70 = vld [vmem:[%s1 + $0x6c] sm:$0xf]
  %v71 = vld [vmem:[%s1 + $0x70] sm:$0xf]
  %v72 = vld [vmem:[%s1 + $0x74] sm:$0xf]
  %v73 = vld [vmem:[%s1 + $0x78] sm:$0xf]
  %v74 = vld [vmem:[%s1 + $0x7c] sm:$0xf]
  %v75 = vld [vmem:[%s1 + $0x80] sm:$0xf]
  %v76 = vld [vmem:[%s1 + $0x84] sm:$0xf]
  %v77 = vld [vmem:[%s1 + $0x88] sm:$0xf]
  %v78 = vld [vmem:[%s1 + $0x8c] sm:$0xf]
  %v79 = vld [vmem:[%s1 + $0x90] sm:$0xf]
  %v80 = vld [vmem:[%s1 + $0x94] sm:$0xf]
  %v81 = vld [vmem:[%s1 + $0x98] sm:$0xf]
  %v82 = vld [vmem:[%s1 + $0x9c] sm:$0xf]
  %v83 = vld [vmem:[%s1 + $0xa0] sm:$0xf]
  %v84 = vld [vmem:[%s1 + $0xa4] sm:$0xf]
  %v85 = vld [vmem:[%s1 + $0xa8] sm:$0xf]
  %v86 = vld [vmem:[%s1 + $0xac] sm:$0xf]
  %v87 = vld [vmem:[%s1 + $0xb0] sm:$0xf]
  %v88 = vld [vmem:[%s1 + $0xb4] sm:$0xf]
  %v89 = vld [vmem:[%s1 + $0xb8] sm:$0xf]
  %v90 = vld [vmem:[%s1 + $0xbc] sm:$0xf]
  %v103 = vunpack.c.l.b16 %v25
  %v104 = vunpack.c.h.b16 %v25
  %v105 = vunpack.c.l.b16 %v26
  %v106 = vunpack.c.l.b16 %v27
  %v107 = vunpack.c.h.b16 %v27
  %v108 = vunpack.c.l.b16 %v28
  %v109 = vunpack.c.l.b16 %v29
  %v110 = vunpack.c.h.b16 %v29
  %v111 = vunpack.c.l.b16 %v30
  %v112 = vunpack.c.l.b16 %v31
  %v113 = vunpack.c.h.b16 %v31
  %v114 = vunpack.c.l.b16 %v32
  %v115 = vunpack.c.l.b16 %v33
  %v116 = vunpack.c.h.b16 %v33
  %v117 = vunpack.c.l.b16 %v34
  %v118 = vunpack.c.l.b16 %v35
  %v119 = vunpack.c.h.b16 %v35
  %v120 = vunpack.c.l.b16 %v36
  %v121 = vpack.c.b16 %v106, %v103
  %v122 = vpack.c.b16 %v107, %v104
  %v123 = vpack.c.b16 %v108, %v105
  %v124 = vpack.c.b16 %v112, %v109
  %v125 = vpack.c.b16 %v113, %v110
  %v126 = vpack.c.b16 %v114, %v111
  %v127 = vpack.c.b16 %v118, %v115
  %v128 = vpack.c.b16 %v119, %v116
  %v129 = vpack.c.b16 %v120, %v117
  %v187 = vunpack.c.l.b16 %v43
  %v188 = vunpack.c.l.b16 %v44
  %v189 = vunpack.c.l.b16 %v45
  %v190 = vunpack.c.l.b16 %v46
  %v191 = vunpack.c.l.b16 %v47
  %v192 = vunpack.c.l.b16 %v48
  %v193 = vunpack.c.l.b16 %v49
  %v194 = vunpack.c.l.b16 %v50
  %v195 = vunpack.c.l.b16 %v51
  %v196 = vunpack.c.l.b16 %v52
  %v197 = vunpack.c.l.b16 %v53
  %v198 = vunpack.c.l.b16 %v54
  %v199 = vunpack.c.l.b16 %v55
  %v200 = vunpack.c.l.b16 %v56
  %v201 = vunpack.c.l.b16 %v57
  %v202 = vunpack.c.l.b16 %v58
  %v203 = vunpack.c.l.b16 %v59
  %v204 = vunpack.c.l.b16 %v60
  %v205 = vunpack.c.l.b16 %v61
  %v206 = vunpack.c.l.b16 %v62
  %v207 = vunpack.c.l.b16 %v63
  %v208 = vunpack.c.l.b16 %v64
  %v209 = vunpack.c.l.b16 %v65
  %v210 = vunpack.c.l.b16 %v66
  %v211 = vunpack.c.l.b16 %v67
  %v212 = vunpack.c.l.b16 %v68
  %v213 = vunpack.c.l.b16 %v69
  %v214 = vunpack.c.l.b16 %v70
  %v215 = vunpack.c.l.b16 %v71
  %v216 = vunpack.c.l.b16 %v72
  %v217 = vunpack.c.l.b16 %v73
  %v218 = vunpack.c.l.b16 %v74
  %v219 = vunpack.c.l.b16 %v75
  %v220 = vunpack.c.l.b16 %v76
  %v221 = vunpack.c.l.b16 %v77
  %v222 = vunpack.c.l.b16 %v78
  %v223 = vunpack.c.l.b16 %v79
  %v224 = vunpack.c.l.b16 %v80
  %v225 = vunpack.c.l.b16 %v81
  %v226 = vunpack.c.l.b16 %v82
  %v227 = vunpack.c.l.b16 %v83
  %v228 = vunpack.c.l.b16 %v84
  %v229 = vunpack.c.l.b16 %v85
  %v230 = vunpack.c.l.b16 %v86
  %v231 = vunpack.c.l.b16 %v87
  %v232 = vunpack.c.l.b16 %v88
  %v233 = vunpack.c.l.b16 %v89
  %v234 = vunpack.c.l.b16 %v90
  %v235 = vpack.c.b16 %v188, %v187
  %v236 = vpack.c.b16 %v190, %v189
  %v237 = vpack.c.b16 %v192, %v191
  %v238 = vpack.c.b16 %v194, %v193
  %v239 = vpack.c.b16 %v196, %v195
  %v240 = vpack.c.b16 %v198, %v197
  %v241 = vpack.c.b16 %v200, %v199
  %v242 = vpack.c.b16 %v202, %v201
  %v243 = vpack.c.b16 %v204, %v203
  %v244 = vpack.c.b16 %v206, %v205
  %v245 = vpack.c.b16 %v208, %v207
  %v246 = vpack.c.b16 %v210, %v209
  %v247 = vpack.c.b16 %v212, %v211
  %v248 = vpack.c.b16 %v214, %v213
  %v249 = vpack.c.b16 %v216, %v215
  %v250 = vpack.c.b16 %v218, %v217
  %v251 = vpack.c.b16 %v220, %v219
  %v252 = vpack.c.b16 %v222, %v221
  %v253 = vpack.c.b16 %v224, %v223
  %v254 = vpack.c.b16 %v226, %v225
  %v255 = vpack.c.b16 %v228, %v227
  %v256 = vpack.c.b16 %v230, %v229
  %v257 = vpack.c.b16 %v232, %v231
  %v258 = vpack.c.b16 %v234, %v233
  %283 = vmatprep.subr.bf16.mxu0 0
  %284 = vmatpush1.bf16.msra.mxu0 %v235
  %285 = vmatprep.subr.bf16.mxu0 0
  %286 = vmatpush1.bf16.msra.mxu0 %v236
  %287 = vmatprep.subr.bf16.mxu0 0
  %288 = vmatpush1.bf16.msra.mxu0 %v237
  %289 = vmatprep.subr.bf16.mxu0 0
  %290 = vmatpush1.bf16.msra.mxu0 %v238
  %291 = vmatprep.subr.bf16.mxu0 0
  %292 = vmatpush1.bf16.msra.mxu0 %v239
  %293 = vmatprep.subr.bf16.mxu0 0
  %294 = vmatpush1.bf16.msra.mxu0 %v240
  %295 = vmatprep.subr.bf16.mxu0 0
  %296 = vmatpush1.bf16.msra.mxu0 %v241
  %297 = vmatprep.subr.bf16.mxu0 0
  %298 = vmatpush1.bf16.msra.mxu0 %v242
  %299 = vmatprep.subr.bf16.mxu0 0
  %300 = vmatpush1.bf16.msra.mxu0 %v243
  %301 = vmatprep.subr.bf16.mxu0 0
  %302 = vmatpush1.bf16.msra.mxu0 %v244
  %303 = vmatprep.subr.bf16.mxu0 0
  %304 = vmatpush1.bf16.msra.mxu0 %v245
  %305 = vmatprep.subr.bf16.mxu0 0
  %306 = vmatpush1.bf16.msra.mxu0 %v246
  %307 = vmatprep.subr.bf16.mxu0 0
  %308 = vmatpush1.bf16.msra.mxu0 %v247
  %309 = vmatprep.subr.bf16.mxu0 0
  %310 = vmatpush1.bf16.msra.mxu0 %v248
  %311 = vmatprep.subr.bf16.mxu0 0
  %312 = vmatpush1.bf16.msra.mxu0 %v249
  %313 = vmatprep.subr.bf16.mxu0 0
  %314 = vmatpush1.bf16.msra.mxu0 %v250
  %315 = vmatprep.mubr.bf16.mxu0 %v122
  %316 = vmatmul.mubr.bf16.gmra.mrb[0].mxu0 %v121
  %v317 = vpop.f32.mrb[0].mxu0
  %v318 = vadd.f32 0.0, %v317
  %v319 = vpop.f32.mrb[0].mxu0
  %v320 = vpop.f32.mrb[0].mxu0
  %v321 = vadd.f32 0.0, %v320
  %v322 = vpop.f32.mrb[0].mxu0
  %323 = vmatprep.mubr.bf16.mxu0 %v125
  %324 = vmatmul.mubr.bf16.gmra.mrb[0].mxu0 %v124
  %v325 = vpop.f32.mrb[0].mxu0
  %v326 = vadd.f32 0.0, %v325
  %v327 = vpop.f32.mrb[0].mxu0
  %v328 = vpop.f32.mrb[0].mxu0
  %v329 = vadd.f32 0.0, %v328
  %v330 = vpop.f32.mrb[0].mxu0
  %331 = vmatprep.mubr.bf16.mxu0 %v128
  %332 = vmatmul.mubr.bf16.gmra.mrb[0].mxu0 %v127
  %v333 = vpop.f32.mrb[0].mxu0
  %v334 = vadd.f32 0.0, %v333
  %v335 = vpop.f32.mrb[0].mxu0
  %v336 = vpop.f32.mrb[0].mxu0
  %v337 = vadd.f32 0.0, %v336
  %v338 = vpop.f32.mrb[0].mxu0
  %339 = vdwg.mxu0
  %340 = vmatprep.subr.bf16.mxu0 0
  %341 = vmatpush1.bf16.msra.mxu0 %v251
  %342 = vmatprep.subr.bf16.mxu0 0
  %343 = vmatpush1.bf16.msra.mxu0 %v252
  %344 = vmatprep.subr.bf16.mxu0 0
  %345 = vmatpush1.bf16.msra.mxu0 %v253
  %346 = vmatprep.subr.bf16.mxu0 0
  %347 = vmatpush1.bf16.msra.mxu0 %v254
  %348 = vmatprep.subr.bf16.mxu0 0
  %349 = vmatpush1.bf16.msra.mxu0 %v255
  %350 = vmatprep.subr.bf16.mxu0 0
  %351 = vmatpush1.bf16.msra.mxu0 %v256
  %352 = vmatprep.subr.bf16.mxu0 0
  %353 = vmatpush1.bf16.msra.mxu0 %v257
  %354 = vmatprep.subr.bf16.mxu0 0
  %355 = vmatpush1.bf16.msra.mxu0 %v258
  %356 = vmatprep.subr.bf16.mxu0 0
  %357 = vmatpush1.bf16.msra.mxu0 0
  %358 = vmatprep.subr.bf16.mxu0 0
  %359 = vmatpush1.bf16.msra.mxu0 0
  %360 = vmatprep.subr.bf16.mxu0 0
  %361 = vmatpush1.bf16.msra.mxu0 0
  %362 = vmatprep.subr.bf16.mxu0 0
  %363 = vmatpush1.bf16.msra.mxu0 0
  %364 = vmatprep.subr.bf16.mxu0 0
  %365 = vmatpush1.bf16.msra.mxu0 0
  %366 = vmatprep.subr.bf16.mxu0 0
  %367 = vmatpush1.bf16.msra.mxu0 0
  %368 = vmatprep.subr.bf16.mxu0 0
  %369 = vmatpush1.bf16.msra.mxu0 0
  %370 = vmatprep.subr.bf16.mxu0 0
  %371 = vmatpush1.bf16.msra.mxu0 0
  %372 = vmatprep.mubr.bf16.mxu0 0
  %373 = vmatmul.mubr.bf16.gmra.mrb[0].mxu0 %v123
  %v374 = vpop.f32.mrb[0].mxu0
  %v375 = vadd.f32 %v318, %v374
  %v376 = vpop.f32.mrb[0].mxu0
  %v377 = vpop.f32.mrb[0].mxu0
  %v378 = vadd.f32 %v321, %v377
  %v379 = vpop.f32.mrb[0].mxu0
  %380 = vmatprep.mubr.bf16.mxu0 0
  %381 = vmatmul.mubr.bf16.gmra.mrb[0].mxu0 %v126
  %v382 = vpop.f32.mrb[0].mxu0
  %v383 = vadd.f32 %v326, %v382
  %v384 = vpop.f32.mrb[0].mxu0
  %v385 = vpop.f32.mrb[0].mxu0
  %v386 = vadd.f32 %v329, %v385
  %v387 = vpop.f32.mrb[0].mxu0
  %388 = vmatprep.mubr.bf16.mxu0 0
  %389 = vmatmul.mubr.bf16.gmra.mrb[0].mxu0 %v129
  %v390 = vpop.f32.mrb[0].mxu0
  %v391 = vadd.f32 %v334, %v390
  %v392 = vpop.f32.mrb[0].mxu0
  %v393 = vpop.f32.mrb[0].mxu0
  %v394 = vadd.f32 %v337, %v393
  %v395 = vpop.f32.mrb[0].mxu0
  %396 = vdwg.mxu0
  %v397 = vadd.f32 %v37, %v375
  %v398 = vadd.f32 %v38, %v378
  %v399 = vadd.f32 %v39, %v383
  %v400 = vadd.f32 %v40, %v386
  %v401 = vadd.f32 %v41, %v391
  %v402 = vadd.f32 %v42, %v394
  %403 = vst [vmem:[#allocation2] sm:$0xff] %v397
  %404 = vst [vmem:[#allocation2 + $0x8] sm:$0xff] %v398
  %405 = vst [vmem:[#allocation2 + $0x10] sm:$0xff] %v399
  %406 = vst [vmem:[#allocation2 + $0x18] sm:$0xff] %v400
  %407 = vst [vmem:[#allocation2 + $0x20] sm:$0xff] %v401
  %408 = vst [vmem:[#allocation2 + $0x28] sm:$0xff] %v402
  // Predicated region
  $region18: #{conformer_encoder.26} parent=0 // pred_check
    %p409 = pneg %p15
  $region19: #{conformer_encoder.26} parent=0 // pred_check_branch
    %411 = sbr.rel (%p409) target = $region21
  $region20: #{conformer_encoder.26} parent=0 // pred_region
    %v412 = vld [vmem:[#allocation2] sm:$0xff]
    %v413 = vld [vmem:[#allocation2 + $0x8] sm:$0xff]
    %v414 = vld [vmem:[#allocation2 + $0x10] sm:$0xff]
    %v415 = vld [vmem:[#allocation2 + $0x18] sm:$0xff]
    %v416 = vld [vmem:[#allocation2 + $0x20] sm:$0xff]
    %v417 = vld [vmem:[#allocation2 + $0x28] sm:$0xff]
    %v418 = vld [vmem:[%s2] sm:$0x1]
    %v420 = vlaneseq
    %v421 = vshrl.u32 %v420, 7
    %v422 = vsub.s32 0, %v421
    %v423 = vrot.slane %v418, %v422
    %v425 = vadd.f32 %v412, %v423
    %v426 = vadd.f32 %v413, %v423
    %v427 = vadd.f32 %v414, %v423
    %v428 = vadd.f32 %v415, %v423
    %v429 = vadd.f32 %v416, %v423
    %v430 = vadd.f32 %v417, %v423
    %v431 = vmax.f32 %v425, 0.0
    %v432 = vmax.f32 %v426, 0.0
    %v433 = vmax.f32 %v427, 0.0
    %v434 = vmax.f32 %v428, 0.0
    %v435 = vmax.f32 %v429, 0.0
    %v436 = vmax.f32 %v430, 0.0
    %v437 = vpack.c.bf16 %v432, %v431
    %v438 = vpack.c.bf16 %v434, %v433
    %v439 = vpack.c.bf16 %v436, %v435
    %v443 = vunpack.c.l.b16 %v437
    %v444 = vunpack.c.h.b16 %v437
    %v445 = vunpack.c.l.b16 %v438
    %v446 = vunpack.c.h.b16 %v438
    %v447 = vunpack.c.l.b16 %v439
    %v448 = vunpack.c.h.b16 %v439
    %v449 = vpack.c.b16 %v443, %v443
    %v450 = vpack.c.b16 %v444, %v444
    %v451 = vpack.c.b16 %v445, %v445
    %v452 = vpack.c.b16 %v446, %v446
    %v453 = vpack.c.b16 %v447, %v447
    %v454 = vpack.c.b16 %v448, %v448
    %461 = vst [vmem:[%s3] sm:$0xf] %v449
    %462 = vst [vmem:[%s3 + $0x4] sm:$0xf] %v450
    %463 = vst [vmem:[%s3 + $0x8] sm:$0xf] %v451
    %464 = vst [vmem:[%s3 + $0xc] sm:$0xf] %v452
    %465 = vst [vmem:[%s3 + $0x10] sm:$0xf] %v453
    %466 = vst [vmem:[%s3 + $0x14] sm:$0xf] %v454
  $region21: #{conformer_encoder.26} parent=0 // pred_fallthru
    _
  // Predicated region
  $region22: #{conformer_encoder.26} parent=0 // pred_check
    _
  $region23: #{conformer_encoder.26} parent=0 // pred_check_branch
    %468 = sbr.rel (0) target = $region25
  $region24: #{conformer_encoder.26} parent=0 // pred_region
    _
  $region25: #{conformer_encoder.26} parent=0 // pred_fallthru
    _
  // Predicated region
  $region26: #{conformer_encoder.26} parent=0 // pred_check
    _
  $region27: #{conformer_encoder.26} parent=0 // pred_check_branch
    %470 = sbr.rel (0) target = $region29
  $region28: #{conformer_encoder.26} parent=0 // pred_region
    _
  $region29: #{conformer_encoder.26} parent=0 // pred_fallthru
    _

// kernel: conformer_encoder.27
$region0: #{conformer_encoder.27}
  #allocation0 [shape = 'u32[]', space=smem, size = 0x4, offset = 0x4, fixed_abs, tag = 'smem constant byte address 0x4 - core index']
  #allocation1 [shape = 'u32[144,128]{1,0:T(1,128)}', space=vmem, size = 0x12000, scoped, tag = 'internal scratch']
  #allocation2 [shape = 'f32[16,128]{1,0:T(8,128)}', space=vmem, size = 0x2000, scoped, tag = 'scratch operand']
  %s0 = inlined_call_operand.vmem [shape: bf16[16,128], index: 0, kind: input, shape index: {}]
  %s1 = inlined_call_operand.vmem [shape: bf16[128,128], index: 1, kind: input, shape index: {}]
  %s2 = inlined_call_operand.vmem [shape: f32[1,128], index: 2, kind: input, shape index: {}]
  %s3 = inlined_call_operand.vmem [shape: bf16[16,128], index: 3, kind: output, shape index: {}]
  %s4 = sld [smem:[#allocation0]]
  $region30: #{conformer_encoder.27} parent=0
    _
  %s6 = ssub.s32 1, %s4
  %s7 = scalar_select 0, %s6, %s4
  // Predicated region
  $region2: #{conformer_encoder.27} parent=0 // pred_check
    _
  $region3: #{conformer_encoder.27} parent=0 // pred_check_branch
    %9 = sbr.rel (0) target = $region5
  $region4: #{conformer_encoder.27} parent=0 // pred_region
    _
  $region5: #{conformer_encoder.27} parent=0 // pred_fallthru
    _
  // Predicated region
  $region6: #{conformer_encoder.27} parent=0 // pred_check
    _
  $region7: #{conformer_encoder.27} parent=0 // pred_check_branch
    %11 = sbr.rel (0) target = $region9
  $region8: #{conformer_encoder.27} parent=0 // pred_region
    _
  $region9: #{conformer_encoder.27} parent=0 // pred_fallthru
    _
  // Predicated region
  $region10: #{conformer_encoder.27} parent=0 // pred_check
    _
  $region11: #{conformer_encoder.27} parent=0 // pred_check_branch
    %13 = sbr.rel (0) target = $region13
  $region12: #{conformer_encoder.27} parent=0 // pred_region
    _
  $region13: #{conformer_encoder.27} parent=0 // pred_fallthru
    _
  %p15 = scmp.eq.s32.totalorder 0, 0
  // Predicated region
  $region14: #{conformer_encoder.27} parent=0 // pred_check
    %p16 = pneg %p15
  $region15: #{conformer_encoder.27} parent=0 // pred_check_branch
    %18 = sbr.rel (%p16) target = $region17
  $region16: #{conformer_encoder.27} parent=0 // pred_region
    %19 = vst [vmem:[#allocation2] sm:$0xff] 0.0
    %20 = vst [vmem:[#allocation2 + $0x8] sm:$0xff] 0.0
  $region17: #{conformer_encoder.27} parent=0 // pred_fallthru
    _
  %v21 = vld [vmem:[%s0] sm:$0xf]
  %v22 = vld [vmem:[%s0 + $0x4] sm:$0xf]
  %v23 = vld [vmem:[#allocation2] sm:$0xff]
  %v24 = vld [vmem:[#allocation2 + $0x8] sm:$0xff]
  %v25 = vld [vmem:[%s1] sm:$0xf]
  %v26 = vld [vmem:[%s1 + $0x4] sm:$0xf]
  %v27 = vld [vmem:[%s1 + $0x8] sm:$0xf]
  %v28 = vld [vmem:[%s1 + $0xc] sm:$0xf]
  %v29 = vld [vmem:[%s1 + $0x10] sm:$0xf]
  %v30 = vld [vmem:[%s1 + $0x14] sm:$0xf]
  %v31 = vld [vmem:[%s1 + $0x18] sm:$0xf]
  %v32 = vld [vmem:[%s1 + $0x1c] sm:$0xf]
  %v33 = vld [vmem:[%s1 + $0x20] sm:$0xf]
  %v34 = vld [vmem:[%s1 + $0x24] sm:$0xf]
  %v35 = vld [vmem:[%s1 + $0x28] sm:$0xf]
  %v36 = vld [vmem:[%s1 + $0x2c] sm:$0xf]
  %v37 = vld [vmem:[%s1 + $0x30] sm:$0xf]
  %v38 = vld [vmem:[%s1 + $0x34] sm:$0xf]
  %v39 = vld [vmem:[%s1 + $0x38] sm:$0xf]
  %v40 = vld [vmem:[%s1 + $0x3c] sm:$0xf]
  %v43 = vunpack.c.l.b16 %v21
  %v44 = vunpack.c.l.b16 %v22
  %v45 = vpack.c.b16 %v44, %v43
  %v63 = vunpack.c.l.b16 %v25
  %v64 = vunpack.c.l.b16 %v26
  %v65 = vunpack.c.l.b16 %v27
  %v66 = vunpack.c.l.b16 %v28
  %v67 = vunpack.c.l.b16 %v29
  %v68 = vunpack.c.l.b16 %v30
  %v69 = vunpack.c.l.b16 %v31
  %v70 = vunpack.c.l.b16 %v32
  %v71 = vunpack.c.l.b16 %v33
  %v72 = vunpack.c.l.b16 %v34
  %v73 = vunpack.c.l.b16 %v35
  %v74 = vunpack.c.l.b16 %v36
  %v75 = vunpack.c.l.b16 %v37
  %v76 = vunpack.c.l.b16 %v38
  %v77 = vunpack.c.l.b16 %v39
  %v78 = vunpack.c.l.b16 %v40
  %v79 = vpack.c.b16 %v64, %v63
  %v80 = vpack.c.b16 %v66, %v65
  %v81 = vpack.c.b16 %v68, %v67
  %v82 = vpack.c.b16 %v70, %v69
  %v83 = vpack.c.b16 %v72, %v71
  %v84 = vpack.c.b16 %v74, %v73
  %v85 = vpack.c.b16 %v76, %v75
  %v86 = vpack.c.b16 %v78, %v77
  %95 = vmatprep.subr.bf16.mxu0 0
  %96 = vmatpush1.bf16.msra.mxu0 %v79
  %97 = vmatprep.subr.bf16.mxu0 0
  %98 = vmatpush1.bf16.msra.mxu0 %v80
  %99 = vmatprep.subr.bf16.mxu0 0
  %100 = vmatpush1.bf16.msra.mxu0 %v81
  %101 = vmatprep.subr.bf16.mxu0 0
  %102 = vmatpush1.bf16.msra.mxu0 %v82
  %103 = vmatprep.subr.bf16.mxu0 0
  %104 = vmatpush1.bf16.msra.mxu0 %v83
  %105 = vmatprep.subr.bf16.mxu0 0
  %106 = vmatpush1.bf16.msra.mxu0 %v84
  %107 = vmatprep.subr.bf16.mxu0 0
  %108 = vmatpush1.bf16.msra.mxu0 %v85
  %109 = vmatprep.subr.bf16.mxu0 0
  %110 = vmatpush1.bf16.msra.mxu0 %v86
  %111 = vmatprep.subr.bf16.mxu0 0
  %112 = vmatpush1.bf16.msra.mxu0 0
  %113 = vmatprep.subr.bf16.mxu0 0
  %114 = vmatpush1.bf16.msra.mxu0 0
  %115 = vmatprep.subr.bf16.mxu0 0
  %116 = vmatpush1.bf16.msra.mxu0 0
  %117 = vmatprep.subr.bf16.mxu0 0
  %118 = vmatpush1.bf16.msra.mxu0 0
  %119 = vmatprep.subr.bf16.mxu0 0
  %120 = vmatpush1.bf16.msra.mxu0 0
  %121 = vmatprep.subr.bf16.mxu0 0
  %122 = vmatpush1.bf16.msra.mxu0 0
  %123 = vmatprep.subr.bf16.mxu0 0
  %124 = vmatpush1.bf16.msra.mxu0 0
  %125 = vmatprep.subr.bf16.mxu0 0
  %126 = vmatpush1.bf16.msra.mxu0 0
  %127 = vmatprep.mubr.bf16.mxu0 0
  %128 = vmatmul.mubr.bf16.gmra.mrb[0].mxu0 %v45
  %v129 = vpop.f32.mrb[0].mxu0
  %v130 = vadd.f32 0.0, %v129
  %v131 = vpop.f32.mrb[0].mxu0
  %v132 = vpop.f32.mrb[0].mxu0
  %v133 = vadd.f32 0.0, %v132
  %v134 = vpop.f32.mrb[0].mxu0
  %135 = vdwg.mxu0
  %v136 = vadd.f32 %v23, %v130
  %v137 = vadd.f32 %v24, %v133
  %138 = vst [vmem:[#allocation2] sm:$0xff] %v136
  %139 = vst [vmem:[#allocation2 + $0x8] sm:$0xff] %v137
  // Predicated region
  $region18: #{conformer_encoder.27} parent=0 // pred_check
    %p140 = pneg %p15
  $region19: #{conformer_encoder.27} parent=0 // pred_check_branch
    %142 = sbr.rel (%p140) target = $region21
  $region20: #{conformer_encoder.27} parent=0 // pred_region
    %v143 = vld [vmem:[#allocation2] sm:$0xff]
    %v144 = vld [vmem:[#allocation2 + $0x8] sm:$0xff]
    %v145 = vld [vmem:[%s2] sm:$0x1]
    %v147 = vlaneseq
    %v148 = vshrl.u32 %v147, 7
    %v149 = vsub.s32 0, %v148
    %v150 = vrot.slane %v145, %v149
    %v152 = vadd.f32 %v143, %v150
    %v153 = vadd.f32 %v144, %v150
    %v154 = vpack.c.bf16 %v153, %v152
    %v156 = vunpack.c.l.b16 %v154
    %v157 = vunpack.c.h.b16 %v154
    %v158 = vpack.c.b16 %v156, %v156
    %v159 = vpack.c.b16 %v157, %v157
    %162 = vst [vmem:[%s3] sm:$0xf] %v158
    %163 = vst [vmem:[%s3 + $0x4] sm:$0xf] %v159
  $region21: #{conformer_encoder.27} parent=0 // pred_fallthru
    _
  // Predicated region
  $region22: #{conformer_encoder.27} parent=0 // pred_check
    _
  $region23: #{conformer_encoder.27} parent=0 // pred_check_branch
    %165 = sbr.rel (0) target = $region25
  $region24: #{conformer_encoder.27} parent=0 // pred_region
    _
  $region25: #{conformer_encoder.27} parent=0 // pred_fallthru
    _
  // Predicated region
  $region26: #{conformer_encoder.27} parent=0 // pred_check
    _
  $region27: #{conformer_encoder.27} parent=0 // pred_check_branch
    %167 = sbr.rel (0) target = $region29
  $region28: #{conformer_encoder.27} parent=0 // pred_region
    _
  $region29: #{conformer_encoder.27} parent=0 // pred_fallthru
    _

// kernel: conformer_encoder.28
$region0: #{conformer_encoder.28}
  #allocation0 [shape = 'u32[]', space=smem, size = 0x4, offset = 0x4, fixed_abs, tag = 'smem constant byte address 0x4 - core index']
  #allocation1 [shape = 'u32[144,128]{1,0:T(1,128)}', space=vmem, size = 0x12000, scoped, tag = 'internal scratch']
  #allocation2 [shape = 'f32[16,128]{1,0:T(8,128)}', space=vmem, size = 0x2000, scoped, tag = 'scratch operand']
  %s0 = inlined_call_operand.vmem [shape: bf16[16,128], index: 0, kind: input, shape index: {}]
  %s1 = inlined_call_operand.vmem [shape: bf16[128,128], index: 1, kind: input, shape index: {}]
  %s2 = inlined_call_operand.vmem [shape: f32[1,128], index: 2, kind: input, shape index: {}]
  %s3 = inlined_call_operand.vmem [shape: f32[1,128], index: 3, kind: input, shape index: {}]
  %s4 = inlined_call_operand.vmem [shape: f32[1,128], index: 4, kind: input, shape index: {}]
  %s5 = inlined_call_operand.vmem [shape: bf16[16,128], index: 5, kind: output, shape index: {}]
  %s6 = sld [smem:[#allocation0]]
  $region38: #{conformer_encoder.28} parent=0
    _
  %s8 = ssub.s32 1, %s6
  %s9 = scalar_select 0, %s8, %s6
  // Predicated region
  $region2: #{conformer_encoder.28} parent=0 // pred_check
    _
  $region3: #{conformer_encoder.28} parent=0 // pred_check_branch
    %11 = sbr.rel (0) target = $region5
  $region4: #{conformer_encoder.28} parent=0 // pred_region
    _
  $region5: #{conformer_encoder.28} parent=0 // pred_fallthru
    _
  // Predicated region
  $region6: #{conformer_encoder.28} parent=0 // pred_check
    _
  $region7: #{conformer_encoder.28} parent=0 // pred_check_branch
    %13 = sbr.rel (0) target = $region9
  $region8: #{conformer_encoder.28} parent=0 // pred_region
    _
  $region9: #{conformer_encoder.28} parent=0 // pred_fallthru
    _
  // Predicated region
  $region10: #{conformer_encoder.28} parent=0 // pred_check
    _
  $region11: #{conformer_encoder.28} parent=0 // pred_check_branch
    %15 = sbr.rel (0) target = $region13
  $region12: #{conformer_encoder.28} parent=0 // pred_region
    _
  $region13: #{conformer_encoder.28} parent=0 // pred_fallthru
    _
  // Predicated region
  $region14: #{conformer_encoder.28} parent=0 // pred_check
    _
  $region15: #{conformer_encoder.28} parent=0 // pred_check_branch
    %17 = sbr.rel (0) target = $region17
  $region16: #{conformer_encoder.28} parent=0 // pred_region
    _
  $region17: #{conformer_encoder.28} parent=0 // pred_fallthru
    _
  // Predicated region
  $region18: #{conformer_encoder.28} parent=0 // pred_check
    _
  $region19: #{conformer_encoder.28} parent=0 // pred_check_branch
    %19 = sbr.rel (0) target = $region21
  $region20: #{conformer_encoder.28} parent=0 // pred_region
    _
  $region21: #{conformer_encoder.28} parent=0 // pred_fallthru
    _
  %p21 = scmp.eq.s32.totalorder 0, 0
  // Predicated region
  $region22: #{conformer_encoder.28} parent=0 // pred_check
    %p22 = pneg %p21
  $region23: #{conformer_encoder.28} parent=0 // pred_check_branch
    %24 = sbr.rel (%p22) target = $region25
  $region24: #{conformer_encoder.28} parent=0 // pred_region
    %25 = vst [vmem:[#allocation2] sm:$0xff] 0.0
    %26 = vst [vmem:[#allocation2 + $0x8] sm:$0xff] 0.0
  $region25: #{conformer_encoder.28} parent=0 // pred_fallthru
    _
  %v27 = vld [vmem:[%s0] sm:$0xf]
  %v28 = vld [vmem:[%s0 + $0x4] sm:$0xf]
  %v29 = vunpack.c.l.bf16 %v27
  %v30 = vunpack.c.l.bf16 %v28
  %31 = vadd.xlane.f32.xlu0 %v29
  %v32 = vpop.xlane.xlu0 %31
  %33 = vadd.xlane.f32.xlu0 %v30
  %v34 = vpop.xlane.xlu0 %33
  %v35 = vmul.f32 %v32, 0.03125
  %v36 = vmul.f32 %v34, 0.03125
  %v37 = vmul.f32 %v29, %v29
  %v38 = vmul.f32 %v30, %v30
  %39 = vadd.xlane.f32.xlu0 %v37
  %v40 = vpop.xlane.xlu0 %39
  %41 = vadd.xlane.f32.xlu0 %v38
  %v42 = vpop.xlane.xlu0 %41
  %v43 = vmul.f32 %v40, 0.03125
  %v44 = vmul.f32 %v42, 0.03125
  %v45 = vmul.f32 %v35, %v35
  %v46 = vmul.f32 %v36, %v36
  %v47 = vsub.f32 %v43, %v45
  %v48 = vsub.f32 %v44, %v46
  %v49 = vmax.f32 %v47, 0.0
  %v50 = vmax.f32 %v48, 0.0
  %v51 = vsub.f32 %v29, %v35
  %v52 = vsub.f32 %v30, %v36
  %v53 = vadd.f32 %v49, 1e-05
  %v54 = vadd.f32 %v50, 1e-05
  %v55 = vrsqrt.pop %v53
  %v56 = vrsqrt.pop %v54
  %v57 = vmul.f32 %v51, %v55
  %v58 = vmul.f32 %v52, %v56
  %v59 = vld [vmem:[%s3] sm:$0x1]
  %v61 = vlaneseq
  %v62 = vshrl.u32 %v61, 7
  %v63 = vsub.s32 0, %v62
  %v64 = vrot.slane %v59, %v63
  %v66 = vmul.f32 %v57, %v64
  %v67 = vmul.f32 %v58, %v64
  %v68 = vld [vmem:[%s4] sm:$0x1]
  %v70 = vlaneseq
  %v71 = vshrl.u32 %v70, 7
  %v72 = vsub.s32 0, %v71
  %v73 = vrot.slane %v68, %v72
  %v75 = vadd.f32 %v66, %v73
  %v76 = vadd.f32 %v67, %v73
  %v77 = vpack.c.bf16 %v76, %v75
  %v78 = vld [vmem:[#allocation2] sm:$0xff]
  %v79 = vld [vmem:[#allocation2 + $0x8] sm:$0xff]
  %v80 = vld [vmem:[%s1] sm:$0xf]
  %v81 = vld [vmem:[%s1 + $0x4] sm:$0xf]
  %v82 = vld [vmem:[%s1 + $0x8] sm:$0xf]
  %v83 = vld [vmem:[%s1 + $0xc] sm:$0xf]
  %v84 = vld [vmem:[%s1 + $0x10] sm:$0xf]
  %v85 = vld [vmem:[%s1 + $0x14] sm:$0xf]
  %v86 = vld [vmem:[%s1 + $0x18] sm:$0xf]
  %v87 = vld [vmem:[%s1 + $0x1c] sm:$0xf]
  %v88 = vld [vmem:[%s1 + $0x20] sm:$0xf]
  %v89 = vld [vmem:[%s1 + $0x24] sm:$0xf]
  %v90 = vld [vmem:[%s1 + $0x28] sm:$0xf]
  %v91 = vld [vmem:[%s1 + $0x2c] sm:$0xf]
  %v92 = vld [vmem:[%s1 + $0x30] sm:$0xf]
  %v93 = vld [vmem:[%s1 + $0x34] sm:$0xf]
  %v94 = vld [vmem:[%s1 + $0x38] sm:$0xf]
  %v95 = vld [vmem:[%s1 + $0x3c] sm:$0xf]
  %v112 = vunpack.c.l.b16 %v80
  %v113 = vunpack.c.l.b16 %v81
  %v114 = vunpack.c.l.b16 %v82
  %v115 = vunpack.c.l.b16 %v83
  %v116 = vunpack.c.l.b16 %v84
  %v117 = vunpack.c.l.b16 %v85
  %v118 = vunpack.c.l.b16 %v86
  %v119 = vunpack.c.l.b16 %v87
  %v120 = vunpack.c.l.b16 %v88
  %v121 = vunpack.c.l.b16 %v89
  %v122 = vunpack.c.l.b16 %v90
  %v123 = vunpack.c.l.b16 %v91
  %v124 = vunpack.c.l.b16 %v92
  %v125 = vunpack.c.l.b16 %v93
  %v126 = vunpack.c.l.b16 %v94
  %v127 = vunpack.c.l.b16 %v95
  %v128 = vpack.c.b16 %v113, %v112
  %v129 = vpack.c.b16 %v115, %v114
  %v130 = vpack.c.b16 %v117, %v116
  %v131 = vpack.c.b16 %v119, %v118
  %v132 = vpack.c.b16 %v121, %v120
  %v133 = vpack.c.b16 %v123, %v122
  %v134 = vpack.c.b16 %v125, %v124
  %v135 = vpack.c.b16 %v127, %v126
  %144 = vmatprep.subr.bf16.mxu0 0
  %145 = vmatpush1.bf16.msra.mxu0 %v128
  %146 = vmatprep.subr.bf16.mxu0 0
  %147 = vmatpush1.bf16.msra.mxu0 %v129
  %148 = vmatprep.subr.bf16.mxu0 0
  %149 = vmatpush1.bf16.msra.mxu0 %v130
  %150 = vmatprep.subr.bf16.mxu0 0
  %151 = vmatpush1.bf16.msra.mxu0 %v131
  %152 = vmatprep.subr.bf16.mxu0 0
  %153 = vmatpush1.bf16.msra.mxu0 %v132
  %154 = vmatprep.subr.bf16.mxu0 0
  %155 = vmatpush1.bf16.msra.mxu0 %v133
  %156 = vmatprep.subr.bf16.mxu0 0
  %157 = vmatpush1.bf16.msra.mxu0 %v134
  %158 = vmatprep.subr.bf16.mxu0 0
  %159 = vmatpush1.bf16.msra.mxu0 %v135
  %160 = vmatprep.subr.bf16.mxu0 0
  %161 = vmatpush1.bf16.msra.mxu0 0
  %162 = vmatprep.subr.bf16.mxu0 0
  %163 = vmatpush1.bf16.msra.mxu0 0
  %164 = vmatprep.subr.bf16.mxu0 0
  %165 = vmatpush1.bf16.msra.mxu0 0
  %166 = vmatprep.subr.bf16.mxu0 0
  %167 = vmatpush1.bf16.msra.mxu0 0
  %168 = vmatprep.subr.bf16.mxu0 0
  %169 = vmatpush1.bf16.msra.mxu0 0
  %170 = vmatprep.subr.bf16.mxu0 0
  %171 = vmatpush1.bf16.msra.mxu0 0
  %172 = vmatprep.subr.bf16.mxu0 0
  %173 = vmatpush1.bf16.msra.mxu0 0
  %174 = vmatprep.subr.bf16.mxu0 0
  %175 = vmatpush1.bf16.msra.mxu0 0
  %176 = vmatprep.mubr.bf16.mxu0 0
  %177 = vmatmul.mubr.bf16.gmra.mrb[0].mxu0 %v77
  %v178 = vpop.f32.mrb[0].mxu0
  %v179 = vadd.f32 0.0, %v178
  %v180 = vpop.f32.mrb[0].mxu0
  %v181 = vpop.f32.mrb[0].mxu0
  %v182 = vadd.f32 0.0, %v181
  %v183 = vpop.f32.mrb[0].mxu0
  %184 = vdwg.mxu0
  %v185 = vadd.f32 %v78, %v179
  %v186 = vadd.f32 %v79, %v182
  %187 = vst [vmem:[#allocation2] sm:$0xff] %v185
  %188 = vst [vmem:[#allocation2 + $0x8] sm:$0xff] %v186
  // Predicated region
  $region26: #{conformer_encoder.28} parent=0 // pred_check
    %p189 = pneg %p21
  $region27: #{conformer_encoder.28} parent=0 // pred_check_branch
    %191 = sbr.rel (%p189) target = $region29
  $region28: #{conformer_encoder.28} parent=0 // pred_region
    %v192 = vld [vmem:[#allocation2] sm:$0xff]
    %v193 = vld [vmem:[#allocation2 + $0x8] sm:$0xff]
    %v194 = vld [vmem:[%s2] sm:$0x1]
    %v196 = vlaneseq
    %v197 = vshrl.u32 %v196, 7
    %v198 = vsub.s32 0, %v197
    %v199 = vrot.slane %v194, %v198
    %v201 = vadd.f32 %v192, %v199
    %v202 = vadd.f32 %v193, %v199
    %v203 = vxor.u32 %v201, 2147483648
    %v204 = vxor.u32 %v202, 2147483648
    %v205 = vmul.f32 %v203, 1.442695
    %v206 = vpow.pop %v205
    %v207 = vmul.f32 %v204, 1.442695
    %v208 = vpow.pop %v207
    %v209 = vadd.f32 %v206, 1.0
    %v210 = vadd.f32 %v208, 1.0
    %v211 = vrcp.pop %v209
    %v212 = vmul.f32 1.0, %v211
    %v213 = vrcp.pop %v210
    %v214 = vmul.f32 1.0, %v213
    %v215 = vmul.f32 %v201, %v212
    %v216 = vmul.f32 %v202, %v214
    %v217 = vpack.c.bf16 %v216, %v215
    %v219 = vunpack.c.l.b16 %v217
    %v220 = vunpack.c.h.b16 %v217
    %v221 = vpack.c.b16 %v219, %v219
    %v222 = vpack.c.b16 %v220, %v220
    %225 = vst [vmem:[%s5] sm:$0xf] %v221
    %226 = vst [vmem:[%s5 + $0x4] sm:$0xf] %v222
  $region29: #{conformer_encoder.28} parent=0 // pred_fallthru
    _
  // Predicated region
  $region30: #{conformer_encoder.28} parent=0 // pred_check
    _
  $region31: #{conformer_encoder.28} parent=0 // pred_check_branch
    %228 = sbr.rel (0) target = $region33
  $region32: #{conformer_encoder.28} parent=0 // pred_region
    _
  $region33: #{conformer_encoder.28} parent=0 // pred_fallthru
    _
  // Predicated region
  $region34: #{conformer_encoder.28} parent=0 // pred_check
    _
  $region35: #{conformer_encoder.28} parent=0 // pred_check_branch
    %230 = sbr.rel (0) target = $region37
  $region36: #{conformer_encoder.28} parent=0 // pred_region
    _
  $region37: #{conformer_encoder.28} parent=0 // pred_fallthru
    _

// kernel: conformer_encoder.29
$region0: #{conformer_encoder.29}
  #allocation0 [shape = 'u32[]', space=smem, size = 0x4, offset = 0x4, fixed_abs, tag = 'smem constant byte address 0x4 - core index']
  #allocation1 [shape = 'u32[144,128]{1,0:T(1,128)}', space=vmem, size = 0x12000, scoped, tag = 'internal scratch']
  #allocation2 [shape = 'f32[16,128]{1,0:T(8,128)}', space=vmem, size = 0x2000, scoped, tag = 'scratch operand']
  %s0 = inlined_call_operand.vmem [shape: bf16[16,128], index: 0, kind: input, shape index: {}]
  %s1 = inlined_call_operand.vmem [shape: bf16[128,128], index: 1, kind: input, shape index: {}]
  %s2 = inlined_call_operand.vmem [shape: f32[1,128], index: 2, kind: input, shape index: {}]
  %s3 = inlined_call_operand.vmem [shape: bf16[16,128], index: 3, kind: input, shape index: {}]
  %s4 = inlined_call_operand.vmem [shape: bf16[16,128], index: 4, kind: output, shape index: {}]
  %s5 = sld [smem:[#allocation0]]
  $region34: #{conformer_encoder.29} parent=0
    _
  %s7 = ssub.s32 1, %s5
  %s8 = scalar_select 0, %s7, %s5
  // Predicated region
  $region2: #{conformer_encoder.29} parent=0 // pred_check
    _
  $region3: #{conformer_encoder.29} parent=0 // pred_check_branch
    %10 = sbr.rel (0) target = $region5
  $region4: #{conformer_encoder.29} parent=0 // pred_region
    _
  $region5: #{conformer_encoder.29} parent=0 // pred_fallthru
    _
  // Predicated region
  $region6: #{conformer_encoder.29} parent=0 // pred_check
    _
  $region7: #{conformer_encoder.29} parent=0 // pred_check_branch
    %12 = sbr.rel (0) target = $region9
  $region8: #{conformer_encoder.29} parent=0 // pred_region
    _
  $region9: #{conformer_encoder.29} parent=0 // pred_fallthru
    _
  // Predicated region
  $region10: #{conformer_encoder.29} parent=0 // pred_check
    _
  $region11: #{conformer_encoder.29} parent=0 // pred_check_branch
    %14 = sbr.rel (0) target = $region13
  $region12: #{conformer_encoder.29} parent=0 // pred_region
    _
  $region13: #{conformer_encoder.29} parent=0 // pred_fallthru
    _
  // Predicated region
  $region14: #{conformer_encoder.29} parent=0 // pred_check
    _
  $region15: #{conformer_encoder.29} parent=0 // pred_check_branch
    %16 = sbr.rel (0) target = $region17
  $region16: #{conformer_encoder.29} parent=0 // pred_region
    _
  $region17: #{conformer_encoder.29} parent=0 // pred_fallthru
    _
  %p18 = scmp.eq.s32.totalorder 0, 0
  // Predicated region
  $region18: #{conformer_encoder.29} parent=0 // pred_check
    %p19 = pneg %p18
  $region19: #{conformer_encoder.29} parent=0 // pred_check_branch
    %21 = sbr.rel (%p19) target = $region21
  $region20: #{conformer_encoder.29} parent=0 // pred_region
    %22 = vst [vmem:[#allocation2] sm:$0xff] 0.0
    %23 = vst [vmem:[#allocation2 + $0x8] sm:$0xff] 0.0
  $region21: #{conformer_encoder.29} parent=0 // pred_fallthru
    _
  %v24 = vld [vmem:[%s0] sm:$0xf]
  %v25 = vld [vmem:[%s0 + $0x4] sm:$0xf]
  %v26 = vld [vmem:[#allocation2] sm:$0xff]
  %v27 = vld [vmem:[#allocation2 + $0x8] sm:$0xff]
  %v28 = vld [vmem:[%s1] sm:$0xf]
  %v29 = vld [vmem:[%s1 + $0x4] sm:$0xf]
  %v30 = vld [vmem:[%s1 + $0x8] sm:$0xf]
  %v31 = vld [vmem:[%s1 + $0xc] sm:$0xf]
  %v32 = vld [vmem:[%s1 + $0x10] sm:$0xf]
  %v33 = vld [vmem:[%s1 + $0x14] sm:$0xf]
  %v34 = vld [vmem:[%s1 + $0x18] sm:$0xf]
  %v35 = vld [vmem:[%s1 + $0x1c] sm:$0xf]
  %v36 = vld [vmem:[%s1 + $0x20] sm:$0xf]
  %v37 = vld [vmem:[%s1 + $0x24] sm:$0xf]
  %v38 = vld [vmem:[%s1 + $0x28] sm:$0xf]
  %v39 = vld [vmem:[%s1 + $0x2c] sm:$0xf]
  %v40 = vld [vmem:[%s1 + $0x30] sm:$0xf]
  %v41 = vld [vmem:[%s1 + $0x34] sm:$0xf]
  %v42 = vld [vmem:[%s1 + $0x38] sm:$0xf]
  %v43 = vld [vmem:[%s1 + $0x3c] sm:$0xf]
  %v46 = vunpack.c.l.b16 %v24
  %v47 = vunpack.c.l.b16 %v25
  %v48 = vpack.c.b16 %v47, %v46
  %v66 = vunpack.c.l.b16 %v28
  %v67 = vunpack.c.l.b16 %v29
  %v68 = vunpack.c.l.b16 %v30
  %v69 = vunpack.c.l.b16 %v31
  %v70 = vunpack.c.l.b16 %v32
  %v71 = vunpack.c.l.b16 %v33
  %v72 = vunpack.c.l.b16 %v34
  %v73 = vunpack.c.l.b16 %v35
  %v74 = vunpack.c.l.b16 %v36
  %v75 = vunpack.c.l.b16 %v37
  %v76 = vunpack.c.l.b16 %v38
  %v77 = vunpack.c.l.b16 %v39
  %v78 = vunpack.c.l.b16 %v40
  %v79 = vunpack.c.l.b16 %v41
  %v80 = vunpack.c.l.b16 %v42
  %v81 = vunpack.c.l.b16 %v43
  %v82 = vpack.c.b16 %v67, %v66
  %v83 = vpack.c.b16 %v69, %v68
  %v84 = vpack.c.b16 %v71, %v70
  %v85 = vpack.c.b16 %v73, %v72
  %v86 = vpack.c.b16 %v75, %v74
  %v87 = vpack.c.b16 %v77, %v76
  %v88 = vpack.c.b16 %v79, %v78
  %v89 = vpack.c.b16 %v81, %v80
  %98 = vmatprep.subr.bf16.mxu0 0
  %99 = vmatpush1.bf16.msra.mxu0 %v82
  %100 = vmatprep.subr.bf16.mxu0 0
  %101 = vmatpush1.bf16.msra.mxu0 %v83
  %102 = vmatprep.subr.bf16.mxu0 0
  %103 = vmatpush1.bf16.msra.mxu0 %v84
  %104 = vmatprep.subr.bf16.mxu0 0
  %105 = vmatpush1.bf16.msra.mxu0 %v85
  %106 = vmatprep.subr.bf16.mxu0 0
  %107 = vmatpush1.bf16.msra.mxu0 %v86
  %108 = vmatprep.subr.bf16.mxu0 0
  %109 = vmatpush1.bf16.msra.mxu0 %v87
  %110 = vmatprep.subr.bf16.mxu0 0
  %111 = vmatpush1.bf16.msra.mxu0 %v88
  %112 = vmatprep.subr.bf16.mxu0 0
  %113 = vmatpush1.bf16.msra.mxu0 %v89
  %114 = vmatprep.subr.bf16.mxu0 0
  %115 = vmatpush1.bf16.msra.mxu0 0
  %116 = vmatprep.subr.bf16.mxu0 0
  %117 = vmatpush1.bf16.msra.mxu0 0
  %118 = vmatprep.subr.bf16.mxu0 0
  %119 = vmatpush1.bf16.msra.mxu0 0
  %120 = vmatprep.subr.bf16.mxu0 0
  %121 = vmatpush1.bf16.msra.mxu0 0
  %122 = vmatprep.subr.bf16.mxu0 0
  %123 = vmatpush1.bf16.msra.mxu0 0
  %124 = vmatprep.subr.bf16.mxu0 0
  %125 = vmatpush1.bf16.msra.mxu0 0
  %126 = vmatprep.subr.bf16.mxu0 0
  %127 = vmatpush1.bf16.msra.mxu0 0
  %128 = vmatprep.subr.bf16.mxu0 0
  %129 = vmatpush1.bf16.msra.mxu0 0
  %130 = vmatprep.mubr.bf16.mxu0 0
  %131 = vmatmul.mubr.bf16.gmra.mrb[0].mxu0 %v48
  %v132 = vpop.f32.mrb[0].mxu0
  %v133 = vadd.f32 0.0, %v132
  %v134 = vpop.f32.mrb[0].mxu0
  %v135 = vpop.f32.mrb[0].mxu0
  %v136 = vadd.f32 0.0, %v135
  %v137 = vpop.f32.mrb[0].mxu0
  %138 = vdwg.mxu0
  %v139 = vadd.f32 %v26, %v133
  %v140 = vadd.f32 %v27, %v136
  %141 = vst [vmem:[#allocation2] sm:$0xff] %v139
  %142 = vst [vmem:[#allocation2 + $0x8] sm:$0xff] %v140
  // Predicated region
  $region22: #{conformer_encoder.29} parent=0 // pred_check
    %p143 = pneg %p18
  $region23: #{conformer_encoder.29} parent=0 // pred_check_branch
    %145 = sbr.rel (%p143) target = $region25
  $region24: #{conformer_encoder.29} parent=0 // pred_region
    %v146 = vld [vmem:[#allocation2] sm:$0xff]
    %v147 = vld [vmem:[#allocation2 + $0x8] sm:$0xff]
    %v148 = vld [vmem:[%s2] sm:$0x1]
    %v150 = vlaneseq
    %v151 = vshrl.u32 %v150, 7
    %v152 = vsub.s32 0, %v151
    %v153 = vrot.slane %v148, %v152
    %v155 = vadd.f32 %v146, %v153
    %v156 = vadd.f32 %v147, %v153
    %v157 = vmul.f32 %v155, 0.5
    %v158 = vmul.f32 %v156, 0.5
    %v159 = vld [vmem:[%s3] sm:$0xf]
    %v160 = vld [vmem:[%s3 + $0x4] sm:$0xf]
    %v161 = vunpack.c.l.bf16 %v159
    %v162 = vunpack.c.l.bf16 %v160
    %v163 = vadd.f32 %v157, %v161
    %v164 = vadd.f32 %v158, %v162
    %v165 = vpack.c.bf16 %v164, %v163
    %v167 = vunpack.c.l.b16 %v165
    %v168 = vunpack.c.h.b16 %v165
    %v169 = vpack.c.b16 %v167, %v167
    %v170 = vpack.c.b16 %v168, %v168
    %173 = vst [vmem:[%s4] sm:$0xf] %v169
    %174 = vst [vmem:[%s4 + $0x4] sm:$0xf] %v170
  $region25: #{conformer_encoder.29} parent=0 // pred_fallthru
    _
  // Predicated region
  $region26: #{conformer_encoder.29} parent=0 // pred_check
    _
  $region27: #{conformer_encoder.29} parent=0 // pred_check_branch
    %176 = sbr.rel (0) target = $region29
  $region28: #{conformer_encoder.29} parent=0 // pred_region
    _
  $region29: #{conformer_encoder.29} parent=0 // pred_fallthru
    _
  // Predicated region
  $region30: #{conformer_encoder.29} parent=0 // pred_check
    _
  $region31: #{conformer_encoder.29} parent=0 // pred_check_branch
    %178 = sbr.rel (0) target = $region33
  $region32: #{conformer_encoder.29} parent=0 // pred_region
    _
  $region33: #{conformer_encoder.29} parent=0 // pred_fallthru
    _

// kernel: conformer_encoder.30
$region0: #{conformer_encoder.30}
  #allocation0 [shape = 'u32[]', space=smem, size = 0x4, offset = 0x4, fixed_abs, tag = 'smem constant byte address 0x4 - core index']
  #allocation1 [shape = 'u32[144,128]{1,0:T(1,128)}', space=vmem, size = 0x12000, scoped, tag = 'internal scratch']
  #allocation2 [shape = 'f32[16,128]{1,0:T(8,128)}', space=vmem, size = 0x2000, scoped, tag = 'scratch operand']
  %s0 = inlined_call_operand.vmem [shape: bf16[16,128], index: 0, kind: input, shape index: {}]
  %s1 = inlined_call_operand.vmem [shape: bf16[128,128], index: 1, kind: input, shape index: {}]
  %s2 = inlined_call_operand.vmem [shape: f32[1,128], index: 2, kind: input, shape index: {}]
  %s3 = inlined_call_operand.vmem [shape: f32[1,128], index: 3, kind: input, shape index: {}]
  %s4 = inlined_call_operand.vmem [shape: f32[1,128], index: 4, kind: input, shape index: {}]
  %s5 = inlined_call_operand.vmem [shape: bf16[16,128], index: 5, kind: output, shape index: {}]
  %s6 = sld [smem:[#allocation0]]
  $region38: #{conformer_encoder.30} parent=0
    _
  %s8 = ssub.s32 1, %s6
  %s9 = scalar_select 0, %s8, %s6
  // Predicated region
  $region2: #{conformer_encoder.30} parent=0 // pred_check
    _
  $region3: #{conformer_encoder.30} parent=0 // pred_check_branch
    %11 = sbr.rel (0) target = $region5
  $region4: #{conformer_encoder.30} parent=0 // pred_region
    _
  $region5: #{conformer_encoder.30} parent=0 // pred_fallthru
    _
  // Predicated region
  $region6: #{conformer_encoder.30} parent=0 // pred_check
    _
  $region7: #{conformer_encoder.30} parent=0 // pred_check_branch
    %13 = sbr.rel (0) target = $region9
  $region8: #{conformer_encoder.30} parent=0 // pred_region
    _
  $region9: #{conformer_encoder.30} parent=0 // pred_fallthru
    _
  // Predicated region
  $region10: #{conformer_encoder.30} parent=0 // pred_check
    _
  $region11: #{conformer_encoder.30} parent=0 // pred_check_branch
    %15 = sbr.rel (0) target = $region13
  $region12: #{conformer_encoder.30} parent=0 // pred_region
    _
  $region13: #{conformer_encoder.30} parent=0 // pred_fallthru
    _
  // Predicated region
  $region14: #{conformer_encoder.30} parent=0 // pred_check
    _
  $region15: #{conformer_encoder.30} parent=0 // pred_check_branch
    %17 = sbr.rel (0) target = $region17
  $region16: #{conformer_encoder.30} parent=0 // pred_region
    _
  $region17: #{conformer_encoder.30} parent=0 // pred_fallthru
    _
  // Predicated region
  $region18: #{conformer_encoder.30} parent=0 // pred_check
    _
  $region19: #{conformer_encoder.30} parent=0 // pred_check_branch
    %19 = sbr.rel (0) target = $region21
  $region20: #{conformer_encoder.30} parent=0 // pred_region
    _
  $region21: #{conformer_encoder.30} parent=0 // pred_fallthru
    _
  %p21 = scmp.eq.s32.totalorder 0, 0
  // Predicated region
  $region22: #{conformer_encoder.30} parent=0 // pred_check
    %p22 = pneg %p21
  $region23: #{conformer_encoder.30} parent=0 // pred_check_branch
    %24 = sbr.rel (%p22) target = $region25
  $region24: #{conformer_encoder.30} parent=0 // pred_region
    %25 = vst [vmem:[#allocation2] sm:$0xff] 0.0
    %26 = vst [vmem:[#allocation2 + $0x8] sm:$0xff] 0.0
  $region25: #{conformer_encoder.30} parent=0 // pred_fallthru
    _
  %v27 = vld [vmem:[%s0] sm:$0xf]
  %v28 = vld [vmem:[%s0 + $0x4] sm:$0xf]
  %v29 = vunpack.c.l.bf16 %v27
  %v30 = vunpack.c.l.bf16 %v28
  %31 = vadd.xlane.f32.xlu0 %v29
  %v32 = vpop.xlane.xlu0 %31
  %33 = vadd.xlane.f32.xlu0 %v30
  %v34 = vpop.xlane.xlu0 %33
  %v35 = vmul.f32 %v32, 0.03125
  %v36 = vmul.f32 %v34, 0.03125
  %v37 = vmul.f32 %v29, %v29
  %v38 = vmul.f32 %v30, %v30
  %39 = vadd.xlane.f32.xlu0 %v37
  %v40 = vpop.xlane.xlu0 %39
  %41 = vadd.xlane.f32.xlu0 %v38
  %v42 = vpop.xlane.xlu0 %41
  %v43 = vmul.f32 %v40, 0.03125
  %v44 = vmul.f32 %v42, 0.03125
  %v45 = vmul.f32 %v35, %v35
  %v46 = vmul.f32 %v36, %v36
  %v47 = vsub.f32 %v43, %v45
  %v48 = vsub.f32 %v44, %v46
  %v49 = vmax.f32 %v47, 0.0
  %v50 = vmax.f32 %v48, 0.0
  %v51 = vsub.f32 %v29, %v35
  %v52 = vsub.f32 %v30, %v36
  %v53 = vadd.f32 %v49, 1e-05
  %v54 = vadd.f32 %v50, 1e-05
  %v55 = vrsqrt.pop %v53
  %v56 = vrsqrt.pop %v54
  %v57 = vmul.f32 %v51, %v55
  %v58 = vmul.f32 %v52, %v56
  %v59 = vld [vmem:[%s3] sm:$0x1]
  %v61 = vlaneseq
  %v62 = vshrl.u32 %v61, 7
  %v63 = vsub.s32 0, %v62
  %v64 = vrot.slane %v59, %v63
  %v66 = vmul.f32 %v57, %v64
  %v67 = vmul.f32 %v58, %v64
  %v68 = vld [vmem:[%s4] sm:$0x1]
  %v70 = vlaneseq
  %v71 = vshrl.u32 %v70, 7
  %v72 = vsub.s32 0, %v71
  %v73 = vrot.slane %v68, %v72
  %v75 = vadd.f32 %v66, %v73
  %v76 = vadd.f32 %v67, %v73
  %v77 = vpack.c.bf16 %v76, %v75
  %v78 = vld [vmem:[#allocation2] sm:$0xff]
  %v79 = vld [vmem:[#allocation2 + $0x8] sm:$0xff]
  %v80 = vld [vmem:[%s1] sm:$0xf]
  %v81 = vld [vmem:[%s1 + $0x4] sm:$0xf]
  %v82 = vld [vmem:[%s1 + $0x8] sm:$0xf]
  %v83 = vld [vmem:[%s1 + $0xc] sm:$0xf]
  %v84 = vld [vmem:[%s1 + $0x10] sm:$0xf]
  %v85 = vld [vmem:[%s1 + $0x14] sm:$0xf]
  %v86 = vld [vmem:[%s1 + $0x18] sm:$0xf]
  %v87 = vld [vmem:[%s1 + $0x1c] sm:$0xf]
  %v88 = vld [vmem:[%s1 + $0x20] sm:$0xf]
  %v89 = vld [vmem:[%s1 + $0x24] sm:$0xf]
  %v90 = vld [vmem:[%s1 + $0x28] sm:$0xf]
  %v91 = vld [vmem:[%s1 + $0x2c] sm:$0xf]
  %v92 = vld [vmem:[%s1 + $0x30] sm:$0xf]
  %v93 = vld [vmem:[%s1 + $0x34] sm:$0xf]
  %v94 = vld [vmem:[%s1 + $0x38] sm:$0xf]
  %v95 = vld [vmem:[%s1 + $0x3c] sm:$0xf]
  %v112 = vunpack.c.l.b16 %v80
  %v113 = vunpack.c.l.b16 %v81
  %v114 = vunpack.c.l.b16 %v82
  %v115 = vunpack.c.l.b16 %v83
  %v116 = vunpack.c.l.b16 %v84
  %v117 = vunpack.c.l.b16 %v85
  %v118 = vunpack.c.l.b16 %v86
  %v119 = vunpack.c.l.b16 %v87
  %v120 = vunpack.c.l.b16 %v88
  %v121 = vunpack.c.l.b16 %v89
  %v122 = vunpack.c.l.b16 %v90
  %v123 = vunpack.c.l.b16 %v91
  %v124 = vunpack.c.l.b16 %v92
  %v125 = vunpack.c.l.b16 %v93
  %v126 = vunpack.c.l.b16 %v94
  %v127 = vunpack.c.l.b16 %v95
  %v128 = vpack.c.b16 %v113, %v112
  %v129 = vpack.c.b16 %v115, %v114
  %v130 = vpack.c.b16 %v117, %v116
  %v131 = vpack.c.b16 %v119, %v118
  %v132 = vpack.c.b16 %v121, %v120
  %v133 = vpack.c.b16 %v123, %v122
  %v134 = vpack.c.b16 %v125, %v124
  %v135 = vpack.c.b16 %v127, %v126
  %144 = vmatprep.subr.bf16.mxu0 0
  %145 = vmatpush1.bf16.msra.mxu0 %v128
  %146 = vmatprep.subr.bf16.mxu0 0
  %147 = vmatpush1.bf16.msra.mxu0 %v129
  %148 = vmatprep.subr.bf16.mxu0 0
  %149 = vmatpush1.bf16.msra.mxu0 %v130
  %150 = vmatprep.subr.bf16.mxu0 0
  %151 = vmatpush1.bf16.msra.mxu0 %v131
  %152 = vmatprep.subr.bf16.mxu0 0
  %153 = vmatpush1.bf16.msra.mxu0 %v132
  %154 = vmatprep.subr.bf16.mxu0 0
  %155 = vmatpush1.bf16.msra.mxu0 %v133
  %156 = vmatprep.subr.bf16.mxu0 0
  %157 = vmatpush1.bf16.msra.mxu0 %v134
  %158 = vmatprep.subr.bf16.mxu0 0
  %159 = vmatpush1.bf16.msra.mxu0 %v135
  %160 = vmatprep.subr.bf16.mxu0 0
  %161 = vmatpush1.bf16.msra.mxu0 0
  %162 = vmatprep.subr.bf16.mxu0 0
  %163 = vmatpush1.bf16.msra.mxu0 0
  %164 = vmatprep.subr.bf16.mxu0 0
  %165 = vmatpush1.bf16.msra.mxu0 0
  %166 = vmatprep.subr.bf16.mxu0 0
  %167 = vmatpush1.bf16.msra.mxu0 0
  %168 = vmatprep.subr.bf16.mxu0 0
  %169 = vmatpush1.bf16.msra.mxu0 0
  %170 = vmatprep.subr.bf16.mxu0 0
  %171 = vmatpush1.bf16.msra.mxu0 0
  %172 = vmatprep.subr.bf16.mxu0 0
  %173 = vmatpush1.bf16.msra.mxu0 0
  %174 = vmatprep.subr.bf16.mxu0 0
  %175 = vmatpush1.bf16.msra.mxu0 0
  %176 = vmatprep.mubr.bf16.mxu0 0
  %177 = vmatmul.mubr.bf16.gmra.mrb[0].mxu0 %v77
  %v178 = vpop.f32.mrb[0].mxu0
  %v179 = vadd.f32 0.0, %v178
  %v180 = vpop.f32.mrb[0].mxu0
  %v181 = vpop.f32.mrb[0].mxu0
  %v182 = vadd.f32 0.0, %v181
  %v183 = vpop.f32.mrb[0].mxu0
  %184 = vdwg.mxu0
  %v185 = vadd.f32 %v78, %v179
  %v186 = vadd.f32 %v79, %v182
  %187 = vst [vmem:[#allocation2] sm:$0xff] %v185
  %188 = vst [vmem:[#allocation2 + $0x8] sm:$0xff] %v186
  // Predicated region
  $region26: #{conformer_encoder.30} parent=0 // pred_check
    %p189 = pneg %p21
  $region27: #{conformer_encoder.30} parent=0 // pred_check_branch
    %191 = sbr.rel (%p189) target = $region29
  $region28: #{conformer_encoder.30} parent=0 // pred_region
    %v192 = vld [vmem:[#allocation2] sm:$0xff]
    %v193 = vld [vmem:[#allocation2 + $0x8] sm:$0xff]
    %v194 = vld [vmem:[%s2] sm:$0x1]
    %v196 = vlaneseq
    %v197 = vshrl.u32 %v196, 7
    %v198 = vsub.s32 0, %v197
    %v199 = vrot.slane %v194, %v198
    %v201 = vadd.f32 %v192, %v199
    %v202 = vadd.f32 %v193, %v199
    %v203 = vpack.c.bf16 %v202, %v201
    %v205 = vunpack.c.l.b16 %v203
    %v206 = vunpack.c.h.b16 %v203
    %v207 = vpack.c.b16 %v205, %v205
    %v208 = vpack.c.b16 %v206, %v206
    %211 = vst [vmem:[%s5] sm:$0xf] %v207
    %212 = vst [vmem:[%s5 + $0x4] sm:$0xf] %v208
  $region29: #{conformer_encoder.30} parent=0 // pred_fallthru
    _
  // Predicated region
  $region30: #{conformer_encoder.30} parent=0 // pred_check
    _
  $region31: #{conformer_encoder.30} parent=0 // pred_check_branch
    %214 = sbr.rel (0) target = $region33
  $region32: #{conformer_encoder.30} parent=0 // pred_region
    _
  $region33: #{conformer_encoder.30} parent=0 // pred_fallthru
    _
  // Predicated region
  $region34: #{conformer_encoder.30} parent=0 // pred_check
    _
  $region35: #{conformer_encoder.30} parent=0 // pred_check_branch
    %216 = sbr.rel (0) target = $region37
  $region36: #{conformer_encoder.30} parent=0 // pred_region
    _
  $region37: #{conformer_encoder.30} parent=0 // pred_fallthru
    _

// kernel: conformer_encoder.31
$region0: #{conformer_encoder.31}
  #allocation0 [shape = 'u32[]', space=smem, size = 0x4, offset = 0x4, fixed_abs, tag = 'smem constant byte address 0x4 - core index']
  #allocation1 [shape = 'u32[144,128]{1,0:T(1,128)}', space=vmem, size = 0x12000, scoped, tag = 'internal scratch']
  #allocation2 [shape = 'f32[8,128]{1,0:T(8,128)}', space=vmem, size = 0x1000, scoped, tag = 'scratch operand']
  %s0 = inlined_call_operand.vmem [shape: bf16[8,128], index: 0, kind: input, shape index: {}]
  %s1 = inlined_call_operand.vmem [shape: bf16[128,128], index: 1, kind: input, shape index: {}]
  %s2 = inlined_call_operand.vmem [shape: f32[1,128], index: 2, kind: input, shape index: {}]
  %s3 = inlined_call_operand.vmem [shape: f32[8,128], index: 3, kind: output, shape index: {}]
  %s4 = sld [smem:[#allocation0]]
  $region30: #{conformer_encoder.31} parent=0
    _
  %s6 = ssub.s32 1, %s4
  %s7 = scalar_select 0, %s6, %s4
  // Predicated region
  $region2: #{conformer_encoder.31} parent=0 // pred_check
    _
  $region3: #{conformer_encoder.31} parent=0 // pred_check_branch
    %9 = sbr.rel (0) target = $region5
  $region4: #{conformer_encoder.31} parent=0 // pred_region
    _
  $region5: #{conformer_encoder.31} parent=0 // pred_fallthru
    _
  // Predicated region
  $region6: #{conformer_encoder.31} parent=0 // pred_check
    _
  $region7: #{conformer_encoder.31} parent=0 // pred_check_branch
    %11 = sbr.rel (0) target = $region9
  $region8: #{conformer_encoder.31} parent=0 // pred_region
    _
  $region9: #{conformer_encoder.31} parent=0 // pred_fallthru
    _
  // Predicated region
  $region10: #{conformer_encoder.31} parent=0 // pred_check
    _
  $region11: #{conformer_encoder.31} parent=0 // pred_check_branch
    %13 = sbr.rel (0) target = $region13
  $region12: #{conformer_encoder.31} parent=0 // pred_region
    _
  $region13: #{conformer_encoder.31} parent=0 // pred_fallthru
    _
  %p15 = scmp.eq.s32.totalorder 0, 0
  // Predicated region
  $region14: #{conformer_encoder.31} parent=0 // pred_check
    %p16 = pneg %p15
  $region15: #{conformer_encoder.31} parent=0 // pred_check_branch
    %18 = sbr.rel (%p16) target = $region17
  $region16: #{conformer_encoder.31} parent=0 // pred_region
    %19 = vst [vmem:[#allocation2] sm:$0xff] 0.0
  $region17: #{conformer_encoder.31} parent=0 // pred_fallthru
    _
  %v20 = vld [vmem:[%s0] sm:$0xf]
  %v21 = vld [vmem:[#allocation2] sm:$0xff]
  %v22 = vld [vmem:[%s1] sm:$0xf]
  %v23 = vld [vmem:[%s1 + $0x4] sm:$0xf]
  %v24 = vld [vmem:[%s1 + $0x8] sm:$0xf]
  %v25 = vld [vmem:[%s1 + $0xc] sm:$0xf]
  %v26 = vld [vmem:[%s1 + $0x10] sm:$0xf]
  %v27 = vld [vmem:[%s1 + $0x14] sm:$0xf]
  %v28 = vld [vmem:[%s1 + $0x18] sm:$0xf]
  %v29 = vld [vmem:[%s1 + $0x1c] sm:$0xf]
  %v30 = vld [vmem:[%s1 + $0x20] sm:$0xf]
  %v31 = vld [vmem:[%s1 + $0x24] sm:$0xf]
  %v32 = vld [vmem:[%s1 + $0x28] sm:$0xf]
  %v33 = vld [vmem:[%s1 + $0x2c] sm:$0xf]
  %v34 = vld [vmem:[%s1 + $0x30] sm:$0xf]
  %v35 = vld [vmem:[%s1 + $0x34] sm:$0xf]
  %v36 = vld [vmem:[%s1 + $0x38] sm:$0xf]
  %v37 = vld [vmem:[%s1 + $0x3c] sm:$0xf]
  %v54 = vunpack.c.l.b16 %v22
  %v55 = vunpack.c.l.b16 %v23
  %v56 = vunpack.c.l.b16 %v24
  %v57 = vunpack.c.l.b16 %v25
  %v58 = vunpack.c.l.b16 %v26
  %v59 = vunpack.c.l.b16 %v27
  %v60 = vunpack.c.l.b16 %v28
  %v61 = vunpack.c.l.b16 %v29
  %v62 = vunpack.c.l.b16 %v30
  %v63 = vunpack.c.l.b16 %v31
  %v64 = vunpack.c.l.b16 %v32
  %v65 = vunpack.c.l.b16 %v33
  %v66 = vunpack.c.l.b16 %v34
  %v67 = vunpack.c.l.b16 %v35
  %v68 = vunpack.c.l.b16 %v36
  %v69 = vunpack.c.l.b16 %v37
  %v70 = vpack.c.b16 %v55, %v54
  %v71 = vpack.c.b16 %v57, %v56
  %v72 = vpack.c.b16 %v59, %v58
  %v73 = vpack.c.b16 %v61, %v60
  %v74 = vpack.c.b16 %v63, %v62
  %v75 = vpack.c.b16 %v65, %v64
  %v76 = vpack.c.b16 %v67, %v66
  %v77 = vpack.c.b16 %v69, %v68
  %86 = vmatprep.subr.bf16.mxu0 0
  %87 = vmatpush1.bf16.msra.mxu0 %v70
  %88 = vmatprep.subr.bf16.mxu0 0
  %89 = vmatpush1.bf16.msra.mxu0 %v71
  %90 = vmatprep.subr.bf16.mxu0 0
  %91 = vmatpush1.bf16.msra.mxu0 %v72
  %92 = vmatprep.subr.bf16.mxu0 0
  %93 = vmatpush1.bf16.msra.mxu0 %v73
  %94 = vmatprep.subr.bf16.mxu0 0
  %95 = vmatpush1.bf16.msra.mxu0 %v74
  %96 = vmatprep.subr.bf16.mxu0 0
  %97 = vmatpush1.bf16.msra.mxu0 %v75
  %98 = vmatprep.subr.bf16.mxu0 0
  %99 = vmatpush1.bf16.msra.mxu0 %v76
  %100 = vmatprep.subr.bf16.mxu0 0
  %101 = vmatpush1.bf16.msra.mxu0 %v77
  %102 = vmatprep.subr.bf16.mxu0 0
  %103 = vmatpush1.bf16.msra.mxu0 0
  %104 = vmatprep.subr.bf16.mxu0 0
  %105 = vmatpush1.bf16.msra.mxu0 0
  %106 = vmatprep.subr.bf16.mxu0 0
  %107 = vmatpush1.bf16.msra.mxu0 0
  %108 = vmatprep.subr.bf16.mxu0 0
  %109 = vmatpush1.bf16.msra.mxu0 0
  %110 = vmatprep.subr.bf16.mxu0 0
  %111 = vmatpush1.bf16.msra.mxu0 0
  %112 = vmatprep.subr.bf16.mxu0 0
  %113 = vmatpush1.bf16.msra.mxu0 0
  %114 = vmatprep.subr.bf16.mxu0 0
  %115 = vmatpush1.bf16.msra.mxu0 0
  %116 = vmatprep.subr.bf16.mxu0 0
  %117 = vmatpush1.bf16.msra.mxu0 0
  %118 = vmatprep.mubr.bf16.mxu0 0
  %119 = vmatmul.mubr.bf16.gmra.mrb[0].mxu0 %v20
  %v120 = vpop.f32.mrb[0].mxu0
  %v121 = vadd.f32 0.0, %v120
  %v122 = vpop.f32.mrb[0].mxu0
  %v123 = vpop.f32.mrb[0].mxu0
  %v124 = vpop.f32.mrb[0].mxu0
  %125 = vdwg.mxu0
  %v126 = vadd.f32 %v21, %v121
  %127 = vst [vmem:[#allocation2] sm:$0xff] %v126
  // Predicated region
  $region18: #{conformer_encoder.31} parent=0 // pred_check
    %p128 = pneg %p15
  $region19: #{conformer_encoder.31} parent=0 // pred_check_branch
    %130 = sbr.rel (%p128) target = $region21
  $region20: #{conformer_encoder.31} parent=0 // pred_region
    %v131 = vld [vmem:[#allocation2] sm:$0xff]
    %v132 = vld [vmem:[%s2] sm:$0x1]
    %v134 = vlaneseq
    %v135 = vshrl.u32 %v134, 7
    %v136 = vsub.s32 0, %v135
    %v137 = vrot.slane %v132, %v136
    %v139 = vadd.f32 %v131, %v137
    %140 = vst [vmem:[%s3] sm:$0xff] %v139
  $region21: #{conformer_encoder.31} parent=0 // pred_fallthru
    _
  // Predicated region
  $region22: #{conformer_encoder.31} parent=0 // pred_check
    _
  $region23: #{conformer_encoder.31} parent=0 // pred_check_branch
    %142 = sbr.rel (0) target = $region25
  $region24: #{conformer_encoder.31} parent=0 // pred_region
    _
  $region25: #{conformer_encoder.31} parent=0 // pred_fallthru
    _
  // Predicated region
  $region26: #{conformer_encoder.31} parent=0 // pred_check
    _
  $region27: #{conformer_encoder.31} parent=0 // pred_check_branch
    %144 = sbr.rel (0) target = $region29
  $region28: #{conformer_encoder.31} parent=0 // pred_region
    _
  $region29: #{conformer_encoder.31} parent=0 // pred_fallthru
    _

// kernel: conformer_encoder.33
$region0: #{conformer_encoder.33}
  #allocation0 [shape = 'u32[]', space=smem, size = 0x4, offset = 0x4, fixed_abs, tag = 'smem constant byte address 0x4 - core index']
  #allocation1 [shape = 'u32[144,128]{1,0:T(1,128)}', space=vmem, size = 0x12000, scoped, tag = 'internal scratch']
  #allocation2 [shape = 'f32[16,128]{1,0:T(8,128)}', space=vmem, size = 0x2000, scoped, tag = 'scratch operand']
  %s0 = inlined_call_operand.vmem [shape: bf16[16,128], index: 0, kind: input, shape index: {}]
  %s1 = inlined_call_operand.vmem [shape: bf16[128,128], index: 1, kind: input, shape index: {}]
  %s2 = inlined_call_operand.vmem [shape: f32[1,128], index: 2, kind: input, shape index: {}]
  %s3 = inlined_call_operand.vmem [shape: bf16[16,128], index: 3, kind: input, shape index: {}]
  %s4 = inlined_call_operand.vmem [shape: bf16[16,128], index: 4, kind: output, shape index: {}]
  %s5 = sld [smem:[#allocation0]]
  $region34: #{conformer_encoder.33} parent=0
    _
  %s7 = ssub.s32 1, %s5
  %s8 = scalar_select 0, %s7, %s5
  // Predicated region
  $region2: #{conformer_encoder.33} parent=0 // pred_check
    _
  $region3: #{conformer_encoder.33} parent=0 // pred_check_branch
    %10 = sbr.rel (0) target = $region5
  $region4: #{conformer_encoder.33} parent=0 // pred_region
    _
  $region5: #{conformer_encoder.33} parent=0 // pred_fallthru
    _
  // Predicated region
  $region6: #{conformer_encoder.33} parent=0 // pred_check
    _
  $region7: #{conformer_encoder.33} parent=0 // pred_check_branch
    %12 = sbr.rel (0) target = $region9
  $region8: #{conformer_encoder.33} parent=0 // pred_region
    _
  $region9: #{conformer_encoder.33} parent=0 // pred_fallthru
    _
  // Predicated region
  $region10: #{conformer_encoder.33} parent=0 // pred_check
    _
  $region11: #{conformer_encoder.33} parent=0 // pred_check_branch
    %14 = sbr.rel (0) target = $region13
  $region12: #{conformer_encoder.33} parent=0 // pred_region
    _
  $region13: #{conformer_encoder.33} parent=0 // pred_fallthru
    _
  // Predicated region
  $region14: #{conformer_encoder.33} parent=0 // pred_check
    _
  $region15: #{conformer_encoder.33} parent=0 // pred_check_branch
    %16 = sbr.rel (0) target = $region17
  $region16: #{conformer_encoder.33} parent=0 // pred_region
    _
  $region17: #{conformer_encoder.33} parent=0 // pred_fallthru
    _
  %p18 = scmp.eq.s32.totalorder 0, 0
  // Predicated region
  $region18: #{conformer_encoder.33} parent=0 // pred_check
    %p19 = pneg %p18
  $region19: #{conformer_encoder.33} parent=0 // pred_check_branch
    %21 = sbr.rel (%p19) target = $region21
  $region20: #{conformer_encoder.33} parent=0 // pred_region
    %22 = vst [vmem:[#allocation2] sm:$0xff] 0.0
    %23 = vst [vmem:[#allocation2 + $0x8] sm:$0xff] 0.0
  $region21: #{conformer_encoder.33} parent=0 // pred_fallthru
    _
  %v24 = vld [vmem:[%s0] sm:$0xf]
  %v25 = vld [vmem:[%s0 + $0x4] sm:$0xf]
  %v26 = vld [vmem:[#allocation2] sm:$0xff]
  %v27 = vld [vmem:[#allocation2 + $0x8] sm:$0xff]
  %v28 = vld [vmem:[%s1] sm:$0xf]
  %v29 = vld [vmem:[%s1 + $0x4] sm:$0xf]
  %v30 = vld [vmem:[%s1 + $0x8] sm:$0xf]
  %v31 = vld [vmem:[%s1 + $0xc] sm:$0xf]
  %v32 = vld [vmem:[%s1 + $0x10] sm:$0xf]
  %v33 = vld [vmem:[%s1 + $0x14] sm:$0xf]
  %v34 = vld [vmem:[%s1 + $0x18] sm:$0xf]
  %v35 = vld [vmem:[%s1 + $0x1c] sm:$0xf]
  %v36 = vld [vmem:[%s1 + $0x20] sm:$0xf]
  %v37 = vld [vmem:[%s1 + $0x24] sm:$0xf]
  %v38 = vld [vmem:[%s1 + $0x28] sm:$0xf]
  %v39 = vld [vmem:[%s1 + $0x2c] sm:$0xf]
  %v40 = vld [vmem:[%s1 + $0x30] sm:$0xf]
  %v41 = vld [vmem:[%s1 + $0x34] sm:$0xf]
  %v42 = vld [vmem:[%s1 + $0x38] sm:$0xf]
  %v43 = vld [vmem:[%s1 + $0x3c] sm:$0xf]
  %v46 = vunpack.c.l.b16 %v24
  %v47 = vunpack.c.l.b16 %v25
  %v48 = vpack.c.b16 %v47, %v46
  %v66 = vunpack.c.l.b16 %v28
  %v67 = vunpack.c.l.b16 %v29
  %v68 = vunpack.c.l.b16 %v30
  %v69 = vunpack.c.l.b16 %v31
  %v70 = vunpack.c.l.b16 %v32
  %v71 = vunpack.c.l.b16 %v33
  %v72 = vunpack.c.l.b16 %v34
  %v73 = vunpack.c.l.b16 %v35
  %v74 = vunpack.c.l.b16 %v36
  %v75 = vunpack.c.l.b16 %v37
  %v76 = vunpack.c.l.b16 %v38
  %v77 = vunpack.c.l.b16 %v39
  %v78 = vunpack.c.l.b16 %v40
  %v79 = vunpack.c.l.b16 %v41
  %v80 = vunpack.c.l.b16 %v42
  %v81 = vunpack.c.l.b16 %v43
  %v82 = vpack.c.b16 %v67, %v66
  %v83 = vpack.c.b16 %v69, %v68
  %v84 = vpack.c.b16 %v71, %v70
  %v85 = vpack.c.b16 %v73, %v72
  %v86 = vpack.c.b16 %v75, %v74
  %v87 = vpack.c.b16 %v77, %v76
  %v88 = vpack.c.b16 %v79, %v78
  %v89 = vpack.c.b16 %v81, %v80
  %98 = vmatprep.subr.bf16.mxu0 0
  %99 = vmatpush1.bf16.msra.mxu0 %v82
  %100 = vmatprep.subr.bf16.mxu0 0
  %101 = vmatpush1.bf16.msra.mxu0 %v83
  %102 = vmatprep.subr.bf16.mxu0 0
  %103 = vmatpush1.bf16.msra.mxu0 %v84
  %104 = vmatprep.subr.bf16.mxu0 0
  %105 = vmatpush1.bf16.msra.mxu0 %v85
  %106 = vmatprep.subr.bf16.mxu0 0
  %107 = vmatpush1.bf16.msra.mxu0 %v86
  %108 = vmatprep.subr.bf16.mxu0 0
  %109 = vmatpush1.bf16.msra.mxu0 %v87
  %110 = vmatprep.subr.bf16.mxu0 0
  %111 = vmatpush1.bf16.msra.mxu0 %v88
  %112 = vmatprep.subr.bf16.mxu0 0
  %113 = vmatpush1.bf16.msra.mxu0 %v89
  %114 = vmatprep.subr.bf16.mxu0 0
  %115 = vmatpush1.bf16.msra.mxu0 0
  %116 = vmatprep.subr.bf16.mxu0 0
  %117 = vmatpush1.bf16.msra.mxu0 0
  %118 = vmatprep.subr.bf16.mxu0 0
  %119 = vmatpush1.bf16.msra.mxu0 0
  %120 = vmatprep.subr.bf16.mxu0 0
  %121 = vmatpush1.bf16.msra.mxu0 0
  %122 = vmatprep.subr.bf16.mxu0 0
  %123 = vmatpush1.bf16.msra.mxu0 0
  %124 = vmatprep.subr.bf16.mxu0 0
  %125 = vmatpush1.bf16.msra.mxu0 0
  %126 = vmatprep.subr.bf16.mxu0 0
  %127 = vmatpush1.bf16.msra.mxu0 0
  %128 = vmatprep.subr.bf16.mxu0 0
  %129 = vmatpush1.bf16.msra.mxu0 0
  %130 = vmatprep.mubr.bf16.mxu0 0
  %131 = vmatmul.mubr.bf16.gmra.mrb[0].mxu0 %v48
  %v132 = vpop.f32.mrb[0].mxu0
  %v133 = vadd.f32 0.0, %v132
  %v134 = vpop.f32.mrb[0].mxu0
  %v135 = vpop.f32.mrb[0].mxu0
  %v136 = vadd.f32 0.0, %v135
  %v137 = vpop.f32.mrb[0].mxu0
  %138 = vdwg.mxu0
  %v139 = vadd.f32 %v26, %v133
  %v140 = vadd.f32 %v27, %v136
  %141 = vst [vmem:[#allocation2] sm:$0xff] %v139
  %142 = vst [vmem:[#allocation2 + $0x8] sm:$0xff] %v140
  // Predicated region
  $region22: #{conformer_encoder.33} parent=0 // pred_check
    %p143 = pneg %p18
  $region23: #{conformer_encoder.33} parent=0 // pred_check_branch
    %145 = sbr.rel (%p143) target = $region25
  $region24: #{conformer_encoder.33} parent=0 // pred_region
    %v146 = vld [vmem:[#allocation2] sm:$0xff]
    %v147 = vld [vmem:[#allocation2 + $0x8] sm:$0xff]
    %v148 = vld [vmem:[%s2] sm:$0x1]
    %v150 = vlaneseq
    %v151 = vshrl.u32 %v150, 7
    %v152 = vsub.s32 0, %v151
    %v153 = vrot.slane %v148, %v152
    %v155 = vadd.f32 %v146, %v153
    %v156 = vadd.f32 %v147, %v153
    %v157 = vld [vmem:[%s3] sm:$0xf]
    %v158 = vld [vmem:[%s3 + $0x4] sm:$0xf]
    %v159 = vunpack.c.l.bf16 %v157
    %v160 = vunpack.c.l.bf16 %v158
    %v161 = vadd.f32 %v155, %v159
    %v162 = vadd.f32 %v156, %v160
    %v163 = vpack.c.bf16 %v162, %v161
    %v165 = vunpack.c.l.b16 %v163
    %v166 = vunpack.c.h.b16 %v163
    %v167 = vpack.c.b16 %v165, %v165
    %v168 = vpack.c.b16 %v166, %v166
    %171 = vst [vmem:[%s4] sm:$0xf] %v167
    %172 = vst [vmem:[%s4 + $0x4] sm:$0xf] %v168
  $region25: #{conformer_encoder.33} parent=0 // pred_fallthru
    _
  // Predicated region
  $region26: #{conformer_encoder.33} parent=0 // pred_check
    _
  $region27: #{conformer_encoder.33} parent=0 // pred_check_branch
    %174 = sbr.rel (0) target = $region29
  $region28: #{conformer_encoder.33} parent=0 // pred_region
    _
  $region29: #{conformer_encoder.33} parent=0 // pred_fallthru
    _
  // Predicated region
  $region30: #{conformer_encoder.33} parent=0 // pred_check
    _
  $region31: #{conformer_encoder.33} parent=0 // pred_check_branch
    %176 = sbr.rel (0) target = $region33
  $region32: #{conformer_encoder.33} parent=0 // pred_region
    _
  $region33: #{conformer_encoder.33} parent=0 // pred_fallthru
    _

// kernel: conformer_encoder.32
$region0: #{conformer_encoder.32}
  #allocation0 [shape = 'u32[]', space=smem, size = 0x4, offset = 0x4, fixed_abs, tag = 'smem constant byte address 0x4 - core index']
  #allocation1 [shape = 'u32[144,128]{1,0:T(1,128)}', space=vmem, size = 0x12000, scoped, tag = 'internal scratch']
  %s0 = inlined_call_operand.vmem [shape: bf16[2,7,32], index: 0, kind: input, shape index: {}]
  %s1 = inlined_call_operand.vmem [shape: bf16[2,7,32], index: 1, kind: input, shape index: {}]
  %s2 = inlined_call_operand.vmem [shape: bf16[2,7,32], index: 2, kind: input, shape index: {}]
  %s3 = inlined_call_operand.vmem [shape: f32[1,32], index: 3, kind: input, shape index: {}]
  %s4 = inlined_call_operand.vmem [shape: bf16[2,4,7,7], index: 4, kind: input, shape index: {}]
  %s5 = inlined_call_operand.vmem [shape: bf16[2,7,32], index: 5, kind: output, shape index: {}]
  %s6 = sld [smem:[#allocation0]]
  $region53: #{conformer_encoder.32} parent=0
    _
  %s8 = ssub.s32 1, %s6
  %s9 = scalar_select 0, %s8, %s6
  loop: start=0, step=1, limit=4
  $region2: #{conformer_encoder.32} parent=0 // loop_pre_header
    _
  $region3: #{conformer_encoder.32} parent=0 // loop_header
    %s11 = sphi 0, %s15
    %p12 = scmp.ge.s32.totalorder %s11, 4
    %s21 = sphi 0, %s23
    %s24 = sphi 0, %s21
    %s25 = sphi 0, %s24
    %s41 = sphi 0, %s25
    %s47 = sphi 0, %s49
    %s50 = sphi 0, %s47
    %s51 = sphi 0, %s50
    %s67 = sphi 0, %s51
    %s73 = sphi 0, %s75
    %s76 = sphi 0, %s73
    %s77 = sphi 0, %s76
    %s93 = sphi 0, %s77
    %s97 = sphi 0, %s97
    %s99 = sphi 0, %s97
    %s100 = sphi 0, %s99
    %s114 = sphi 0, %s100
    %s120 = sphi 0, %s122
    %s123 = sphi 0, %s120
    %s124 = sphi 0, %s123
    %s140 = sphi 0, %s124
    %s146 = sphi 0, %s148
    %s149 = sphi 0, %s146
    %s150 = sphi 0, %s149
    %s166 = sphi 0, %s150
  $region4: #{conformer_encoder.32} parent=0 // loop_header_branch
    %14 = sbr.rel (%p12) target = $region8
  $region5: #{conformer_encoder.32} parent=0 // loop_body
    %s16 = ssub.s32 %s11, 1
    %s17 = ssub.s32 %s11, 2
    %s18 = sadd.s32 %s11, 1
    %s19 = ssub.s32 %s11, %s18
    %p20 = scmp.eq.s32.totalorder %s19, 0
    %s22 = sadd.s32 %s21, 1
    %s23 = scalar_select %p20, %s21, %s22
    %p26 = pneg %p20
    %p27 = scmp.eq.s32.totalorder %s11, 1
    %p28 = por %p26, %p27
    %p29 = scmp.ne.s32.totalorder %s21, %s24
    %p30 = scmp.eq.s32.totalorder %s11, 0
    %p31 = por %p29, %p30
    %p32 = scmp.ne.s32.totalorder %s21, %s24
    %p33 = scmp.eq.s32.totalorder %s16, 1
    %p34 = por %p32, %p33
    %p35 = scmp.ne.s32.totalorder %s24, %s25
    %p36 = scmp.eq.s32.totalorder %s16, 0
    %p37 = por %p35, %p36
    %p38 = scmp.ne.s32.totalorder %s24, %s25
    %p39 = scmp.eq.s32.totalorder %s17, 1
    %p40 = por %p38, %p39
    %p42 = scmp.ne.s32.totalorder %s25, %s41
    %p43 = scmp.eq.s32.totalorder %s17, 0
    %p44 = por %p42, %p43
    %s45 = ssub.s32 %s11, %s18
    %p46 = scmp.eq.s32.totalorder %s45, 0
    %s48 = sadd.s32 %s47, 1
    %s49 = scalar_select %p46, %s47, %s48
    %p52 = pneg %p46
    %p53 = scmp.eq.s32.totalorder %s11, 1
    %p54 = por %p52, %p53
    %p55 = scmp.ne.s32.totalorder %s47, %s50
    %p56 = scmp.eq.s32.totalorder %s11, 0
    %p57 = por %p55, %p56
    %p58 = scmp.ne.s32.totalorder %s47, %s50
    %p59 = scmp.eq.s32.totalorder %s16, 1
    %p60 = por %p58, %p59
    %p61 = scmp.ne.s32.totalorder %s50, %s51
    %p62 = scmp.eq.s32.totalorder %s16, 0
    %p63 = por %p61, %p62
    %p64 = scmp.ne.s32.totalorder %s50, %s51
    %p65 = scmp.eq.s32.totalorder %s17, 1
    %p66 = por %p64, %p65
    %p68 = scmp.ne.s32.totalorder %s51, %s67
    %p69 = scmp.eq.s32.totalorder %s17, 0
    %p70 = por %p68, %p69
    %s71 = ssub.s32 %s11, %s18
    %p72 = scmp.eq.s32.totalorder %s71, 0
    %s74 = sadd.s32 %s73, 1
    %s75 = scalar_select %p72, %s73, %s74
    %p78 = pneg %p72
    %p79 = scmp.eq.s32.totalorder %s11, 1
    %p80 = por %p78, %p79
    %p81 = scmp.ne.s32.totalorder %s73, %s76
    %p82 = scmp.eq.s32.totalorder %s11, 0
    %p83 = por %p81, %p82
    %p84 = scmp.ne.s32.totalorder %s73, %s76
    %p85 = scmp.eq.s32.totalorder %s16, 1
    %p86 = por %p84, %p85
    %p87 = scmp.ne.s32.totalorder %s76, %s77
    %p88 = scmp.eq.s32.totalorder %s16, 0
    %p89 = por %p87, %p88
    %p90 = scmp.ne.s32.totalorder %s76, %s77
    %p91 = scmp.eq.s32.totalorder %s17, 1
    %p92 = por %p90, %p91
    %p94 = scmp.ne.s32.totalorder %s77, %s93
    %p95 = scmp.eq.s32.totalorder %s17, 0
    %p96 = por %p94, %p95
    %s98 = sadd.s32 %s97, 1
    %p101 = scmp.eq.s32.totalorder %s11, 1
    %p102 = scmp.ne.s32.totalorder %s97, %s99
    %p103 = scmp.eq.s32.totalorder %s11, 0
    %p104 = por %p102, %p103
    %p105 = scmp.ne.s32.totalorder %s97, %s99
    %p106 = scmp.eq.s32.totalorder %s16, 1
    %p107 = por %p105, %p106
    %p108 = scmp.ne.s32.totalorder %s99, %s100
    %p109 = scmp.eq.s32.totalorder %s16, 0
    %p110 = por %p108, %p109
    %p111 = scmp.ne.s32.totalorder %s99, %s100
    %p112 = scmp.eq.s32.totalorder %s17, 1
    %p113 = por %p111, %p112
    %p115 = scmp.ne.s32.totalorder %s100, %s114
    %p116 = scmp.eq.s32.totalorder %s17, 0
    %p117 = por %p115, %p116
    %s118 = ssub.s32 %s11, %s18
    %p119 = scmp.eq.s32.totalorder %s118, 0
    %s121 = sadd.s32 %s120, 1
    %s122 = scalar_select %p119, %s120, %s121
    %p125 = pneg %p119
    %p126 = scmp.eq.s32.totalorder %s11, 1
    %p127 = por %p125, %p126
    %p128 = scmp.ne.s32.totalorder %s120, %s123
    %p129 = scmp.eq.s32.totalorder %s11, 0
    %p130 = por %p128, %p129
    %p131 = scmp.ne.s32.totalorder %s120, %s123
    %p132 = scmp.eq.s32.totalorder %s16, 1
    %p133 = por %p131, %p132
    %p134 = scmp.ne.s32.totalorder %s123, %s124
    %p135 = scmp.eq.s32.totalorder %s16, 0
    %p136 = por %p134, %p135
    %p137 = scmp.ne.s32.totalorder %s123, %s124
    %p138 = scmp.eq.s32.totalorder %s17, 1
    %p139 = por %p137, %p138
    %p141 = scmp.ne.s32.totalorder %s124, %s140
    %p142 = scmp.eq.s32.totalorder %s17, 0
    %p143 = por %p141, %p142
    %s144 = ssub.s32 %s11, %s18
    %p145 = scmp.eq.s32.totalorder %s144, 0
    %s147 = sadd.s32 %s146, 1
    %s148 = scalar_select %p145, %s146, %s147
    %p151 = pneg %p145
    %p152 = scmp.eq.s32.totalorder %s11, 1
    %p153 = por %p151, %p152
    %p154 = scmp.ne.s32.totalorder %s146, %s149
    %p155 = scmp.eq.s32.totalorder %s11, 0
    %p156 = por %p154, %p155
    %p157 = scmp.ne.s32.totalorder %s146, %s149
    %p158 = scmp.eq.s32.totalorder %s16, 1
    %p159 = por %p157, %p158
    %p160 = scmp.ne.s32.totalorder %s149, %s150
    %p161 = scmp.eq.s32.totalorder %s16, 0
    %p162 = por %p160, %p161
    %p163 = scmp.ne.s32.totalorder %s149, %s150
    %p164 = scmp.eq.s32.totalorder %s17, 1
    %p165 = por %p163, %p164
    %p167 = scmp.ne.s32.totalorder %s150, %s166
    %p168 = scmp.eq.s32.totalorder %s17, 0
    %p169 = por %p167, %p168
    %p170 = scmp.le.s32.totalorder 1, %s11
    %p171 = scmp.lt.s32.totalorder %s11, 3
    %p172 = pnand %p170, %p171
    %p173 = pneg %p172
    // Predicated region
    $region9: #{conformer_encoder.32} parent=5 // pred_check
      _
    $region10: #{conformer_encoder.32} parent=5 // pred_check_branch
      %175 = sbr.rel (%p172) target = $region12
    $region11: #{conformer_encoder.32} parent=5 // pred_region
      %s176 = ssub.s32 %s11, 1
      // Predicated region
      $region13: #{conformer_encoder.32} parent=11 // pred_check
        %p177 = pneg %p110
      $region14: #{conformer_encoder.32} parent=11 // pred_check_branch
        %179 = sbr.rel (%p177) target = $region16
      $region15: #{conformer_encoder.32} parent=11 // pred_region
        _
      $region16: #{conformer_encoder.32} parent=11 // pred_fallthru
        _
    $region12: #{conformer_encoder.32} parent=5 // pred_fallthru
      _
    %p180 = scmp.lt.s32.totalorder %s11, 2
    // Predicated region
    $region17: #{conformer_encoder.32} parent=5 // pred_check
      %p181 = pneg %p180
    $region18: #{conformer_encoder.32} parent=5 // pred_check_branch
      %183 = sbr.rel (%p181) target = $region20
    $region19: #{conformer_encoder.32} parent=5 // pred_region
      // Predicated region
      $region21: #{conformer_encoder.32} parent=19 // pred_check
        %p184 = pneg %p31
      $region22: #{conformer_encoder.32} parent=19 // pred_check_branch
        %186 = sbr.rel (%p184) target = $region24
      $region23: #{conformer_encoder.32} parent=19 // pred_region
        %p187 = scmp.lt.s32.totalorder %s11, 1
        %s188 = scalar_select %p187, %s11, 1
        %s189 = smul.addr %s188, 4
        %s190 = scalar_lea.vmem %s0, %s189
      $region24: #{conformer_encoder.32} parent=19 // pred_fallthru
        _
      // Predicated region
      $region25: #{conformer_encoder.32} parent=19 // pred_check
        %p191 = pneg %p57
      $region26: #{conformer_encoder.32} parent=19 // pred_check_branch
        %193 = sbr.rel (%p191) target = $region28
      $region27: #{conformer_encoder.32} parent=19 // pred_region
        %p194 = scmp.lt.s32.totalorder %s11, 1
        %s195 = scalar_select %p194, %s11, 1
        %s196 = smul.addr %s195, 4
        %s197 = scalar_lea.vmem %s1, %s196
      $region28: #{conformer_encoder.32} parent=19 // pred_fallthru
        _
      // Predicated region
      $region29: #{conformer_encoder.32} parent=19 // pred_check
        %p198 = pneg %p83
      $region30: #{conformer_encoder.32} parent=19 // pred_check_branch
        %200 = sbr.rel (%p198) target = $region32
      $region31: #{conformer_encoder.32} parent=19 // pred_region
        %p201 = scmp.lt.s32.totalorder %s11, 1
        %s202 = scalar_select %p201, %s11, 1
        %s203 = smul.addr %s202, 4
        %s204 = scalar_lea.vmem %s2, %s203
      $region32: #{conformer_encoder.32} parent=19 // pred_fallthru
        _
      // Predicated region
      $region33: #{conformer_encoder.32} parent=19 // pred_check
        %p205 = pneg %p130
      $region34: #{conformer_encoder.32} parent=19 // pred_check_branch
        %207 = sbr.rel (%p205) target = $region36
      $region35: #{conformer_encoder.32} parent=19 // pred_region
        %p208 = scmp.lt.s32.totalorder %s11, 1
        %s209 = scalar_select %p208, %s11, 1
        %s210 = smul.addr %s209, 4
        %s211 = smul.addr %s210, 4
        %s212 = scalar_lea.vmem %s4, %s211
      $region36: #{conformer_encoder.32} parent=19 // pred_fallthru
        _
    $region20: #{conformer_encoder.32} parent=5 // pred_fallthru
      _
    %p213 = scmp.le.s32.totalorder 1, %s11
    %p214 = scmp.lt.s32.totalorder %s11, 3
    %p215 = pnand %p213, %p214
    %p216 = pneg %p215
    // Predicated region
    $region37: #{conformer_encoder.32} parent=5 // pred_check
      _
    $region38: #{conformer_encoder.32} parent=5 // pred_check_branch
      %218 = sbr.rel (%p215) target = $region40
    $region39: #{conformer_encoder.32} parent=5 // pred_region
      %s219 = ssub.s32 %s11, 1
      %p220 = scmp.lt.s32.totalorder %s16, 1
      %s221 = scalar_select %p220, %s16, 1
      %s222 = smul.addr %s221, 4
      %s223 = scalar_lea.vmem %s0, %s222
      %p224 = pneg %p37
      %p225 = pneg %p34
      %p226 = scmp.lt.s32.totalorder %s16, 1
      %s227 = scalar_select %p226, %s16, 1
      %s228 = smul.addr %s227, 4
      %s229 = scalar_lea.vmem %s1, %s228
      %p230 = pneg %p63
      %p231 = pneg %p60
      %p232 = scmp.lt.s32.totalorder %s16, 1
      %s233 = scalar_select %p232, %s16, 1
      %s234 = smul.addr %s233, 4
      %s235 = scalar_lea.vmem %s2, %s234
      %p236 = pneg %p89
      %p237 = pneg %p86
      %p238 = pneg %p110
      %p239 = pneg %p107
      %p240 = scmp.lt.s32.totalorder %s16, 1
      %s241 = scalar_select %p240, %s16, 1
      %s242 = smul.addr %s241, 4
      %s243 = smul.addr %s242, 4
      %s244 = scalar_lea.vmem %s4, %s243
      %p245 = pneg %p136
      %p246 = pneg %p133
      %p247 = pneg %p162
      %p248 = pneg %p159
      %p249 = scmp.lt.s32.totalorder %s16, 1
      %s250 = scalar_select %p249, %s16, 1
      %s251 = smul.addr %s250, 4
      %s252 = scalar_lea.vmem %s5, %s251
      %p253 = scmp.lt.s32.totalorder %s16, 1
      %s254 = scalar_select %p253, %s16, 1
      %s255 = smul.addr %s254, 4
      %s256 = scalar_lea.vmem %s0, %s255
      %p257 = scmp.lt.s32.totalorder %s16, 1
      %s258 = scalar_select %p257, %s16, 1
      %s259 = smul.addr %s258, 4
      %s260 = scalar_lea.vmem %s1, %s259
      %p261 = scmp.lt.s32.totalorder %s16, 1
      %s262 = scalar_select %p261, %s16, 1
      %s263 = smul.addr %s262, 4
      %s264 = scalar_lea.vmem %s2, %s263
      %p265 = scmp.lt.s32.totalorder %s16, 1
      %s266 = scalar_select %p265, %s16, 1
      %s267 = smul.addr %s266, 4
      %s268 = smul.addr %s267, 4
      %s269 = scalar_lea.vmem %s4, %s268
      %p270 = scmp.lt.s32.totalorder %s16, 1
      %s271 = scalar_select %p270, %s16, 1
      %s272 = smul.addr %s271, 4
      %s273 = scalar_lea.vmem %s5, %s272
      %v275 = vld [vmem:[%s256] sm:$0xf]
      %v276 = vunpack.c.l.bf16 %v275
      %v277 = vld [vmem:[%s3] sm:$0x1]
      %v279 = vlaneseq
      %v280 = vshrl.u32 %v279, 7
      %v281 = vsub.s32 0, %v280
      %v282 = vrot.slane %v277, %v281
      %v284 = vadd.f32 %v276, %v282
      %v285 = vmul.f32 %v284, 0.17677669
      %v286 = vpack.c.bf16 %v285, %v285
      %v287 = vld [vmem:[%s260] sm:$0xf]
      %v288 = vld [vmem:[%s264] sm:$0xf]
      %v289 = vld [vmem:[%s269] sm:$0xf]
      %v290 = vunpack.c.l.bf16 %v289
      %vm291 = vcmask 64512
      %v293 = vsel %vm291, %v286, 0
      %v296 = vsel %vm291, %v287, 0
      %298 = vmatprep.subr.bf16.mxu0 0
      %299 = vmatpush1.bf16.xpose.msra.mxu0 %v296
      %300 = vmatprep.subr.bf16.mxu0 0
      %301 = vmatpush1.bf16.xpose.msra.mxu0 0
      %302 = vmatprep.subr.bf16.mxu0 0
      %303 = vmatpush1.bf16.xpose.msra.mxu0 0
      %304 = vmatprep.subr.bf16.mxu0 0
      %305 = vmatpush1.bf16.xpose.msra.mxu0 0
      %306 = vmatprep.subr.bf16.mxu0 0
      %307 = vmatpush1.bf16.xpose.msra.mxu0 0
      %308 = vmatprep.subr.bf16.mxu0 0
      %309 = vmatpush1.bf16.xpose.msra.mxu0 0
      %310 = vmatprep.subr.bf16.mxu0 0
      %311 = vmatpush1.bf16.xpose.msra.mxu0 0
      %312 = vmatprep.subr.bf16.mxu0 0
      %313 = vmatpush1.bf16.xpose.msra.mxu0 0
      %314 = vmatprep.subr.bf16.mxu0 0
      %315 = vmatpush1.bf16.xpose.msra.mxu0 0
      %316 = vmatprep.subr.bf16.mxu0 0
      %317 = vmatpush1.bf16.xpose.msra.mxu0 0
      %318 = vmatprep.subr.bf16.mxu0 0
      %319 = vmatpush1.bf16.xpose.msra.mxu0 0
      %320 = vmatprep.subr.bf16.mxu0 0
      %321 = vmatpush1.bf16.xpose.msra.mxu0 0
      %322 = vmatprep.subr.bf16.mxu0 0
      %323 = vmatpush1.bf16.xpose.msra.mxu0 0
      %324 = vmatprep.subr.bf16.mxu0 0
      %325 = vmatpush1.bf16.xpose.msra.mxu0 0
      %326 = vmatprep.subr.bf16.mxu0 0
      %327 = vmatpush1.bf16.xpose.msra.mxu0 0
      %328 = vmatprep.subr.bf16.mxu0 0
      %329 = vmatpush1.bf16.xpose.msra.mxu0 0
      %330 = vmatprep.mubr.bf16.mxu0 0
      %331 = vmatmul.mubr.bf16.gmra.mrb[0].mxu0 %v293
      %v332 = vpop.f32.mrb[0].mxu0
      %v333 = vadd.f32 %v290, %v332
      %v334 = vpop.f32.mrb[0].mxu0
      %v335 = vpop.f32.mrb[0].mxu0
      %v336 = vpop.f32.mrb[0].mxu0
      %337 = vdwg.mxu0
      %vm338 = vcmask 55296
      %v339 = vsel %vm338, %v333, -inf
      %340 = vmax.xlane.f32.xlu0 %v339
      %v341 = vpop.xlane.xlu0 %340
      %v342 = vsub.f32 %v333, %v341
      %v343 = vmul.f32 %v342, 1.442695
      %v344 = vpow.pop %v343
      %v345 = vsel %vm338, %v344, 0.0
      %346 = vadd.xlane.f32.xlu0 %v345
      %v347 = vpop.xlane.xlu0 %346
      %v348 = vrcp.pop %v347
      %v349 = vmul.f32 %v344, %v348
      %v350 = vpack.c.bf16 %v349, %v349
      %vm351 = vcmask 56320
      %v353 = vsel %vm351, %v350, 0
      %vm355 = vcmask 1042432
      %vm356 = vcmask 1043456
      %v357 = vsel %vm355, 4294967295, 65535
      %v358 = vsel %vm356, %v357, 0
      %v360 = vand.u32 %v288, %v358
      %362 = vmatprep.subr.bf16.mxu0 0
      %363 = vmatpush1.bf16.msra.mxu0 %v360
      %364 = vmatprep.subr.bf16.mxu0 0
      %365 = vmatpush1.bf16.msra.mxu0 0
      %366 = vmatprep.subr.bf16.mxu0 0
      %367 = vmatpush1.bf16.msra.mxu0 0
      %368 = vmatprep.subr.bf16.mxu0 0
      %369 = vmatpush1.bf16.msra.mxu0 0
      %370 = vmatprep.subr.bf16.mxu0 0
      %371 = vmatpush1.bf16.msra.mxu0 0
      %372 = vmatprep.subr.bf16.mxu0 0
      %373 = vmatpush1.bf16.msra.mxu0 0
      %374 = vmatprep.subr.bf16.mxu0 0
      %375 = vmatpush1.bf16.msra.mxu0 0
      %376 = vmatprep.subr.bf16.mxu0 0
      %377 = vmatpush1.bf16.msra.mxu0 0
      %378 = vmatprep.subr.bf16.mxu0 0
      %379 = vmatpush1.bf16.msra.mxu0 0
      %380 = vmatprep.subr.bf16.mxu0 0
      %381 = vmatpush1.bf16.msra.mxu0 0
      %382 = vmatprep.subr.bf16.mxu0 0
      %383 = vmatpush1.bf16.msra.mxu0 0
      %384 = vmatprep.subr.bf16.mxu0 0
      %385 = vmatpush1.bf16.msra.mxu0 0
      %386 = vmatprep.subr.bf16.mxu0 0
      %387 = vmatpush1.bf16.msra.mxu0 0
      %388 = vmatprep.subr.bf16.mxu0 0
      %389 = vmatpush1.bf16.msra.mxu0 0
      %390 = vmatprep.subr.bf16.mxu0 0
      %391 = vmatpush1.bf16.msra.mxu0 0
      %392 = vmatprep.subr.bf16.mxu0 0
      %393 = vmatpush1.bf16.msra.mxu0 0
      %394 = vmatprep.mubr.bf16.mxu0 0
      %395 = vmatmul.mubr.bf16.gmra.mrb[0].mxu0 %v353
      %v396 = vpop.f32.mrb[0].mxu0
      %v397 = vadd.f32 0.0, %v396
      %v398 = vpop.f32.mrb[0].mxu0
      %v399 = vpop.f32.mrb[0].mxu0
      %v400 = vpop.f32.mrb[0].mxu0
      %401 = vdwg.mxu0
      %s402 = scalar_lea.vmem %s269, 4
      %v403 = vld [vmem:[%s402] sm:$0xf]
      %v404 = vunpack.c.l.bf16 %v403
      %406 = vrot.lane.b32.xlu0 %v286, 120
      %v407 = vpop.permute.xlu0 %406
      %v409 = vunpack.c.l.b16 %v287
      %v410 = vpack.c.b16 %v409, %v409
      %411 = vrot.lane.b32.xlu0 %v410, 120
      %v412 = vpop.permute.xlu0 %411
      %v414 = vsel %vm291, %v407, 0
      %v417 = vsel %vm291, %v412, 0
      %419 = vmatprep.subr.bf16.mxu0 0
      %420 = vmatpush1.bf16.xpose.msra.mxu0 %v417
      %421 = vmatprep.subr.bf16.mxu0 0
      %422 = vmatpush1.bf16.xpose.msra.mxu0 0
      %423 = vmatprep.subr.bf16.mxu0 0
      %424 = vmatpush1.bf16.xpose.msra.mxu0 0
      %425 = vmatprep.subr.bf16.mxu0 0
      %426 = vmatpush1.bf16.xpose.msra.mxu0 0
      %427 = vmatprep.subr.bf16.mxu0 0
      %428 = vmatpush1.bf16.xpose.msra.mxu0 0
      %429 = vmatprep.subr.bf16.mxu0 0
      %430 = vmatpush1.bf16.xpose.msra.mxu0 0
      %431 = vmatprep.subr.bf16.mxu0 0
      %432 = vmatpush1.bf16.xpose.msra.mxu0 0
      %433 = vmatprep.subr.bf16.mxu0 0
      %434 = vmatpush1.bf16.xpose.msra.mxu0 0
      %435 = vmatprep.subr.bf16.mxu0 0
      %436 = vmatpush1.bf16.xpose.msra.mxu0 0
      %437 = vmatprep.subr.bf16.mxu0 0
      %438 = vmatpush1.bf16.xpose.msra.mxu0 0
      %439 = vmatprep.subr.bf16.mxu0 0
      %440 = vmatpush1.bf16.xpose.msra.mxu0 0
      %441 = vmatprep.subr.bf16.mxu0 0
      %442 = vmatpush1.bf16.xpose.msra.mxu0 0
      %443 = vmatprep.subr.bf16.mxu0 0
      %444 = vmatpush1.bf16.xpose.msra.mxu0 0
      %445 = vmatprep.subr.bf16.mxu0 0
      %446 = vmatpush1.bf16.xpose.msra.mxu0 0
      %447 = vmatprep.subr.bf16.mxu0 0
      %448 = vmatpush1.bf16.xpose.msra.mxu0 0
      %449 = vmatprep.subr.bf16.mxu0 0
      %450 = vmatpush1.bf16.xpose.msra.mxu0 0
      %451 = vmatprep.mubr.bf16.mxu0 0
      %452 = vmatmul.mubr.bf16.gmra.mrb[0].mxu0 %v414
      %v453 = vpop.f32.mrb[0].mxu0
      %v454 = vadd.f32 %v404, %v453
      %v455 = vpop.f32.mrb[0].mxu0
      %v456 = vpop.f32.mrb[0].mxu0
      %v457 = vpop.f32.mrb[0].mxu0
      %458 = vdwg.mxu0
      %v459 = vsel %vm338, %v454, -inf
      %460 = vmax.xlane.f32.xlu0 %v459
      %v461 = vpop.xlane.xlu0 %460
      %v462 = vsub.f32 %v454, %v461
      %v463 = vmul.f32 %v462, 1.442695
      %v464 = vpow.pop %v463
      %v465 = vsel %vm338, %v464, 0.0
      %466 = vadd.xlane.f32.xlu0 %v465
      %v467 = vpop.xlane.xlu0 %466
      %v468 = vrcp.pop %v467
      %v469 = vmul.f32 %v464, %v468
      %v470 = vpack.c.bf16 %v469, %v469
      %v472 = vunpack.c.l.b16 %v288
      %v473 = vpack.c.b16 %v472, %v472
      %474 = vrot.lane.b32.xlu0 %v473, 120
      %v475 = vpop.permute.xlu0 %474
      %v477 = vsel %vm351, %v470, 0
      %v480 = vand.u32 %v475, %v358
      %482 = vmatprep.subr.bf16.mxu0 0
      %483 = vmatpush1.bf16.msra.mxu0 %v480
      %484 = vmatprep.subr.bf16.mxu0 0
      %485 = vmatpush1.bf16.msra.mxu0 0
      %486 = vmatprep.subr.bf16.mxu0 0
      %487 = vmatpush1.bf16.msra.mxu0 0
      %488 = vmatprep.subr.bf16.mxu0 0
      %489 = vmatpush1.bf16.msra.mxu0 0
      %490 = vmatprep.subr.bf16.mxu0 0
      %491 = vmatpush1.bf16.msra.mxu0 0
      %492 = vmatprep.subr.bf16.mxu0 0
      %493 = vmatpush1.bf16.msra.mxu0 0
      %494 = vmatprep.subr.bf16.mxu0 0
      %495 = vmatpush1.bf16.msra.mxu0 0
      %496 = vmatprep.subr.bf16.mxu0 0
      %497 = vmatpush1.bf16.msra.mxu0 0
      %498 = vmatprep.subr.bf16.mxu0 0
      %499 = vmatpush1.bf16.msra.mxu0 0
      %500 = vmatprep.subr.bf16.mxu0 0
      %501 = vmatpush1.bf16.msra.mxu0 0
      %502 = vmatprep.subr.bf16.mxu0 0
      %503 = vmatpush1.bf16.msra.mxu0 0
      %504 = vmatprep.subr.bf16.mxu0 0
      %505 = vmatpush1.bf16.msra.mxu0 0
      %506 = vmatprep.subr.bf16.mxu0 0
      %507 = vmatpush1.bf16.msra.mxu0 0
      %508 = vmatprep.subr.bf16.mxu0 0
      %509 = vmatpush1.bf16.msra.mxu0 0
      %510 = vmatprep.subr.bf16.mxu0 0
      %511 = vmatpush1.bf16.msra.mxu0 0
      %512 = vmatprep.subr.bf16.mxu0 0
      %513 = vmatpush1.bf16.msra.mxu0 0
      %514 = vmatprep.mubr.bf16.mxu0 0
      %515 = vmatmul.mubr.bf16.gmra.mrb[0].mxu0 %v477
      %v516 = vpop.f32.mrb[0].mxu0
      %v517 = vadd.f32 0.0, %v516
      %v518 = vpop.f32.mrb[0].mxu0
      %v519 = vpop.f32.mrb[0].mxu0
      %v520 = vpop.f32.mrb[0].mxu0
      %521 = vdwg.mxu0
      %s522 = scalar_lea.vmem %s269, 8
      %v523 = vld [vmem:[%s522] sm:$0xf]
      %v524 = vunpack.c.l.bf16 %v523
      %525 = vrot.lane.b32.xlu0 %v286, 112
      %v526 = vpop.permute.xlu0 %525
      %527 = vrot.lane.b32.xlu0 %v410, 112
      %v528 = vpop.permute.xlu0 %527
      %v530 = vsel %vm291, %v526, 0
      %v533 = vsel %vm291, %v528, 0
      %535 = vmatprep.subr.bf16.mxu0 0
      %536 = vmatpush1.bf16.xpose.msra.mxu0 %v533
      %537 = vmatprep.subr.bf16.mxu0 0
      %538 = vmatpush1.bf16.xpose.msra.mxu0 0
      %539 = vmatprep.subr.bf16.mxu0 0
      %540 = vmatpush1.bf16.xpose.msra.mxu0 0
      %541 = vmatprep.subr.bf16.mxu0 0
      %542 = vmatpush1.bf16.xpose.msra.mxu0 0
      %543 = vmatprep.subr.bf16.mxu0 0
      %544 = vmatpush1.bf16.xpose.msra.mxu0 0
      %545 = vmatprep.subr.bf16.mxu0 0
      %546 = vmatpush1.bf16.xpose.msra.mxu0 0
      %547 = vmatprep.subr.bf16.mxu0 0
      %548 = vmatpush1.bf16.xpose.msra.mxu0 0
      %549 = vmatprep.subr.bf16.mxu0 0
      %550 = vmatpush1.bf16.xpose.msra.mxu0 0
      %551 = vmatprep.subr.bf16.mxu0 0
      %552 = vmatpush1.bf16.xpose.msra.mxu0 0
      %553 = vmatprep.subr.bf16.mxu0 0
      %554 = vmatpush1.bf16.xpose.msra.mxu0 0
      %555 = vmatprep.subr.bf16.mxu0 0
      %556 = vmatpush1.bf16.xpose.msra.mxu0 0
      %557 = vmatprep.subr.bf16.mxu0 0
      %558 = vmatpush1.bf16.xpose.msra.mxu0 0
      %559 = vmatprep.subr.bf16.mxu0 0
      %560 = vmatpush1.bf16.xpose.msra.mxu0 0
      %561 = vmatprep.subr.bf16.mxu0 0
      %562 = vmatpush1.bf16.xpose.msra.mxu0 0
      %563 = vmatprep.subr.bf16.mxu0 0
      %564 = vmatpush1.bf16.xpose.msra.mxu0 0
      %565 = vmatprep.subr.bf16.mxu0 0
      %566 = vmatpush1.bf16.xpose.msra.mxu0 0
      %567 = vmatprep.mubr.bf16.mxu0 0
      %568 = vmatmul.mubr.bf16.gmra.mrb[0].mxu0 %v530
      %v569 = vpop.f32.mrb[0].mxu0
      %v570 = vadd.f32 %v524, %v569
      %v571 = vpop.f32.mrb[0].mxu0
      %v572 = vpop.f32.mrb[0].mxu0
      %v573 = vpop.f32.mrb[0].mxu0
      %574 = vdwg.mxu0
      %v575 = vsel %vm338, %v570, -inf
      %576 = vmax.xlane.f32.xlu0 %v575
      %v577 = vpop.xlane.xlu0 %576
      %v578 = vsub.f32 %v570, %v577
      %v579 = vmul.f32 %v578, 1.442695
      %v580 = vpow.pop %v579
      %v581 = vsel %vm338, %v580, 0.0
      %582 = vadd.xlane.f32.xlu0 %v581
      %v583 = vpop.xlane.xlu0 %582
      %v584 = vrcp.pop %v583
      %v585 = vmul.f32 %v580, %v584
      %v586 = vpack.c.bf16 %v585, %v585
      %587 = vrot.lane.b32.xlu0 %v473, 112
      %v588 = vpop.permute.xlu0 %587
      %v590 = vsel %vm351, %v586, 0
      %v593 = vand.u32 %v588, %v358
      %595 = vmatprep.subr.bf16.mxu0 0
      %596 = vmatpush1.bf16.msra.mxu0 %v593
      %597 = vmatprep.subr.bf16.mxu0 0
      %598 = vmatpush1.bf16.msra.mxu0 0
      %599 = vmatprep.subr.bf16.mxu0 0
      %600 = vmatpush1.bf16.msra.mxu0 0
      %601 = vmatprep.subr.bf16.mxu0 0
      %602 = vmatpush1.bf16.msra.mxu0 0
      %603 = vmatprep.subr.bf16.mxu0 0
      %604 = vmatpush1.bf16.msra.mxu0 0
      %605 = vmatprep.subr.bf16.mxu0 0
      %606 = vmatpush1.bf16.msra.mxu0 0
      %607 = vmatprep.subr.bf16.mxu0 0
      %608 = vmatpush1.bf16.msra.mxu0 0
      %609 = vmatprep.subr.bf16.mxu0 0
      %610 = vmatpush1.bf16.msra.mxu0 0
      %611 = vmatprep.subr.bf16.mxu0 0
      %612 = vmatpush1.bf16.msra.mxu0 0
      %613 = vmatprep.subr.bf16.mxu0 0
      %614 = vmatpush1.bf16.msra.mxu0 0
      %615 = vmatprep.subr.bf16.mxu0 0
      %616 = vmatpush1.bf16.msra.mxu0 0
      %617 = vmatprep.subr.bf16.mxu0 0
      %618 = vmatpush1.bf16.msra.mxu0 0
      %619 = vmatprep.subr.bf16.mxu0 0
      %620 = vmatpush1.bf16.msra.mxu0 0
      %621 = vmatprep.subr.bf16.mxu0 0
      %622 = vmatpush1.bf16.msra.mxu0 0
      %623 = vmatprep.subr.bf16.mxu0 0
      %624 = vmatpush1.bf16.msra.mxu0 0
      %625 = vmatprep.subr.bf16.mxu0 0
      %626 = vmatpush1.bf16.msra.mxu0 0
      %627 = vmatprep.mubr.bf16.mxu0 0
      %628 = vmatmul.mubr.bf16.gmra.mrb[0].mxu0 %v590
      %v629 = vpop.f32.mrb[0].mxu0
      %v630 = vadd.f32 0.0, %v629
      %v631 = vpop.f32.mrb[0].mxu0
      %v632 = vpop.f32.mrb[0].mxu0
      %v633 = vpop.f32.mrb[0].mxu0
      %634 = vdwg.mxu0
      %s635 = scalar_lea.vmem %s269, 12
      %v636 = vld [vmem:[%s635] sm:$0xf]
      %v637 = vunpack.c.l.bf16 %v636
      %638 = vrot.lane.b32.xlu0 %v286, 104
      %v639 = vpop.permute.xlu0 %638
      %640 = vrot.lane.b32.xlu0 %v410, 104
      %v641 = vpop.permute.xlu0 %640
      %v643 = vsel %vm291, %v639, 0
      %v646 = vsel %vm291, %v641, 0
      %648 = vmatprep.subr.bf16.mxu0 0
      %649 = vmatpush1.bf16.xpose.msra.mxu0 %v646
      %650 = vmatprep.subr.bf16.mxu0 0
      %651 = vmatpush1.bf16.xpose.msra.mxu0 0
      %652 = vmatprep.subr.bf16.mxu0 0
      %653 = vmatpush1.bf16.xpose.msra.mxu0 0
      %654 = vmatprep.subr.bf16.mxu0 0
      %655 = vmatpush1.bf16.xpose.msra.mxu0 0
      %656 = vmatprep.subr.bf16.mxu0 0
      %657 = vmatpush1.bf16.xpose.msra.mxu0 0
      %658 = vmatprep.subr.bf16.mxu0 0
      %659 = vmatpush1.bf16.xpose.msra.mxu0 0
      %660 = vmatprep.subr.bf16.mxu0 0
      %661 = vmatpush1.bf16.xpose.msra.mxu0 0
      %662 = vmatprep.subr.bf16.mxu0 0
      %663 = vmatpush1.bf16.xpose.msra.mxu0 0
      %664 = vmatprep.subr.bf16.mxu0 0
      %665 = vmatpush1.bf16.xpose.msra.mxu0 0
      %666 = vmatprep.subr.bf16.mxu0 0
      %667 = vmatpush1.bf16.xpose.msra.mxu0 0
      %668 = vmatprep.subr.bf16.mxu0 0
      %669 = vmatpush1.bf16.xpose.msra.mxu0 0
      %670 = vmatprep.subr.bf16.mxu0 0
      %671 = vmatpush1.bf16.xpose.msra.mxu0 0
      %672 = vmatprep.subr.bf16.mxu0 0
      %673 = vmatpush1.bf16.xpose.msra.mxu0 0
      %674 = vmatprep.subr.bf16.mxu0 0
      %675 = vmatpush1.bf16.xpose.msra.mxu0 0
      %676 = vmatprep.subr.bf16.mxu0 0
      %677 = vmatpush1.bf16.xpose.msra.mxu0 0
      %678 = vmatprep.subr.bf16.mxu0 0
      %679 = vmatpush1.bf16.xpose.msra.mxu0 0
      %680 = vmatprep.mubr.bf16.mxu0 0
      %681 = vmatmul.mubr.bf16.gmra.mrb[0].mxu0 %v643
      %v682 = vpop.f32.mrb[0].mxu0
      %v683 = vadd.f32 %v637, %v682
      %v684 = vpop.f32.mrb[0].mxu0
      %v685 = vpop.f32.mrb[0].mxu0
      %v686 = vpop.f32.mrb[0].mxu0
      %687 = vdwg.mxu0
      %v688 = vsel %vm338, %v683, -inf
      %689 = vmax.xlane.f32.xlu0 %v688
      %v690 = vpop.xlane.xlu0 %689
      %v691 = vsub.f32 %v683, %v690
      %v692 = vmul.f32 %v691, 1.442695
      %v693 = vpow.pop %v692
      %v694 = vsel %vm338, %v693, 0.0
      %695 = vadd.xlane.f32.xlu0 %v694
      %v696 = vpop.xlane.xlu0 %695
      %v697 = vrcp.pop %v696
      %v698 = vmul.f32 %v693, %v697
      %v699 = vpack.c.bf16 %v698, %v698
      %700 = vrot.lane.b32.xlu0 %v473, 104
      %v701 = vpop.permute.xlu0 %700
      %v703 = vsel %vm351, %v699, 0
      %v706 = vand.u32 %v701, %v358
      %708 = vmatprep.subr.bf16.mxu0 0
      %709 = vmatpush1.bf16.msra.mxu0 %v706
      %710 = vmatprep.subr.bf16.mxu0 0
      %711 = vmatpush1.bf16.msra.mxu0 0
      %712 = vmatprep.subr.bf16.mxu0 0
      %713 = vmatpush1.bf16.msra.mxu0 0
      %714 = vmatprep.subr.bf16.mxu0 0
      %715 = vmatpush1.bf16.msra.mxu0 0
      %716 = vmatprep.subr.bf16.mxu0 0
      %717 = vmatpush1.bf16.msra.mxu0 0
      %718 = vmatprep.subr.bf16.mxu0 0
      %719 = vmatpush1.bf16.msra.mxu0 0
      %720 = vmatprep.subr.bf16.mxu0 0
      %721 = vmatpush1.bf16.msra.mxu0 0
      %722 = vmatprep.subr.bf16.mxu0 0
      %723 = vmatpush1.bf16.msra.mxu0 0
      %724 = vmatprep.subr.bf16.mxu0 0
      %725 = vmatpush1.bf16.msra.mxu0 0
      %726 = vmatprep.subr.bf16.mxu0 0
      %727 = vmatpush1.bf16.msra.mxu0 0
      %728 = vmatprep.subr.bf16.mxu0 0
      %729 = vmatpush1.bf16.msra.mxu0 0
      %730 = vmatprep.subr.bf16.mxu0 0
      %731 = vmatpush1.bf16.msra.mxu0 0
      %732 = vmatprep.subr.bf16.mxu0 0
      %733 = vmatpush1.bf16.msra.mxu0 0
      %734 = vmatprep.subr.bf16.mxu0 0
      %735 = vmatpush1.bf16.msra.mxu0 0
      %736 = vmatprep.subr.bf16.mxu0 0
      %737 = vmatpush1.bf16.msra.mxu0 0
      %738 = vmatprep.subr.bf16.mxu0 0
      %739 = vmatpush1.bf16.msra.mxu0 0
      %740 = vmatprep.mubr.bf16.mxu0 0
      %741 = vmatmul.mubr.bf16.gmra.mrb[0].mxu0 %v703
      %v742 = vpop.f32.mrb[0].mxu0
      %v743 = vadd.f32 0.0, %v742
      %v744 = vpop.f32.mrb[0].mxu0
      %v745 = vpop.f32.mrb[0].mxu0
      %v746 = vpop.f32.mrb[0].mxu0
      %747 = vdwg.mxu0
      %749 = vrot.lane.b32.xlu0 %v517, 8
      %v750 = vpop.permute.xlu0 %749
      %753 = vrot.lane.b32.xlu0 %v630, 16
      %v754 = vpop.permute.xlu0 %753
      %757 = vrot.lane.b32.xlu0 %v743, 24
      %v758 = vpop.permute.xlu0 %757
      %v760 = vsel %vm291, %v397, %v750
      %vm761 = vcmask 130048
      %v762 = vsel %vm761, %v760, %v754
      %vm763 = vcmask 195584
      %v764 = vsel %vm763, %v762, %v758
      %v765 = vpack.c.bf16 %v764, %v764
      %vm766 = vcmask 257024
      %vm767 = vsmask.f32 3328
      %vm768 = vmand %vm766, %vm767
      %v769 = vld [vmem:[%s273] sm:$0xf]
      %v770 = vsel %vm768, %v765, %v769
      %771 = vst [vmem:[%s273] sm:$0xf] %v770
      %p772 = scmp.lt.s32.totalorder %s16, 1
      %s773 = scalar_select %p772, %s16, 1
      %s774 = smul.addr %s773, 4
      %s775 = scalar_lea.vmem %s5, %s774
      // Predicated region
      $region41: #{conformer_encoder.32} parent=39 // pred_check
        %p776 = pneg %p159
      $region42: #{conformer_encoder.32} parent=39 // pred_check_branch
        %778 = sbr.rel (%p776) target = $region44
      $region43: #{conformer_encoder.32} parent=39 // pred_region
        _
      $region44: #{conformer_encoder.32} parent=39 // pred_fallthru
        _
    $region40: #{conformer_encoder.32} parent=5 // pred_fallthru
      _
    %p779 = scmp.le.s32.totalorder 2, %s11
    // Predicated region
    $region45: #{conformer_encoder.32} parent=5 // pred_check
      %p780 = pneg %p779
    $region46: #{conformer_encoder.32} parent=5 // pred_check_branch
      %782 = sbr.rel (%p780) target = $region48
    $region47: #{conformer_encoder.32} parent=5 // pred_region
      %s783 = ssub.s32 %s11, 2
      // Predicated region
      $region49: #{conformer_encoder.32} parent=47 // pred_check
        %p784 = pneg %p165
      $region50: #{conformer_encoder.32} parent=47 // pred_check_branch
        %786 = sbr.rel (%p784) target = $region52
      $region51: #{conformer_encoder.32} parent=47 // pred_region
        %p787 = scmp.lt.s32.totalorder %s17, 1
        %s788 = scalar_select %p787, %s17, 1
        %s789 = smul.addr %s788, 4
        %s790 = scalar_lea.vmem %s5, %s789
      $region52: #{conformer_encoder.32} parent=47 // pred_fallthru
        _
    $region48: #{conformer_encoder.32} parent=5 // pred_fallthru
      _
  $region6: #{conformer_encoder.32} parent=0 // loop_footer
    %s15 = sadd.s32 1, %s11
  $region7: #{conformer_encoder.32} parent=0 // loop_footer_branch
    %10 = sbr.rel target = $region3
  $region8: #{conformer_encoder.32} parent=0 // loop_exit
    _

// kernel: conformer_encoder.34
$region0: #{conformer_encoder.34}
  #allocation0 [shape = 'u32[]', space=smem, size = 0x4, offset = 0x4, fixed_abs, tag = 'smem constant byte address 0x4 - core index']
  #allocation1 [shape = 'u32[144,128]{1,0:T(1,128)}', space=vmem, size = 0x12000, scoped, tag = 'internal scratch']
  #allocation2 [shape = 'f32[16,128]{1,0:T(8,128)}', space=vmem, size = 0x2000, scoped, tag = 'scratch operand']
  %s0 = inlined_call_operand.vmem [shape: bf16[16,128], index: 0, kind: input, shape index: {}]
  %s1 = inlined_call_operand.vmem [shape: bf16[128,128], index: 1, kind: input, shape index: {}]
  %s2 = inlined_call_operand.vmem [shape: f32[1,128], index: 2, kind: input, shape index: {}]
  %s3 = inlined_call_operand.vmem [shape: f32[1,128], index: 3, kind: input, shape index: {}]
  %s4 = inlined_call_operand.vmem [shape: f32[1,128], index: 4, kind: input, shape index: {}]
  %s5 = inlined_call_operand.vmem [shape: bf16[128,128], index: 5, kind: input, shape index: {}]
  %s6 = inlined_call_operand.vmem [shape: f32[1,128], index: 6, kind: input, shape index: {}]
  %s7 = inlined_call_operand.vmem [shape: bf16[16,128], index: 7, kind: output, shape index: {}]
  %s8 = sld [smem:[#allocation0]]
  $region46: #{conformer_encoder.34} parent=0
    _
  %s10 = ssub.s32 1, %s8
  %s11 = scalar_select 0, %s10, %s8
  // Predicated region
  $region2: #{conformer_encoder.34} parent=0 // pred_check
    _
  $region3: #{conformer_encoder.34} parent=0 // pred_check_branch
    %13 = sbr.rel (0) target = $region5
  $region4: #{conformer_encoder.34} parent=0 // pred_region
    _
  $region5: #{conformer_encoder.34} parent=0 // pred_fallthru
    _
  // Predicated region
  $region6: #{conformer_encoder.34} parent=0 // pred_check
    _
  $region7: #{conformer_encoder.34} parent=0 // pred_check_branch
    %15 = sbr.rel (0) target = $region9
  $region8: #{conformer_encoder.34} parent=0 // pred_region
    _
  $region9: #{conformer_encoder.34} parent=0 // pred_fallthru
    _
  // Predicated region
  $region10: #{conformer_encoder.34} parent=0 // pred_check
    _
  $region11: #{conformer_encoder.34} parent=0 // pred_check_branch
    %17 = sbr.rel (0) target = $region13
  $region12: #{conformer_encoder.34} parent=0 // pred_region
    _
  $region13: #{conformer_encoder.34} parent=0 // pred_fallthru
    _
  // Predicated region
  $region14: #{conformer_encoder.34} parent=0 // pred_check
    _
  $region15: #{conformer_encoder.34} parent=0 // pred_check_branch
    %19 = sbr.rel (0) target = $region17
  $region16: #{conformer_encoder.34} parent=0 // pred_region
    _
  $region17: #{conformer_encoder.34} parent=0 // pred_fallthru
    _
  // Predicated region
  $region18: #{conformer_encoder.34} parent=0 // pred_check
    _
  $region19: #{conformer_encoder.34} parent=0 // pred_check_branch
    %21 = sbr.rel (0) target = $region21
  $region20: #{conformer_encoder.34} parent=0 // pred_region
    _
  $region21: #{conformer_encoder.34} parent=0 // pred_fallthru
    _
  // Predicated region
  $region22: #{conformer_encoder.34} parent=0 // pred_check
    _
  $region23: #{conformer_encoder.34} parent=0 // pred_check_branch
    %23 = sbr.rel (0) target = $region25
  $region24: #{conformer_encoder.34} parent=0 // pred_region
    _
  $region25: #{conformer_encoder.34} parent=0 // pred_fallthru
    _
  // Predicated region
  $region26: #{conformer_encoder.34} parent=0 // pred_check
    _
  $region27: #{conformer_encoder.34} parent=0 // pred_check_branch
    %25 = sbr.rel (0) target = $region29
  $region28: #{conformer_encoder.34} parent=0 // pred_region
    _
  $region29: #{conformer_encoder.34} parent=0 // pred_fallthru
    _
  %p27 = scmp.eq.s32.totalorder 0, 0
  // Predicated region
  $region30: #{conformer_encoder.34} parent=0 // pred_check
    %p28 = pneg %p27
  $region31: #{conformer_encoder.34} parent=0 // pred_check_branch
    %30 = sbr.rel (%p28) target = $region33
  $region32: #{conformer_encoder.34} parent=0 // pred_region
    %31 = vst [vmem:[#allocation2] sm:$0xff] 0.0
    %32 = vst [vmem:[#allocation2 + $0x8] sm:$0xff] 0.0
  $region33: #{conformer_encoder.34} parent=0 // pred_fallthru
    _
  %v33 = vld [vmem:[%s0] sm:$0xf]
  %v34 = vld [vmem:[%s0 + $0x4] sm:$0xf]
  %v35 = vunpack.c.l.bf16 %v33
  %v36 = vunpack.c.l.bf16 %v34
  %37 = vadd.xlane.f32.xlu0 %v35
  %v38 = vpop.xlane.xlu0 %37
  %39 = vadd.xlane.f32.xlu0 %v36
  %v40 = vpop.xlane.xlu0 %39
  %v41 = vmul.f32 %v38, 0.03125
  %v42 = vmul.f32 %v40, 0.03125
  %v43 = vmul.f32 %v35, %v35
  %v44 = vmul.f32 %v36, %v36
  %45 = vadd.xlane.f32.xlu0 %v43
  %v46 = vpop.xlane.xlu0 %45
  %47 = vadd.xlane.f32.xlu0 %v44
  %v48 = vpop.xlane.xlu0 %47
  %v49 = vmul.f32 %v46, 0.03125
  %v50 = vmul.f32 %v48, 0.03125
  %v51 = vmul.f32 %v41, %v41
  %v52 = vmul.f32 %v42, %v42
  %v53 = vsub.f32 %v49, %v51
  %v54 = vsub.f32 %v50, %v52
  %v55 = vmax.f32 %v53, 0.0
  %v56 = vmax.f32 %v54, 0.0
  %v57 = vsub.f32 %v35, %v41
  %v58 = vsub.f32 %v36, %v42
  %v59 = vadd.f32 %v55, 1e-05
  %v60 = vadd.f32 %v56, 1e-05
  %v61 = vrsqrt.pop %v59
  %v62 = vrsqrt.pop %v60
  %v63 = vmul.f32 %v57, %v61
  %v64 = vmul.f32 %v58, %v62
  %v65 = vld [vmem:[%s3] sm:$0x1]
  %v67 = vlaneseq
  %v68 = vshrl.u32 %v67, 7
  %v69 = vsub.s32 0, %v68
  %v70 = vrot.slane %v65, %v69
  %v72 = vmul.f32 %v63, %v70
  %v73 = vmul.f32 %v64, %v70
  %v74 = vld [vmem:[%s4] sm:$0x1]
  %v76 = vlaneseq
  %v77 = vshrl.u32 %v76, 7
  %v78 = vsub.s32 0, %v77
  %v79 = vrot.slane %v74, %v78
  %v81 = vadd.f32 %v72, %v79
  %v82 = vadd.f32 %v73, %v79
  %v83 = vpack.c.bf16 %v82, %v81
  %v84 = vld [vmem:[#allocation2] sm:$0xff]
  %v85 = vld [vmem:[#allocation2 + $0x8] sm:$0xff]
  %v86 = vld [vmem:[%s1] sm:$0xf]
  %v87 = vld [vmem:[%s1 + $0x4] sm:$0xf]
  %v88 = vld [vmem:[%s1 + $0x8] sm:$0xf]
  %v89 = vld [vmem:[%s1 + $0xc] sm:$0xf]
  %v90 = vld [vmem:[%s1 + $0x10] sm:$0xf]
  %v91 = vld [vmem:[%s1 + $0x14] sm:$0xf]
  %v92 = vld [vmem:[%s1 + $0x18] sm:$0xf]
  %v93 = vld [vmem:[%s1 + $0x1c] sm:$0xf]
  %v94 = vld [vmem:[%s1 + $0x20] sm:$0xf]
  %v95 = vld [vmem:[%s1 + $0x24] sm:$0xf]
  %v96 = vld [vmem:[%s1 + $0x28] sm:$0xf]
  %v97 = vld [vmem:[%s1 + $0x2c] sm:$0xf]
  %v98 = vld [vmem:[%s1 + $0x30] sm:$0xf]
  %v99 = vld [vmem:[%s1 + $0x34] sm:$0xf]
  %v100 = vld [vmem:[%s1 + $0x38] sm:$0xf]
  %v101 = vld [vmem:[%s1 + $0x3c] sm:$0xf]
  %v118 = vunpack.c.l.b16 %v86
  %v119 = vunpack.c.l.b16 %v87
  %v120 = vunpack.c.l.b16 %v88
  %v121 = vunpack.c.l.b16 %v89
  %v122 = vunpack.c.l.b16 %v90
  %v123 = vunpack.c.l.b16 %v91
  %v124 = vunpack.c.l.b16 %v92
  %v125 = vunpack.c.l.b16 %v93
  %v126 = vunpack.c.l.b16 %v94
  %v127 = vunpack.c.l.b16 %v95
  %v128 = vunpack.c.l.b16 %v96
  %v129 = vunpack.c.l.b16 %v97
  %v130 = vunpack.c.l.b16 %v98
  %v131 = vunpack.c.l.b16 %v99
  %v132 = vunpack.c.l.b16 %v100
  %v133 = vunpack.c.l.b16 %v101
  %v134 = vpack.c.b16 %v119, %v118
  %v135 = vpack.c.b16 %v121, %v120
  %v136 = vpack.c.b16 %v123, %v122
  %v137 = vpack.c.b16 %v125, %v124
  %v138 = vpack.c.b16 %v127, %v126
  %v139 = vpack.c.b16 %v129, %v128
  %v140 = vpack.c.b16 %v131, %v130
  %v141 = vpack.c.b16 %v133, %v132
  %150 = vmatprep.subr.bf16.mxu0 0
  %151 = vmatpush1.bf16.msra.mxu0 %v134
  %152 = vmatprep.subr.bf16.mxu0 0
  %153 = vmatpush1.bf16.msra.mxu0 %v135
  %154 = vmatprep.subr.bf16.mxu0 0
  %155 = vmatpush1.bf16.msra.mxu0 %v136
  %156 = vmatprep.subr.bf16.mxu0 0
  %157 = vmatpush1.bf16.msra.mxu0 %v137
  %158 = vmatprep.subr.bf16.mxu0 0
  %159 = vmatpush1.bf16.msra.mxu0 %v138
  %160 = vmatprep.subr.bf16.mxu0 0
  %161 = vmatpush1.bf16.msra.mxu0 %v139
  %162 = vmatprep.subr.bf16.mxu0 0
  %163 = vmatpush1.bf16.msra.mxu0 %v140
  %164 = vmatprep.subr.bf16.mxu0 0
  %165 = vmatpush1.bf16.msra.mxu0 %v141
  %166 = vmatprep.subr.bf16.mxu0 0
  %167 = vmatpush1.bf16.msra.mxu0 0
  %168 = vmatprep.subr.bf16.mxu0 0
  %169 = vmatpush1.bf16.msra.mxu0 0
  %170 = vmatprep.subr.bf16.mxu0 0
  %171 = vmatpush1.bf16.msra.mxu0 0
  %172 = vmatprep.subr.bf16.mxu0 0
  %173 = vmatpush1.bf16.msra.mxu0 0
  %174 = vmatprep.subr.bf16.mxu0 0
  %175 = vmatpush1.bf16.msra.mxu0 0
  %176 = vmatprep.subr.bf16.mxu0 0
  %177 = vmatpush1.bf16.msra.mxu0 0
  %178 = vmatprep.subr.bf16.mxu0 0
  %179 = vmatpush1.bf16.msra.mxu0 0
  %180 = vmatprep.subr.bf16.mxu0 0
  %181 = vmatpush1.bf16.msra.mxu0 0
  %182 = vmatprep.mubr.bf16.mxu0 0
  %183 = vmatmul.mubr.bf16.gmra.mrb[0].mxu0 %v83
  %v184 = vpop.f32.mrb[0].mxu0
  %v185 = vadd.f32 0.0, %v184
  %v186 = vpop.f32.mrb[0].mxu0
  %v187 = vpop.f32.mrb[0].mxu0
  %v188 = vadd.f32 0.0, %v187
  %v189 = vpop.f32.mrb[0].mxu0
  %190 = vdwg.mxu0
  %v191 = vadd.f32 %v84, %v185
  %v192 = vadd.f32 %v85, %v188
  %193 = vst [vmem:[#allocation2] sm:$0xff] %v191
  %194 = vst [vmem:[#allocation2 + $0x8] sm:$0xff] %v192
  // Predicated region
  $region34: #{conformer_encoder.34} parent=0 // pred_check
    %p195 = pneg %p27
  $region35: #{conformer_encoder.34} parent=0 // pred_check_branch
    %197 = sbr.rel (%p195) target = $region37
  $region36: #{conformer_encoder.34} parent=0 // pred_region
    %v198 = vld [vmem:[#allocation2] sm:$0xff]
    %v199 = vld [vmem:[#allocation2 + $0x8] sm:$0xff]
    %v200 = vld [vmem:[%s2] sm:$0x1]
    %v202 = vlaneseq
    %v203 = vshrl.u32 %v202, 7
    %v204 = vsub.s32 0, %v203
    %v205 = vrot.slane %v200, %v204
    %v207 = vadd.f32 %v198, %v205
    %v208 = vadd.f32 %v199, %v205
    %v209 = vld [vmem:[%s5] sm:$0xf]
    %v210 = vld [vmem:[%s5 + $0x4] sm:$0xf]
    %v211 = vld [vmem:[%s5 + $0x8] sm:$0xf]
    %v212 = vld [vmem:[%s5 + $0xc] sm:$0xf]
    %v213 = vld [vmem:[%s5 + $0x10] sm:$0xf]
    %v214 = vld [vmem:[%s5 + $0x14] sm:$0xf]
    %v215 = vld [vmem:[%s5 + $0x18] sm:$0xf]
    %v216 = vld [vmem:[%s5 + $0x1c] sm:$0xf]
    %v217 = vld [vmem:[%s5 + $0x20] sm:$0xf]
    %v218 = vld [vmem:[%s5 + $0x24] sm:$0xf]
    %v219 = vld [vmem:[%s5 + $0x28] sm:$0xf]
    %v220 = vld [vmem:[%s5 + $0x2c] sm:$0xf]
    %v221 = vld [vmem:[%s5 + $0x30] sm:$0xf]
    %v222 = vld [vmem:[%s5 + $0x34] sm:$0xf]
    %v223 = vld [vmem:[%s5 + $0x38] sm:$0xf]
    %v224 = vld [vmem:[%s5 + $0x3c] sm:$0xf]
    %v225 = vld [vmem:[%s6] sm:$0x1]
    %v227 = vlaneseq
    %v228 = vshrl.u32 %v227, 7
    %v229 = vsub.s32 0, %v228
    %v230 = vrot.slane %v225, %v229
    %v248 = vunpack.c.l.b16 %v209
    %v249 = vunpack.c.l.b16 %v210
    %v250 = vunpack.c.l.b16 %v211
    %v251 = vunpack.c.l.b16 %v212
    %v252 = vunpack.c.l.b16 %v213
    %v253 = vunpack.c.l.b16 %v214
    %v254 = vunpack.c.l.b16 %v215
    %v255 = vunpack.c.l.b16 %v216
    %v256 = vunpack.c.l.b16 %v217
    %v257 = vunpack.c.l.b16 %v218
    %v258 = vunpack.c.l.b16 %v219
    %v259 = vunpack.c.l.b16 %v220
    %v260 = vunpack.c.l.b16 %v221
    %v261 = vunpack.c.l.b16 %v222
    %v262 = vunpack.c.l.b16 %v223
    %v263 = vunpack.c.l.b16 %v224
    %v264 = vpack.c.b16 %v249, %v248
    %v265 = vpack.c.b16 %v251, %v250
    %v266 = vpack.c.b16 %v253, %v252
    %v267 = vpack.c.b16 %v255, %v254
    %v268 = vpack.c.b16 %v257, %v256
    %v269 = vpack.c.b16 %v259, %v258
    %v270 = vpack.c.b16 %v261, %v260
    %v271 = vpack.c.b16 %v263, %v262
    %280 = vmatprep.subr.bf16.mxu0 0
    %281 = vmatpush1.bf16.msra.mxu0 %v264
    %282 = vmatprep.subr.bf16.mxu0 0
    %283 = vmatpush1.bf16.msra.mxu0 %v265
    %284 = vmatprep.subr.bf16.mxu0 0
    %285 = vmatpush1.bf16.msra.mxu0 %v266
    %286 = vmatprep.subr.bf16.mxu0 0
    %287 = vmatpush1.bf16.msra.mxu0 %v267
    %288 = vmatprep.subr.bf16.mxu0 0
    %289 = vmatpush1.bf16.msra.mxu0 %v268
    %290 = vmatprep.subr.bf16.mxu0 0
    %291 = vmatpush1.bf16.msra.mxu0 %v269
    %292 = vmatprep.subr.bf16.mxu0 0
    %293 = vmatpush1.bf16.msra.mxu0 %v270
    %294 = vmatprep.subr.bf16.mxu0 0
    %295 = vmatpush1.bf16.msra.mxu0 %v271
    %296 = vmatprep.subr.bf16.mxu0 0
    %297 = vmatpush1.bf16.msra.mxu0 0
    %298 = vmatprep.subr.bf16.mxu0 0
    %299 = vmatpush1.bf16.msra.mxu0 0
    %300 = vmatprep.subr.bf16.mxu0 0
    %301 = vmatpush1.bf16.msra.mxu0 0
    %302 = vmatprep.subr.bf16.mxu0 0
    %303 = vmatpush1.bf16.msra.mxu0 0
    %304 = vmatprep.subr.bf16.mxu0 0
    %305 = vmatpush1.bf16.msra.mxu0 0
    %306 = vmatprep.subr.bf16.mxu0 0
    %307 = vmatpush1.bf16.msra.mxu0 0
    %308 = vmatprep.subr.bf16.mxu0 0
    %309 = vmatpush1.bf16.msra.mxu0 0
    %310 = vmatprep.subr.bf16.mxu0 0
    %311 = vmatpush1.bf16.msra.mxu0 0
    %312 = vmatprep.mubr.bf16.mxu0 0
    %313 = vmatmul.mubr.bf16.gmra.mrb[0].mxu0 %v83
    %v314 = vpop.f32.mrb[0].mxu0
    %v315 = vadd.f32 %v230, %v314
    %v316 = vpop.f32.mrb[0].mxu0
    %v317 = vpop.f32.mrb[0].mxu0
    %v318 = vadd.f32 %v230, %v317
    %v319 = vpop.f32.mrb[0].mxu0
    %320 = vdwg.mxu0
    %v321 = vxor.u32 %v315, 2147483648
    %v322 = vxor.u32 %v318, 2147483648
    %v323 = vmul.f32 %v321, 1.442695
    %v324 = vpow.pop %v323
    %v325 = vmul.f32 %v322, 1.442695
    %v326 = vpow.pop %v325
    %v327 = vadd.f32 %v324, 1.0
    %v328 = vadd.f32 %v326, 1.0
    %v329 = vrcp.pop %v327
    %v330 = vmul.f32 1.0, %v329
    %v331 = vrcp.pop %v328
    %v332 = vmul.f32 1.0, %v331
    %v333 = vmul.f32 %v207, %v330
    %v334 = vmul.f32 %v208, %v332
    %v335 = vpack.c.bf16 %v334, %v333
    %v337 = vunpack.c.l.b16 %v335
    %v338 = vunpack.c.h.b16 %v335
    %v339 = vpack.c.b16 %v337, %v337
    %v340 = vpack.c.b16 %v338, %v338
    %343 = vst [vmem:[%s7] sm:$0xf] %v339
    %344 = vst [vmem:[%s7 + $0x4] sm:$0xf] %v340
  $region37: #{conformer_encoder.34} parent=0 // pred_fallthru
    _
  // Predicated region
  $region38: #{conformer_encoder.34} parent=0 // pred_check
    _
  $region39: #{conformer_encoder.34} parent=0 // pred_check_branch
    %346 = sbr.rel (0) target = $region41
  $region40: #{conformer_encoder.34} parent=0 // pred_region
    _
  $region41: #{conformer_encoder.34} parent=0 // pred_fallthru
    _
  // Predicated region
  $region42: #{conformer_encoder.34} parent=0 // pred_check
    _
  $region43: #{conformer_encoder.34} parent=0 // pred_check_branch
    %348 = sbr.rel (0) target = $region45
  $region44: #{conformer_encoder.34} parent=0 // pred_region
    _
  $region45: #{conformer_encoder.34} parent=0 // pred_fallthru
    _

// kernel: conformer_encoder.38
$region0: #{conformer_encoder.38}
  #allocation0 [shape = 'u32[]', space=smem, size = 0x4, offset = 0x4, fixed_abs, tag = 'smem constant byte address 0x4 - core index']
  #allocation1 [shape = 'u32[144,128]{1,0:T(1,128)}', space=vmem, size = 0x12000, scoped, tag = 'internal scratch']
  #allocation2 [shape = 'f32[16,128]{1,0:T(8,128)}', space=vmem, size = 0x2000, scoped, tag = 'scratch operand']
  %s0 = inlined_call_operand.vmem [shape: bf16[16,128], index: 0, kind: input, shape index: {}]
  %s1 = inlined_call_operand.vmem [shape: bf16[128,128], index: 1, kind: input, shape index: {}]
  %s2 = inlined_call_operand.vmem [shape: f32[1,128], index: 2, kind: input, shape index: {}]
  %s3 = inlined_call_operand.vmem [shape: bf16[16,128], index: 3, kind: input, shape index: {}]
  %s4 = inlined_call_operand.vmem [shape: f32[1,128], index: 4, kind: input, shape index: {}]
  %s5 = inlined_call_operand.vmem [shape: f32[1,128], index: 5, kind: input, shape index: {}]
  %s6 = inlined_call_operand.vmem [shape: bf16[16,128], index: 6, kind: output, shape index: {}]
  %s7 = sld [smem:[#allocation0]]
  $region42: #{conformer_encoder.38} parent=0
    _
  %s9 = ssub.s32 1, %s7
  %s10 = scalar_select 0, %s9, %s7
  // Predicated region
  $region2: #{conformer_encoder.38} parent=0 // pred_check
    _
  $region3: #{conformer_encoder.38} parent=0 // pred_check_branch
    %12 = sbr.rel (0) target = $region5
  $region4: #{conformer_encoder.38} parent=0 // pred_region
    _
  $region5: #{conformer_encoder.38} parent=0 // pred_fallthru
    _
  // Predicated region
  $region6: #{conformer_encoder.38} parent=0 // pred_check
    _
  $region7: #{conformer_encoder.38} parent=0 // pred_check_branch
    %14 = sbr.rel (0) target = $region9
  $region8: #{conformer_encoder.38} parent=0 // pred_region
    _
  $region9: #{conformer_encoder.38} parent=0 // pred_fallthru
    _
  // Predicated region
  $region10: #{conformer_encoder.38} parent=0 // pred_check
    _
  $region11: #{conformer_encoder.38} parent=0 // pred_check_branch
    %16 = sbr.rel (0) target = $region13
  $region12: #{conformer_encoder.38} parent=0 // pred_region
    _
  $region13: #{conformer_encoder.38} parent=0 // pred_fallthru
    _
  // Predicated region
  $region14: #{conformer_encoder.38} parent=0 // pred_check
    _
  $region15: #{conformer_encoder.38} parent=0 // pred_check_branch
    %18 = sbr.rel (0) target = $region17
  $region16: #{conformer_encoder.38} parent=0 // pred_region
    _
  $region17: #{conformer_encoder.38} parent=0 // pred_fallthru
    _
  // Predicated region
  $region18: #{conformer_encoder.38} parent=0 // pred_check
    _
  $region19: #{conformer_encoder.38} parent=0 // pred_check_branch
    %20 = sbr.rel (0) target = $region21
  $region20: #{conformer_encoder.38} parent=0 // pred_region
    _
  $region21: #{conformer_encoder.38} parent=0 // pred_fallthru
    _
  // Predicated region
  $region22: #{conformer_encoder.38} parent=0 // pred_check
    _
  $region23: #{conformer_encoder.38} parent=0 // pred_check_branch
    %22 = sbr.rel (0) target = $region25
  $region24: #{conformer_encoder.38} parent=0 // pred_region
    _
  $region25: #{conformer_encoder.38} parent=0 // pred_fallthru
    _
  %p24 = scmp.eq.s32.totalorder 0, 0
  // Predicated region
  $region26: #{conformer_encoder.38} parent=0 // pred_check
    %p25 = pneg %p24
  $region27: #{conformer_encoder.38} parent=0 // pred_check_branch
    %27 = sbr.rel (%p25) target = $region29
  $region28: #{conformer_encoder.38} parent=0 // pred_region
    %28 = vst [vmem:[#allocation2] sm:$0xff] 0.0
    %29 = vst [vmem:[#allocation2 + $0x8] sm:$0xff] 0.0
  $region29: #{conformer_encoder.38} parent=0 // pred_fallthru
    _
  %v30 = vld [vmem:[%s0] sm:$0xf]
  %v31 = vld [vmem:[%s0 + $0x4] sm:$0xf]
  %v32 = vld [vmem:[#allocation2] sm:$0xff]
  %v33 = vld [vmem:[#allocation2 + $0x8] sm:$0xff]
  %v34 = vld [vmem:[%s1] sm:$0xf]
  %v35 = vld [vmem:[%s1 + $0x4] sm:$0xf]
  %v36 = vld [vmem:[%s1 + $0x8] sm:$0xf]
  %v37 = vld [vmem:[%s1 + $0xc] sm:$0xf]
  %v38 = vld [vmem:[%s1 + $0x10] sm:$0xf]
  %v39 = vld [vmem:[%s1 + $0x14] sm:$0xf]
  %v40 = vld [vmem:[%s1 + $0x18] sm:$0xf]
  %v41 = vld [vmem:[%s1 + $0x1c] sm:$0xf]
  %v42 = vld [vmem:[%s1 + $0x20] sm:$0xf]
  %v43 = vld [vmem:[%s1 + $0x24] sm:$0xf]
  %v44 = vld [vmem:[%s1 + $0x28] sm:$0xf]
  %v45 = vld [vmem:[%s1 + $0x2c] sm:$0xf]
  %v46 = vld [vmem:[%s1 + $0x30] sm:$0xf]
  %v47 = vld [vmem:[%s1 + $0x34] sm:$0xf]
  %v48 = vld [vmem:[%s1 + $0x38] sm:$0xf]
  %v49 = vld [vmem:[%s1 + $0x3c] sm:$0xf]
  %v52 = vunpack.c.l.b16 %v30
  %v53 = vunpack.c.l.b16 %v31
  %v54 = vpack.c.b16 %v53, %v52
  %v72 = vunpack.c.l.b16 %v34
  %v73 = vunpack.c.l.b16 %v35
  %v74 = vunpack.c.l.b16 %v36
  %v75 = vunpack.c.l.b16 %v37
  %v76 = vunpack.c.l.b16 %v38
  %v77 = vunpack.c.l.b16 %v39
  %v78 = vunpack.c.l.b16 %v40
  %v79 = vunpack.c.l.b16 %v41
  %v80 = vunpack.c.l.b16 %v42
  %v81 = vunpack.c.l.b16 %v43
  %v82 = vunpack.c.l.b16 %v44
  %v83 = vunpack.c.l.b16 %v45
  %v84 = vunpack.c.l.b16 %v46
  %v85 = vunpack.c.l.b16 %v47
  %v86 = vunpack.c.l.b16 %v48
  %v87 = vunpack.c.l.b16 %v49
  %v88 = vpack.c.b16 %v73, %v72
  %v89 = vpack.c.b16 %v75, %v74
  %v90 = vpack.c.b16 %v77, %v76
  %v91 = vpack.c.b16 %v79, %v78
  %v92 = vpack.c.b16 %v81, %v80
  %v93 = vpack.c.b16 %v83, %v82
  %v94 = vpack.c.b16 %v85, %v84
  %v95 = vpack.c.b16 %v87, %v86
  %104 = vmatprep.subr.bf16.mxu0 0
  %105 = vmatpush1.bf16.msra.mxu0 %v88
  %106 = vmatprep.subr.bf16.mxu0 0
  %107 = vmatpush1.bf16.msra.mxu0 %v89
  %108 = vmatprep.subr.bf16.mxu0 0
  %109 = vmatpush1.bf16.msra.mxu0 %v90
  %110 = vmatprep.subr.bf16.mxu0 0
  %111 = vmatpush1.bf16.msra.mxu0 %v91
  %112 = vmatprep.subr.bf16.mxu0 0
  %113 = vmatpush1.bf16.msra.mxu0 %v92
  %114 = vmatprep.subr.bf16.mxu0 0
  %115 = vmatpush1.bf16.msra.mxu0 %v93
  %116 = vmatprep.subr.bf16.mxu0 0
  %117 = vmatpush1.bf16.msra.mxu0 %v94
  %118 = vmatprep.subr.bf16.mxu0 0
  %119 = vmatpush1.bf16.msra.mxu0 %v95
  %120 = vmatprep.subr.bf16.mxu0 0
  %121 = vmatpush1.bf16.msra.mxu0 0
  %122 = vmatprep.subr.bf16.mxu0 0
  %123 = vmatpush1.bf16.msra.mxu0 0
  %124 = vmatprep.subr.bf16.mxu0 0
  %125 = vmatpush1.bf16.msra.mxu0 0
  %126 = vmatprep.subr.bf16.mxu0 0
  %127 = vmatpush1.bf16.msra.mxu0 0
  %128 = vmatprep.subr.bf16.mxu0 0
  %129 = vmatpush1.bf16.msra.mxu0 0
  %130 = vmatprep.subr.bf16.mxu0 0
  %131 = vmatpush1.bf16.msra.mxu0 0
  %132 = vmatprep.subr.bf16.mxu0 0
  %133 = vmatpush1.bf16.msra.mxu0 0
  %134 = vmatprep.subr.bf16.mxu0 0
  %135 = vmatpush1.bf16.msra.mxu0 0
  %136 = vmatprep.mubr.bf16.mxu0 0
  %137 = vmatmul.mubr.bf16.gmra.mrb[0].mxu0 %v54
  %v138 = vpop.f32.mrb[0].mxu0
  %v139 = vadd.f32 0.0, %v138
  %v140 = vpop.f32.mrb[0].mxu0
  %v141 = vpop.f32.mrb[0].mxu0
  %v142 = vadd.f32 0.0, %v141
  %v143 = vpop.f32.mrb[0].mxu0
  %144 = vdwg.mxu0
  %v145 = vadd.f32 %v32, %v139
  %v146 = vadd.f32 %v33, %v142
  %147 = vst [vmem:[#allocation2] sm:$0xff] %v145
  %148 = vst [vmem:[#allocation2 + $0x8] sm:$0xff] %v146
  // Predicated region
  $region30: #{conformer_encoder.38} parent=0 // pred_check
    %p149 = pneg %p24
  $region31: #{conformer_encoder.38} parent=0 // pred_check_branch
    %151 = sbr.rel (%p149) target = $region33
  $region32: #{conformer_encoder.38} parent=0 // pred_region
    %v152 = vld [vmem:[#allocation2] sm:$0xff]
    %v153 = vld [vmem:[#allocation2 + $0x8] sm:$0xff]
    %v154 = vld [vmem:[%s2] sm:$0x1]
    %v156 = vlaneseq
    %v157 = vshrl.u32 %v156, 7
    %v158 = vsub.s32 0, %v157
    %v159 = vrot.slane %v154, %v158
    %v161 = vadd.f32 %v152, %v159
    %v162 = vadd.f32 %v153, %v159
    %v163 = vmul.f32 %v161, 0.5
    %v164 = vmul.f32 %v162, 0.5
    %v165 = vld [vmem:[%s3] sm:$0xf]
    %v166 = vld [vmem:[%s3 + $0x4] sm:$0xf]
    %v167 = vunpack.c.l.bf16 %v165
    %v168 = vunpack.c.l.bf16 %v166
    %v169 = vadd.f32 %v163, %v167
    %v170 = vadd.f32 %v164, %v168
    %171 = vadd.xlane.f32.xlu0 %v169
    %v172 = vpop.xlane.xlu0 %171
    %173 = vadd.xlane.f32.xlu0 %v170
    %v174 = vpop.xlane.xlu0 %173
    %v175 = vmul.f32 %v172, 0.03125
    %v176 = vmul.f32 %v174, 0.03125
    %v177 = vmul.f32 %v169, %v169
    %v178 = vmul.f32 %v170, %v170
    %179 = vadd.xlane.f32.xlu0 %v177
    %v180 = vpop.xlane.xlu0 %179
    %181 = vadd.xlane.f32.xlu0 %v178
    %v182 = vpop.xlane.xlu0 %181
    %v183 = vmul.f32 %v180, 0.03125
    %v184 = vmul.f32 %v182, 0.03125
    %v185 = vmul.f32 %v175, %v175
    %v186 = vmul.f32 %v176, %v176
    %v187 = vsub.f32 %v183, %v185
    %v188 = vsub.f32 %v184, %v186
    %v189 = vmax.f32 %v187, 0.0
    %v190 = vmax.f32 %v188, 0.0
    %v191 = vsub.f32 %v169, %v175
    %v192 = vsub.f32 %v170, %v176
    %v193 = vadd.f32 %v189, 1e-05
    %v194 = vadd.f32 %v190, 1e-05
    %v195 = vrsqrt.pop %v193
    %v196 = vrsqrt.pop %v194
    %v197 = vmul.f32 %v191, %v195
    %v198 = vmul.f32 %v192, %v196
    %v199 = vld [vmem:[%s4] sm:$0x1]
    %v201 = vlaneseq
    %v202 = vshrl.u32 %v201, 7
    %v203 = vsub.s32 0, %v202
    %v204 = vrot.slane %v199, %v203
    %v206 = vmul.f32 %v197, %v204
    %v207 = vmul.f32 %v198, %v204
    %v208 = vld [vmem:[%s5] sm:$0x1]
    %v210 = vlaneseq
    %v211 = vshrl.u32 %v210, 7
    %v212 = vsub.s32 0, %v211
    %v213 = vrot.slane %v208, %v212
    %v215 = vadd.f32 %v206, %v213
    %v216 = vadd.f32 %v207, %v213
    %v217 = vpack.c.bf16 %v216, %v215
    %v219 = vunpack.c.l.b16 %v217
    %v220 = vunpack.c.h.b16 %v217
    %v221 = vpack.c.b16 %v219, %v219
    %v222 = vpack.c.b16 %v220, %v220
    %225 = vst [vmem:[%s6] sm:$0xf] %v221
    %226 = vst [vmem:[%s6 + $0x4] sm:$0xf] %v222
  $region33: #{conformer_encoder.38} parent=0 // pred_fallthru
    _
  // Predicated region
  $region34: #{conformer_encoder.38} parent=0 // pred_check
    _
  $region35: #{conformer_encoder.38} parent=0 // pred_check_branch
    %228 = sbr.rel (0) target = $region37
  $region36: #{conformer_encoder.38} parent=0 // pred_region
    _
  $region37: #{conformer_encoder.38} parent=0 // pred_fallthru
    _
  // Predicated region
  $region38: #{conformer_encoder.38} parent=0 // pred_check
    _
  $region39: #{conformer_encoder.38} parent=0 // pred_check_branch
    %230 = sbr.rel (0) target = $region41
  $region40: #{conformer_encoder.38} parent=0 // pred_region
    _
  $region41: #{conformer_encoder.38} parent=0 // pred_fallthru
    _

// kernel: conformer_encoder.35
$region0: #{conformer_encoder.35}
  #allocation0 [shape = 'u32[]', space=smem, size = 0x4, offset = 0x4, fixed_abs, tag = 'smem constant byte address 0x4 - core index']
  #allocation1 [shape = 'u32[144,128]{1,0:T(1,128)}', space=vmem, size = 0x12000, scoped, tag = 'internal scratch']
  %s0 = inlined_call_operand.vmem [shape: bf16[2,13,32], index: 0, kind: input, shape index: {}]
  %s1 = inlined_call_operand.vmem [shape: f32[7,32], index: 1, kind: input, shape index: {}]
  %s2 = inlined_call_operand.vmem [shape: f32[1,32], index: 2, kind: input, shape index: {}]
  %s3 = inlined_call_operand.vmem [shape: f32[1,32], index: 3, kind: input, shape index: {}]
  %s4 = inlined_call_operand.vmem [shape: f32[1,32], index: 4, kind: input, shape index: {}]
  %s5 = inlined_call_operand.vmem [shape: bf16[2,7,32], index: 5, kind: output, shape index: {}]
  %s6 = sld [smem:[#allocation0]]
  $region53: #{conformer_encoder.35} parent=0
    _
  %s8 = ssub.s32 1, %s6
  %s9 = scalar_select 0, %s8, %s6
  loop: start=0, step=1, limit=4
  $region2: #{conformer_encoder.35} parent=0 // loop_pre_header
    _
  $region3: #{conformer_encoder.35} parent=0 // loop_header
    %s11 = sphi 0, %s15
    %p12 = scmp.ge.s32.totalorder %s11, 4
    %s21 = sphi 0, %s23
    %s24 = sphi 0, %s21
    %s25 = sphi 0, %s24
    %s41 = sphi 0, %s25
    %s45 = sphi 0, %s45
    %s47 = sphi 0, %s45
    %s48 = sphi 0, %s47
    %s62 = sphi 0, %s48
    %s66 = sphi 0, %s66
    %s68 = sphi 0, %s66
    %s69 = sphi 0, %s68
    %s83 = sphi 0, %s69
    %s87 = sphi 0, %s87
    %s89 = sphi 0, %s87
    %s90 = sphi 0, %s89
    %s104 = sphi 0, %s90
    %s108 = sphi 0, %s108
    %s110 = sphi 0, %s108
    %s111 = sphi 0, %s110
    %s125 = sphi 0, %s111
    %s131 = sphi 0, %s133
    %s134 = sphi 0, %s131
    %s135 = sphi 0, %s134
    %s151 = sphi 0, %s135
  $region4: #{conformer_encoder.35} parent=0 // loop_header_branch
    %14 = sbr.rel (%p12) target = $region8
  $region5: #{conformer_encoder.35} parent=0 // loop_body
    %s16 = ssub.s32 %s11, 1
    %s17 = ssub.s32 %s11, 2
    %s18 = sadd.s32 %s11, 1
    %s19 = ssub.s32 %s11, %s18
    %p20 = scmp.eq.s32.totalorder %s19, 0
    %s22 = sadd.s32 %s21, 1
    %s23 = scalar_select %p20, %s21, %s22
    %p26 = pneg %p20
    %p27 = scmp.eq.s32.totalorder %s11, 1
    %p28 = por %p26, %p27
    %p29 = scmp.ne.s32.totalorder %s21, %s24
    %p30 = scmp.eq.s32.totalorder %s11, 0
    %p31 = por %p29, %p30
    %p32 = scmp.ne.s32.totalorder %s21, %s24
    %p33 = scmp.eq.s32.totalorder %s16, 1
    %p34 = por %p32, %p33
    %p35 = scmp.ne.s32.totalorder %s24, %s25
    %p36 = scmp.eq.s32.totalorder %s16, 0
    %p37 = por %p35, %p36
    %p38 = scmp.ne.s32.totalorder %s24, %s25
    %p39 = scmp.eq.s32.totalorder %s17, 1
    %p40 = por %p38, %p39
    %p42 = scmp.ne.s32.totalorder %s25, %s41
    %p43 = scmp.eq.s32.totalorder %s17, 0
    %p44 = por %p42, %p43
    %s46 = sadd.s32 %s45, 1
    %p49 = scmp.eq.s32.totalorder %s11, 1
    %p50 = scmp.ne.s32.totalorder %s45, %s47
    %p51 = scmp.eq.s32.totalorder %s11, 0
    %p52 = por %p50, %p51
    %p53 = scmp.ne.s32.totalorder %s45, %s47
    %p54 = scmp.eq.s32.totalorder %s16, 1
    %p55 = por %p53, %p54
    %p56 = scmp.ne.s32.totalorder %s47, %s48
    %p57 = scmp.eq.s32.totalorder %s16, 0
    %p58 = por %p56, %p57
    %p59 = scmp.ne.s32.totalorder %s47, %s48
    %p60 = scmp.eq.s32.totalorder %s17, 1
    %p61 = por %p59, %p60
    %p63 = scmp.ne.s32.totalorder %s48, %s62
    %p64 = scmp.eq.s32.totalorder %s17, 0
    %p65 = por %p63, %p64
    %s67 = sadd.s32 %s66, 1
    %p70 = scmp.eq.s32.totalorder %s11, 1
    %p71 = scmp.ne.s32.totalorder %s66, %s68
    %p72 = scmp.eq.s32.totalorder %s11, 0
    %p73 = por %p71, %p72
    %p74 = scmp.ne.s32.totalorder %s66, %s68
    %p75 = scmp.eq.s32.totalorder %s16, 1
    %p76 = por %p74, %p75
    %p77 = scmp.ne.s32.totalorder %s68, %s69
    %p78 = scmp.eq.s32.totalorder %s16, 0
    %p79 = por %p77, %p78
    %p80 = scmp.ne.s32.totalorder %s68, %s69
    %p81 = scmp.eq.s32.totalorder %s17, 1
    %p82 = por %p80, %p81
    %p84 = scmp.ne.s32.totalorder %s69, %s83
    %p85 = scmp.eq.s32.totalorder %s17, 0
    %p86 = por %p84, %p85
    %s88 = sadd.s32 %s87, 1
    %p91 = scmp.eq.s32.totalorder %s11, 1
    %p92 = scmp.ne.s32.totalorder %s87, %s89
    %p93 = scmp.eq.s32.totalorder %s11, 0
    %p94 = por %p92, %p93
    %p95 = scmp.ne.s32.totalorder %s87, %s89
    %p96 = scmp.eq.s32.totalorder %s16, 1
    %p97 = por %p95, %p96
    %p98 = scmp.ne.s32.totalorder %s89, %s90
    %p99 = scmp.eq.s32.totalorder %s16, 0
    %p100 = por %p98, %p99
    %p101 = scmp.ne.s32.totalorder %s89, %s90
    %p102 = scmp.eq.s32.totalorder %s17, 1
    %p103 = por %p101, %p102
    %p105 = scmp.ne.s32.totalorder %s90, %s104
    %p106 = scmp.eq.s32.totalorder %s17, 0
    %p107 = por %p105, %p106
    %s109 = sadd.s32 %s108, 1
    %p112 = scmp.eq.s32.totalorder %s11, 1
    %p113 = scmp.ne.s32.totalorder %s108, %s110
    %p114 = scmp.eq.s32.totalorder %s11, 0
    %p115 = por %p113, %p114
    %p116 = scmp.ne.s32.totalorder %s108, %s110
    %p117 = scmp.eq.s32.totalorder %s16, 1
    %p118 = por %p116, %p117
    %p119 = scmp.ne.s32.totalorder %s110, %s111
    %p120 = scmp.eq.s32.totalorder %s16, 0
    %p121 = por %p119, %p120
    %p122 = scmp.ne.s32.totalorder %s110, %s111
    %p123 = scmp.eq.s32.totalorder %s17, 1
    %p124 = por %p122, %p123
    %p126 = scmp.ne.s32.totalorder %s111, %s125
    %p127 = scmp.eq.s32.totalorder %s17, 0
    %p128 = por %p126, %p127
    %s129 = ssub.s32 %s11, %s18
    %p130 = scmp.eq.s32.totalorder %s129, 0
    %s132 = sadd.s32 %s131, 1
    %s133 = scalar_select %p130, %s131, %s132
    %p136 = pneg %p130
    %p137 = scmp.eq.s32.totalorder %s11, 1
    %p138 = por %p136, %p137
    %p139 = scmp.ne.s32.totalorder %s131, %s134
    %p140 = scmp.eq.s32.totalorder %s11, 0
    %p141 = por %p139, %p140
    %p142 = scmp.ne.s32.totalorder %s131, %s134
    %p143 = scmp.eq.s32.totalorder %s16, 1
    %p144 = por %p142, %p143
    %p145 = scmp.ne.s32.totalorder %s134, %s135
    %p146 = scmp.eq.s32.totalorder %s16, 0
    %p147 = por %p145, %p146
    %p148 = scmp.ne.s32.totalorder %s134, %s135
    %p149 = scmp.eq.s32.totalorder %s17, 1
    %p150 = por %p148, %p149
    %p152 = scmp.ne.s32.totalorder %s135, %s151
    %p153 = scmp.eq.s32.totalorder %s17, 0
    %p154 = por %p152, %p153
    %p155 = scmp.le.s32.totalorder 1, %s11
    %p156 = scmp.lt.s32.totalorder %s11, 3
    %p157 = pnand %p155, %p156
    %p158 = pneg %p157
    // Predicated region
    $region9: #{conformer_encoder.35} parent=5 // pred_check
      _
    $region10: #{conformer_encoder.35} parent=5 // pred_check_branch
      %160 = sbr.rel (%p157) target = $region12
    $region11: #{conformer_encoder.35} parent=5 // pred_region
      %s161 = ssub.s32 %s11, 1
      // Predicated region
      $region13: #{conformer_encoder.35} parent=11 // pred_check
        %p162 = pneg %p58
      $region14: #{conformer_encoder.35} parent=11 // pred_check_branch
        %164 = sbr.rel (%p162) target = $region16
      $region15: #{conformer_encoder.35} parent=11 // pred_region
        _
      $region16: #{conformer_encoder.35} parent=11 // pred_fallthru
        _
      // Predicated region
      $region17: #{conformer_encoder.35} parent=11 // pred_check
        %p165 = pneg %p79
      $region18: #{conformer_encoder.35} parent=11 // pred_check_branch
        %167 = sbr.rel (%p165) target = $region20
      $region19: #{conformer_encoder.35} parent=11 // pred_region
        _
      $region20: #{conformer_encoder.35} parent=11 // pred_fallthru
        _
      // Predicated region
      $region21: #{conformer_encoder.35} parent=11 // pred_check
        %p168 = pneg %p100
      $region22: #{conformer_encoder.35} parent=11 // pred_check_branch
        %170 = sbr.rel (%p168) target = $region24
      $region23: #{conformer_encoder.35} parent=11 // pred_region
        _
      $region24: #{conformer_encoder.35} parent=11 // pred_fallthru
        _
      // Predicated region
      $region25: #{conformer_encoder.35} parent=11 // pred_check
        %p171 = pneg %p121
      $region26: #{conformer_encoder.35} parent=11 // pred_check_branch
        %173 = sbr.rel (%p171) target = $region28
      $region27: #{conformer_encoder.35} parent=11 // pred_region
        _
      $region28: #{conformer_encoder.35} parent=11 // pred_fallthru
        _
    $region12: #{conformer_encoder.35} parent=5 // pred_fallthru
      _
    %p174 = scmp.lt.s32.totalorder %s11, 2
    // Predicated region
    $region29: #{conformer_encoder.35} parent=5 // pred_check
      %p175 = pneg %p174
    $region30: #{conformer_encoder.35} parent=5 // pred_check_branch
      %177 = sbr.rel (%p175) target = $region32
    $region31: #{conformer_encoder.35} parent=5 // pred_region
      // Predicated region
      $region33: #{conformer_encoder.35} parent=31 // pred_check
        %p178 = pneg %p31
      $region34: #{conformer_encoder.35} parent=31 // pred_check_branch
        %180 = sbr.rel (%p178) target = $region36
      $region35: #{conformer_encoder.35} parent=31 // pred_region
        %p181 = scmp.lt.s32.totalorder %s11, 1
        %s182 = scalar_select %p181, %s11, 1
        %s183 = smul.addr %s182, 2
        %s184 = smul.addr %s183, 4
        %s185 = scalar_lea.vmem %s0, %s184
      $region36: #{conformer_encoder.35} parent=31 // pred_fallthru
        _
    $region32: #{conformer_encoder.35} parent=5 // pred_fallthru
      _
    %p186 = scmp.le.s32.totalorder 1, %s11
    %p187 = scmp.lt.s32.totalorder %s11, 3
    %p188 = pnand %p186, %p187
    %p189 = pneg %p188
    // Predicated region
    $region37: #{conformer_encoder.35} parent=5 // pred_check
      _
    $region38: #{conformer_encoder.35} parent=5 // pred_check_branch
      %191 = sbr.rel (%p188) target = $region40
    $region39: #{conformer_encoder.35} parent=5 // pred_region
      %s192 = ssub.s32 %s11, 1
      %p193 = scmp.lt.s32.totalorder %s16, 1
      %s194 = scalar_select %p193, %s16, 1
      %s195 = smul.addr %s194, 2
      %s196 = smul.addr %s195, 4
      %s197 = scalar_lea.vmem %s0, %s196
      %p198 = pneg %p37
      %p199 = pneg %p34
      %p200 = pneg %p58
      %p201 = pneg %p55
      %p202 = pneg %p79
      %p203 = pneg %p76
      %p204 = pneg %p100
      %p205 = pneg %p97
      %p206 = pneg %p121
      %p207 = pneg %p118
      %p208 = pneg %p147
      %p209 = pneg %p144
      %p210 = scmp.lt.s32.totalorder %s16, 1
      %s211 = scalar_select %p210, %s16, 1
      %s212 = smul.addr %s211, 4
      %s213 = scalar_lea.vmem %s5, %s212
      %p214 = scmp.lt.s32.totalorder %s16, 1
      %s215 = scalar_select %p214, %s16, 1
      %s216 = smul.addr %s215, 2
      %s217 = smul.addr %s216, 4
      %s218 = scalar_lea.vmem %s0, %s217
      %p219 = scmp.lt.s32.totalorder %s16, 1
      %s220 = scalar_select %p219, %s16, 1
      %s221 = smul.addr %s220, 4
      %s222 = scalar_lea.vmem %s5, %s221
      %v223 = vld [vmem:[%s218] sm:$0xf]
      %v224 = vld [vmem:[%s218 + $0x4] sm:$0x7]
      %v225 = vunpack.c.l.bf16 %v223
      %v226 = vunpack.c.l.bf16 %v224
      %v227 = vld [vmem:[%s1] sm:$0x7f]
      %v228 = vlaneseq
      %v229 = vshrl.u32 %v228, 7
      %v230 = vsub.s32 0, %v229
      %v231 = vrot.slane %v227, %v230
      %v232 = vmul.f32 %v225, %v231
      %v233 = vadd.f32 %v232, 0.0
      %v234 = vlaneseq
      %v235 = vshrl.u32 %v234, 7
      %v236 = vsub.s32 1, %v235
      %v237 = vrot.slane %v227, %v236
      %v238 = vmul.f32 %v225, %v237
      %v240 = vrot.slane %v238, 1
      %v242 = vadd.f32 %v233, %v240
      %v243 = vlaneseq
      %v244 = vshrl.u32 %v243, 7
      %v245 = vsub.s32 2, %v244
      %v246 = vrot.slane %v227, %v245
      %v247 = vmul.f32 %v225, %v246
      %v248 = vmul.f32 %v226, %v246
      %vm251 = vcmask 1045504
      %v252 = vrot.slane %v247, 2
      %v253 = vrot.slane %v248, 2
      %v254 = vsel %vm251, %v252, %v253
      %v256 = vadd.f32 %v242, %v254
      %v257 = vlaneseq
      %v258 = vshrl.u32 %v257, 7
      %v259 = vsub.s32 3, %v258
      %v260 = vrot.slane %v227, %v259
      %v261 = vmul.f32 %v225, %v260
      %v262 = vmul.f32 %v226, %v260
      %vm265 = vcmask 1044480
      %v266 = vrot.slane %v261, 3
      %v267 = vrot.slane %v262, 3
      %v268 = vsel %vm265, %v266, %v267
      %v270 = vadd.f32 %v256, %v268
      %v271 = vlaneseq
      %v272 = vshrl.u32 %v271, 7
      %v273 = vsub.s32 4, %v272
      %v274 = vrot.slane %v227, %v273
      %v275 = vmul.f32 %v225, %v274
      %v276 = vmul.f32 %v226, %v274
      %vm279 = vcmask 1043456
      %v280 = vrot.slane %v275, 4
      %v281 = vrot.slane %v276, 4
      %v282 = vsel %vm279, %v280, %v281
      %v284 = vadd.f32 %v270, %v282
      %v285 = vlaneseq
      %v286 = vshrl.u32 %v285, 7
      %v287 = vsub.s32 5, %v286
      %v288 = vrot.slane %v227, %v287
      %v289 = vmul.f32 %v225, %v288
      %v290 = vmul.f32 %v226, %v288
      %vm293 = vcmask 1042432
      %v294 = vrot.slane %v289, 5
      %v295 = vrot.slane %v290, 5
      %v296 = vsel %vm293, %v294, %v295
      %v298 = vadd.f32 %v284, %v296
      %v299 = vlaneseq
      %v300 = vshrl.u32 %v299, 7
      %v301 = vsub.s32 6, %v300
      %v302 = vrot.slane %v227, %v301
      %v303 = vmul.f32 %v225, %v302
      %v304 = vmul.f32 %v226, %v302
      %vm307 = vcmask 1041408
      %v308 = vrot.slane %v303, 6
      %v309 = vrot.slane %v304, 6
      %v310 = vsel %vm307, %v308, %v309
      %v312 = vadd.f32 %v298, %v310
      %v313 = vld [vmem:[%s2] sm:$0x1]
      %v315 = vlaneseq
      %v316 = vshrl.u32 %v315, 7
      %v317 = vsub.s32 0, %v316
      %v318 = vrot.slane %v313, %v317
      %v320 = vadd.f32 %v312, %v318
      %v321 = vld [vmem:[%s3] sm:$0x1]
      %v323 = vlaneseq
      %v324 = vshrl.u32 %v323, 7
      %v325 = vsub.s32 0, %v324
      %v326 = vrot.slane %v321, %v325
      %v328 = vmul.f32 %v320, %v326
      %v329 = vld [vmem:[%s4] sm:$0x1]
      %v331 = vlaneseq
      %v332 = vshrl.u32 %v331, 7
      %v333 = vsub.s32 0, %v332
      %v334 = vrot.slane %v329, %v333
      %v336 = vadd.f32 %v328, %v334
      %v337 = vxor.u32 %v336, 2147483648
      %v338 = vmul.f32 %v337, 1.442695
      %v339 = vpow.pop %v338
      %v340 = vadd.f32 %v339, 1.0
      %v341 = vrcp.pop %v340
      %v342 = vmul.f32 1.0, %v341
      %v343 = vmul.f32 %v336, %v342
      %v344 = vpack.c.bf16 %v343, %v343
      %vm345 = vcmask 257024
      %vm346 = vsmask.f32 3328
      %vm347 = vmand %vm345, %vm346
      %v348 = vld [vmem:[%s222] sm:$0xf]
      %v349 = vsel %vm347, %v344, %v348
      %350 = vst [vmem:[%s222] sm:$0xf] %v349
      %p351 = scmp.lt.s32.totalorder %s16, 1
      %s352 = scalar_select %p351, %s16, 1
      %s353 = smul.addr %s352, 4
      %s354 = scalar_lea.vmem %s5, %s353
      // Predicated region
      $region41: #{conformer_encoder.35} parent=39 // pred_check
        %p355 = pneg %p144
      $region42: #{conformer_encoder.35} parent=39 // pred_check_branch
        %357 = sbr.rel (%p355) target = $region44
      $region43: #{conformer_encoder.35} parent=39 // pred_region
        _
      $region44: #{conformer_encoder.35} parent=39 // pred_fallthru
        _
    $region40: #{conformer_encoder.35} parent=5 // pred_fallthru
      _
    %p358 = scmp.le.s32.totalorder 2, %s11
    // Predicated region
    $region45: #{conformer_encoder.35} parent=5 // pred_check
      %p359 = pneg %p358
    $region46: #{conformer_encoder.35} parent=5 // pred_check_branch
      %361 = sbr.rel (%p359) target = $region48
    $region47: #{conformer_encoder.35} parent=5 // pred_region
      %s362 = ssub.s32 %s11, 2
      // Predicated region
      $region49: #{conformer_encoder.35} parent=47 // pred_check
        %p363 = pneg %p150
      $region50: #{conformer_encoder.35} parent=47 // pred_check_branch
        %365 = sbr.rel (%p363) target = $region52
      $region51: #{conformer_encoder.35} parent=47 // pred_region
        %p366 = scmp.lt.s32.totalorder %s17, 1
        %s367 = scalar_select %p366, %s17, 1
        %s368 = smul.addr %s367, 4
        %s369 = scalar_lea.vmem %s5, %s368
      $region52: #{conformer_encoder.35} parent=47 // pred_fallthru
        _
    $region48: #{conformer_encoder.35} parent=5 // pred_fallthru
      _
  $region6: #{conformer_encoder.35} parent=0 // loop_footer
    %s15 = sadd.s32 1, %s11
  $region7: #{conformer_encoder.35} parent=0 // loop_footer_branch
    %10 = sbr.rel target = $region3
  $region8: #{conformer_encoder.35} parent=0 // loop_exit
    _

</llo_original>
